<compile_context>
chip_gen: v5e
topology: v5e:2x2
jax: 0.10.0
libtpu: 0.0.40
codegen_flags: <defaults>
</compile_context>

<pallas_src>
import functools

import jax
import jax.numpy as jnp
import numpy as np
from jax import lax
from jax.experimental import pallas as pl
from jax.experimental.pallas import tpu as pltpu

IMPOSSIBLE = -10000.0


# ----------------------------------------------------------------------------
# Fused CRF kernel: fc projection + forward algorithm + gold score + Viterbi
# ----------------------------------------------------------------------------
def crf_fused_kernel(x_ref, tag_ref, mask_ref, trans2_ref, trans3_ref,
                     w_ref, b_ref, fg_ref, score_ref, bps_ref,
                     *, start_idx, stop_idx):
    """Batch-on-lanes layout (batch on the 128-wide lane axis, tags C on sublanes).

      x_ref     : [L, Bt, D] f32   encoder features (bert_out[:, 1:-1, :], transposed)
      tag_ref   : [L, Bt]    i32   gold tags
      mask_ref  : [L, Bt]    f32   padding mask
      trans2_ref: [C, C]     f32   transitions[to, from]        (MXU contractions)
      trans3_ref: [C, C, 1]  f32   same, rows as [C,1] sublane column vectors
      w_ref     : [C, D]     f32   fc weight (torch Linear layout [out, in])
      b_ref     : [C, 1]     f32   fc bias
      fg_ref    : [2, Bt]    f32   row 0 = log partition, row 1 = gold score
      score_ref : [C, Bt]    f32   final Viterbi scores (incl. stop transition)
      bps_ref   : [L, Bt]    i32   packed Viterbi backpointers (4 bits per dest tag)
    """
    L, Bt, D = x_ref.shape
    C = trans2_ref.shape[0]

    # ---- hoisted loop invariants (build each broadcast exactly once) ----------
    w = w_ref[...]                                         # [C, D]
    bias = b_ref[...]                                      # [C, 1]
    trans2 = trans2_ref[...]                               # [C, C]  trans[to, from]
    exp_trans = jnp.exp(trans2)                            # IMPOSSIBLE rows underflow to 0
    trans3 = trans3_ref[...]                               # [C, C, 1]
    trans_rows = [jnp.broadcast_to(trans3[c], (C, Bt)) for c in range(C)]
    stop_row = trans_rows[stop_idx]                        # [C, Bt] = trans[stop, from]

    iota_c = lax.broadcasted_iota(jnp.int32, (C, Bt), 0)   # tag index on sublanes
    start_oh = (iota_c == start_idx).astype(jnp.float32)   # [C, Bt]
    seqlen_i = jnp.sum(mask_ref[...], axis=0, keepdims=True).astype(jnp.int32)  # [1, Bt]

    init = jnp.where(iota_c == start_idx, 0.0, IMPOSSIBLE).astype(jnp.float32)

    def step(t, carry):
        alpha, vmax, gold, prev_oh, last_oh = carry

        # ---- CRF.fc on the MXU: feat_t[c, b] = sum_d W[c, d] * x[t, b, d] + b[c]
        feat_t = lax.dot_general(w, x_ref[t], (((1,), (1,)), ((), ())),
                                 preferred_element_type=jnp.float32) + bias   # [C, Bt]

        mask_b = mask_ref[pl.ds(t, 1), :] > 0.0            # [1, Bt] bool
        tag_t = tag_ref[pl.ds(t, 1), :]                    # [1, Bt] i32
        oh_t = (iota_c == tag_t).astype(jnp.float32)       # [C, Bt]

        # ---- forward algorithm: logsumexp over previous tag, contraction on MXU
        m = jnp.max(alpha, axis=0, keepdims=True)          # [1, Bt]
        s = jnp.dot(exp_trans, jnp.exp(alpha - m),
                    preferred_element_type=jnp.float32)    # [C, Bt]
        new_alpha = m + jnp.log(s) + feat_t                # -inf on all-IMPOSSIBLE rows
        alpha = jnp.where(mask_b, new_alpha, alpha)

        # ---- gold score: emission + transition (trans @ prev_onehot = column select)
        tr_prev = jnp.dot(trans2, prev_oh, preferred_element_type=jnp.float32)  # [C, Bt]
        g_t = jnp.sum(oh_t * (feat_t + tr_prev), axis=0, keepdims=True)         # [1, Bt]
        gold = gold + jnp.where(mask_b, g_t, 0.0)

        # ---- Viterbi max + packed backpointers (VPU/XLU; 4 bits per dest tag) ----
        packed = jnp.zeros((1, Bt), jnp.int32)
        best_rows = []
        for c_to in range(C):                              # tiny C: unrolled
            acc = vmax + trans_rows[c_to]                  # [C, Bt]
            best = jnp.max(acc, axis=0, keepdims=True)     # [1, Bt]
            bp = jnp.min(jnp.where(acc >= best, iota_c, C),
                         axis=0, keepdims=True)            # [1, Bt] first argmax
            best_rows.append(best)
            packed = packed | (bp << (4 * c_to))
        new_vmax = jnp.concatenate(best_rows, axis=0) + feat_t
        vmax = jnp.where(mask_b, new_vmax, vmax)
        bps_ref[pl.ds(t, 1), :] = packed

        # last real gold tag one-hot (reference: tags_ext[b, mask.sum()])
        sel = (seqlen_i == (t + 1)).astype(jnp.float32)    # [1, Bt]
        last_oh = last_oh + oh_t * sel
        return alpha, vmax, gold, oh_t, last_oh

    carry = (init, init, jnp.zeros((1, Bt), jnp.float32), start_oh,
             jnp.zeros((C, Bt), jnp.float32))
    if L <= 32:
        for t in range(L):                                 # static, fully unrolled
            carry = step(t, carry)
    else:
        # long sequences: bound live vregs and compile time, keep LLO visibility
        carry = lax.fori_loop(0, L, step, carry, unroll=8)
    alpha, vmax, gold, _, last_oh = carry

    # if seqlen == 0, the "last tag" is the start tag (tags_ext[b, 0])
    last_oh = jnp.where(seqlen_i == 0, start_oh, last_oh)
    last_score = jnp.sum(stop_row * last_oh, axis=0, keepdims=True)    # [1, Bt]
    gold_final = gold + last_score

    final = alpha + stop_row                                            # [C, Bt]
    m = jnp.max(final, axis=0, keepdims=True)
    fwd = m + jnp.log(jnp.sum(jnp.exp(final - m), axis=0, keepdims=True))

    fg_ref[...] = jnp.concatenate([fwd, gold_final], axis=0)            # [2, Bt]
    score_ref[...] = vmax + stop_row                                    # [C, Bt]


# ----------------------------------------------------------------------------
# pallas_call plumbing
# ----------------------------------------------------------------------------
def crf_fused(x_lbd, tags_lb, masks_lb, trans, fc_w, fc_b1, start_idx, stop_idx):
    """features [L, B, D] -> (log-partition, gold score, viterbi scores, packed bps)."""
    L, B, D = x_lbd.shape
    C = trans.shape[0]
    assert C <= 16, "backpointer packing uses 4 bits per tag"
    # Batch tile: multiples of 128 keep every block lane-dense; on v7x prefer
    # B % 256 == 0 so both TensorCores get >=1 grid step each.
    tile_b = 128 if B % 128 == 0 else B
    grid = (B // tile_b,)
    trans3 = trans[:, :, None]                    # rows as [C, 1] sublane vectors

    # TODO(synk): for BERT-size D (768) and long L the [L, tile_b, D] feature block
    # no longer fits VMEM; split the fc projection back out into a separate
    # lane-dense [L, C, B]-output matmul kernel in that regime.
    fg, scores, bps = pl.pallas_call(
        functools.partial(crf_fused_kernel, start_idx=start_idx, stop_idx=stop_idx),
        grid=grid,
        in_specs=[
            pl.BlockSpec((L, tile_b, D), lambda i: (0, i, 0)),
            pl.BlockSpec((L, tile_b), lambda i: (0, i)),
            pl.BlockSpec((L, tile_b), lambda i: (0, i)),
            pl.BlockSpec((C, C), lambda i: (0, 0)),
            pl.BlockSpec((C, C, 1), lambda i: (0, 0, 0)),
            pl.BlockSpec((C, D), lambda i: (0, 0)),
            pl.BlockSpec((C, 1), lambda i: (0, 0)),
        ],
        out_specs=[
            pl.BlockSpec((2, tile_b), lambda i: (0, i)),
            pl.BlockSpec((C, tile_b), lambda i: (0, i)),
            pl.BlockSpec((L, tile_b), lambda i: (0, i)),
        ],
        out_shape=[
            jax.ShapeDtypeStruct((2, B), jnp.float32),   # [forward; gold]
            jax.ShapeDtypeStruct((C, B), jnp.float32),   # final Viterbi scores
            jax.ShapeDtypeStruct((L, B), jnp.int32),     # packed backpointers
        ],
        compiler_params=pltpu.CompilerParams(
            dimension_semantics=("parallel",),
            vmem_limit_bytes=32 * 1024 * 1024),
    )(x_lbd, tags_lb, masks_lb, trans, trans3, fc_w, fc_b1)
    return fg[0], fg[1], scores, bps


# ----------------------------------------------------------------------------
# Bert_CRF forward (loss, tag_seq)
# ----------------------------------------------------------------------------
@jax.jit
def bert_crf_forward(params, sent, labels, masks):
    emb, fc_w, fc_b, trans = (params["emb"], params["fc_w"],
                              params["fc_b"], params["trans"])
    C = trans.shape[0]
    start_idx, stop_idx = C - 2, C - 1

    # TODO(synk): the pretrained BertModel encoder cannot be reproduced without a
    # checkpoint; a deterministic embedding lookup stands in for BertModel(sent)[0].
    # Gather straight into [S, B, D] so the CRF kernel gets [L, B, D] with no
    # big-tensor transpose; dropout -> identity (eval-mode forward).
    x = jnp.take(emb, sent.T, axis=0)              # [S, B, D]
    x = x[1:-1].astype(jnp.float32)                # [L, B, D]  == bert_out[:, 1:-1, :]
    L = x.shape[0]

    tags_lb = labels[:, :L].T.astype(jnp.int32)    # [L, B]
    masks_lb = masks[:, :L].T.astype(jnp.float32)  # [L, B]

    fwd, gold, scores_cb, bps = crf_fused(
        x, tags_lb, masks_lb, trans.astype(jnp.float32),
        fc_w.astype(jnp.float32), fc_b.reshape(C, 1).astype(jnp.float32),
        start_idx, stop_idx)

    loss = jnp.mean(fwd - gold)                    # CRF.loss
    best_score = jnp.max(scores_cb, axis=0)        # [B]
    best_tag = jnp.argmax(scores_cb, axis=0)       # [B]
    return loss, best_score, best_tag, bps


def viterbi_backtrace(bps_packed, best_tag, masks):
    """Host-side backtrace (variable-length paths), same as the reference."""
    bps = np.asarray(bps_packed)     # [L, B] int32, 4 bits per destination tag
    best_tag = np.asarray(best_tag)  # [B]
    masks = np.asarray(masks)        # [B, L]
    L, B = bps.shape
    best_paths = []
    for b in range(B):
        bt = int(best_tag[b])
        seq_len = int(masks[b, :L].sum())
        path = [bt]
        for t in reversed(range(seq_len)):
            bt = int((int(bps[t, b]) >> (4 * bt)) & 0xF)
            path.append(bt)
        best_paths.append(path[-2::-1])
    return best_paths


# ----------------------------------------------------------------------------
if __name__ == "__main__":
    key = jax.random.PRNGKey(0)
    B, S, D, C, vocab = 2, 10, 32, 8, 50          # small stand-ins (hidden_dim=32, num_tags=8)
    L = S - 2                                      # bert_out[:, 1:-1, :]
    start_idx, stop_idx = C - 2, C - 1

    k1, k2, k3, k4, k5, k6 = jax.random.split(key, 6)
    emb = jax.random.normal(k1, (vocab, D), jnp.float32) * 0.1
    fc_w = jax.random.normal(k2, (C, D), jnp.float32) / jnp.sqrt(D)   # torch Linear weight [out, in]
    fc_b = jax.random.normal(k3, (C,), jnp.float32) * 0.01
    trans = jax.random.normal(k4, (C, C), jnp.float32)
    trans = trans.at[start_idx, :].set(IMPOSSIBLE)
    trans = trans.at[:, stop_idx].set(IMPOSSIBLE)

    params = {"emb": emb, "fc_w": fc_w, "fc_b": fc_b, "trans": trans}

    sent = jax.random.randint(k5, (B, S), 0, vocab, jnp.int32)
    labels = jax.random.randint(k6, (B, L), 0, C - 2, jnp.int32)
    masks = jnp.array([[1.0] * 8, [1.0] * 5 + [0.0] * 3], jnp.float32)   # [B, L]

    loss, best_score, best_tag, bps = bert_crf_forward(params, sent, labels, masks)
    jax.block_until_ready((loss, best_score, best_tag, bps))

    tag_seq = viterbi_backtrace(bps, best_tag, masks)
    assert jnp.isfinite(loss)
    assert len(tag_seq) == B and len(tag_seq[0]) == 8 and len(tag_seq[1]) == 5
    print("KERNEL_OK")
</pallas_src>

<mosaic_0001>
module attributes {stable_mosaic.version = 11 : i64} {
  func.func @crf_fused_kernel(%arg0: i32, %arg1: memref<8x2x32xf32, #tpu.memory_space<vmem>>, %arg2: memref<8x2xi32, #tpu.memory_space<vmem>>, %arg3: memref<8x2xf32, #tpu.memory_space<vmem>>, %arg4: memref<8x8xf32, #tpu.memory_space<vmem>>, %arg5: memref<8x8x1xf32, #tpu.memory_space<vmem>>, %arg6: memref<8x32xf32, #tpu.memory_space<vmem>>, %arg7: memref<8x1xf32, #tpu.memory_space<vmem>>, %arg8: memref<2x2xf32, #tpu.memory_space<vmem>>, %arg9: memref<8x2xf32, #tpu.memory_space<vmem>>, %arg10: memref<8x2xi32, #tpu.memory_space<vmem>>) attributes {dimension_semantics = [#tpu.dimension_semantics<parallel>], iteration_bounds = array<i64: 1>, scalar_prefetch = 0 : i64, scratch_operands = 0 : i64, tpu.core_type = #tpu.core_type<tc>, window_params = [{transform_indices = @transform_0, window_bounds = array<i64: 8, 2, 32>}, {transform_indices = @transform_1, window_bounds = array<i64: 8, 2>}, {transform_indices = @transform_2, window_bounds = array<i64: 8, 2>}, {pipeline_mode = #tpu.pipeline_mode<synchronous>, transform_indices = @transform_3, window_bounds = array<i64: 8, 8>}, {pipeline_mode = #tpu.pipeline_mode<synchronous>, transform_indices = @transform_4, window_bounds = array<i64: 8, 8, 1>}, {pipeline_mode = #tpu.pipeline_mode<synchronous>, transform_indices = @transform_5, window_bounds = array<i64: 8, 32>}, {pipeline_mode = #tpu.pipeline_mode<synchronous>, transform_indices = @transform_6, window_bounds = array<i64: 8, 1>}, {transform_indices = @transform_7, window_bounds = array<i64: 2, 2>}, {transform_indices = @transform_8, window_bounds = array<i64: 8, 2>}, {transform_indices = @transform_9, window_bounds = array<i64: 8, 2>}]} {
    %c0 = arith.constant 0 : index
    %c0_0 = arith.constant 0 : index
    %0 = vector.load %arg6[%c0, %c0_0] : memref<8x32xf32, #tpu.memory_space<vmem>>, vector<8x32xf32>
    %c0_1 = arith.constant 0 : index
    %c0_2 = arith.constant 0 : index
    %1 = vector.load %arg7[%c0_1, %c0_2] : memref<8x1xf32, #tpu.memory_space<vmem>>, vector<8x1xf32>
    %c0_3 = arith.constant 0 : index
    %c0_4 = arith.constant 0 : index
    %2 = vector.load %arg4[%c0_3, %c0_4] : memref<8x8xf32, #tpu.memory_space<vmem>>, vector<8x8xf32>
    %3 = math.exp %2 : vector<8x8xf32>
    %c0_5 = arith.constant 0 : index
    %c0_6 = arith.constant 0 : index
    %c0_7 = arith.constant 0 : index
    %4 = vector.load %arg5[%c0_5, %c0_6, %c0_7] : memref<8x8x1xf32, #tpu.memory_space<vmem>>, vector<8x8x1xf32>
    %5 = vector.extract_strided_slice %4 {offsets = [0, 0, 0], sizes = [1, 8, 1], strides = [1, 1, 1]} : vector<8x8x1xf32> to vector<1x8x1xf32>
    %6 = vector.shape_cast %5 : vector<1x8x1xf32> to vector<8x1xf32>
    %7 = vector.shape_cast %6 : vector<8x1xf32> to vector<8x1xf32>
    %8 = vector.broadcast %7 : vector<8x1xf32> to vector<8x2xf32>
    %9 = vector.extract_strided_slice %4 {offsets = [1, 0, 0], sizes = [1, 8, 1], strides = [1, 1, 1]} : vector<8x8x1xf32> to vector<1x8x1xf32>
    %10 = vector.shape_cast %9 : vector<1x8x1xf32> to vector<8x1xf32>
    %11 = vector.shape_cast %10 : vector<8x1xf32> to vector<8x1xf32>
    %12 = vector.broadcast %11 : vector<8x1xf32> to vector<8x2xf32>
    %13 = vector.extract_strided_slice %4 {offsets = [2, 0, 0], sizes = [1, 8, 1], strides = [1, 1, 1]} : vector<8x8x1xf32> to vector<1x8x1xf32>
    %14 = vector.shape_cast %13 : vector<1x8x1xf32> to vector<8x1xf32>
    %15 = vector.shape_cast %14 : vector<8x1xf32> to vector<8x1xf32>
    %16 = vector.broadcast %15 : vector<8x1xf32> to vector<8x2xf32>
    %17 = vector.extract_strided_slice %4 {offsets = [3, 0, 0], sizes = [1, 8, 1], strides = [1, 1, 1]} : vector<8x8x1xf32> to vector<1x8x1xf32>
    %18 = vector.shape_cast %17 : vector<1x8x1xf32> to vector<8x1xf32>
    %19 = vector.shape_cast %18 : vector<8x1xf32> to vector<8x1xf32>
    %20 = vector.broadcast %19 : vector<8x1xf32> to vector<8x2xf32>
    %21 = vector.extract_strided_slice %4 {offsets = [4, 0, 0], sizes = [1, 8, 1], strides = [1, 1, 1]} : vector<8x8x1xf32> to vector<1x8x1xf32>
    %22 = vector.shape_cast %21 : vector<1x8x1xf32> to vector<8x1xf32>
    %23 = vector.shape_cast %22 : vector<8x1xf32> to vector<8x1xf32>
    %24 = vector.broadcast %23 : vector<8x1xf32> to vector<8x2xf32>
    %25 = vector.extract_strided_slice %4 {offsets = [5, 0, 0], sizes = [1, 8, 1], strides = [1, 1, 1]} : vector<8x8x1xf32> to vector<1x8x1xf32>
    %26 = vector.shape_cast %25 : vector<1x8x1xf32> to vector<8x1xf32>
    %27 = vector.shape_cast %26 : vector<8x1xf32> to vector<8x1xf32>
    %28 = vector.broadcast %27 : vector<8x1xf32> to vector<8x2xf32>
    %29 = vector.extract_strided_slice %4 {offsets = [6, 0, 0], sizes = [1, 8, 1], strides = [1, 1, 1]} : vector<8x8x1xf32> to vector<1x8x1xf32>
    %30 = vector.shape_cast %29 : vector<1x8x1xf32> to vector<8x1xf32>
    %31 = vector.shape_cast %30 : vector<8x1xf32> to vector<8x1xf32>
    %32 = vector.broadcast %31 : vector<8x1xf32> to vector<8x2xf32>
    %33 = vector.extract_strided_slice %4 {offsets = [7, 0, 0], sizes = [1, 8, 1], strides = [1, 1, 1]} : vector<8x8x1xf32> to vector<1x8x1xf32>
    %34 = vector.shape_cast %33 : vector<1x8x1xf32> to vector<8x1xf32>
    %35 = vector.shape_cast %34 : vector<8x1xf32> to vector<8x1xf32>
    %36 = vector.broadcast %35 : vector<8x1xf32> to vector<8x2xf32>
    %37 = tpu.iota {dimensions = array<i32: 0>} : vector<8x2xi32>
    %c6_i32 = arith.constant 6 : i32
    %38 = vector.broadcast %c6_i32 : i32 to vector<8x2xi32>
    %39 = arith.cmpi eq, %37, %38 : vector<8x2xi32>
    %40 = arith.extui %39 : vector<8x2xi1> to vector<8x2xi32>
    %41 = arith.sitofp %40 : vector<8x2xi32> to vector<8x2xf32>
    %c0_8 = arith.constant 0 : index
    %c0_9 = arith.constant 0 : index
    %42 = vector.load %arg3[%c0_8, %c0_9] : memref<8x2xf32, #tpu.memory_space<vmem>>, vector<8x2xf32>
    %cst = arith.constant dense<0.000000e+00> : vector<2xf32>
    %43 = vector.multi_reduction <add>, %42, %cst [0] : vector<8x2xf32> to vector<2xf32>
    %44 = vector.shape_cast %43 : vector<2xf32> to vector<1x2xf32>
    %45 = arith.fptosi %44 : vector<1x2xf32> to vector<1x2xi32>
    %c6_i32_10 = arith.constant 6 : i32
    %46 = vector.broadcast %c6_i32_10 : i32 to vector<8x2xi32>
    %47 = arith.cmpi eq, %37, %46 : vector<8x2xi32>
    %cst_11 = arith.constant 0.000000e+00 : f32
    %cst_12 = arith.constant -1.000000e+04 : f32
    %48 = vector.broadcast %cst_11 : f32 to vector<8x2xf32>
    %49 = vector.broadcast %cst_12 : f32 to vector<8x2xf32>
    %50 = arith.select %47, %48, %49 : vector<8x2xi1>, vector<8x2xf32>
    %cst_13 = arith.constant 0.000000e+00 : f32
    %51 = vector.broadcast %cst_13 : f32 to vector<1x2xf32>
    %cst_14 = arith.constant 0.000000e+00 : f32
    %52 = vector.broadcast %cst_14 : f32 to vector<8x2xf32>
    %c0_15 = arith.constant 0 : index
    %c0_16 = arith.constant 0 : index
    %c0_17 = arith.constant 0 : index
    %53 = vector.load %arg1[%c0_15, %c0_16, %c0_17] : memref<8x2x32xf32, #tpu.memory_space<vmem>>, vector<1x2x32xf32>
    %54 = vector.shape_cast %53 : vector<1x2x32xf32> to vector<2x32xf32>
    %cst_18 = arith.constant dense<0.000000e+00> : vector<8x2xf32>
    %55 = tpu.matmul %0, %54, %cst_18 {dimension_numbers = #tpu.dot_dimension_numbers<[1], [1], [0], [0], [0, 0, 1, 0], [], []>} : vector<8x32xf32>, vector<2x32xf32>, vector<8x2xf32> -> vector<8x2xf32>
    %56 = vector.broadcast %1 : vector<8x1xf32> to vector<8x2xf32>
    %57 = arith.addf %55, %56 : vector<8x2xf32>
    %c0_19 = arith.constant 0 : index
    %c0_20 = arith.constant 0 : index
    %58 = vector.load %arg3[%c0_19, %c0_20] : memref<8x2xf32, #tpu.memory_space<vmem>>, vector<1x2xf32>
    %cst_21 = arith.constant 0.000000e+00 : f32
    %59 = vector.broadcast %cst_21 : f32 to vector<1x2xf32>
    %60 = arith.cmpf ogt, %58, %59 : vector<1x2xf32>
    %c0_22 = arith.constant 0 : index
    %c0_23 = arith.constant 0 : index
    %61 = vector.load %arg2[%c0_22, %c0_23] : memref<8x2xi32, #tpu.memory_space<vmem>>, vector<1x2xi32>
    %62 = vector.broadcast %61 : vector<1x2xi32> to vector<8x2xi32>
    %63 = arith.cmpi eq, %37, %62 : vector<8x2xi32>
    %64 = arith.extui %63 : vector<8x2xi1> to vector<8x2xi32>
    %65 = arith.sitofp %64 : vector<8x2xi32> to vector<8x2xf32>
    %cst_24 = arith.constant dense<0xFF800000> : vector<2xf32>
    %66 = vector.multi_reduction <maximumf>, %50, %cst_24 [0] : vector<8x2xf32> to vector<2xf32>
    %67 = vector.shape_cast %66 : vector<2xf32> to vector<1x2xf32>
    %68 = vector.broadcast %67 : vector<1x2xf32> to vector<8x2xf32>
    %69 = arith.subf %50, %68 : vector<8x2xf32>
    %70 = math.exp %69 : vector<8x2xf32>
    %cst_25 = arith.constant dense<0.000000e+00> : vector<8x2xf32>
    %71 = tpu.matmul %3, %70, %cst_25 {dimension_numbers = #tpu.dot_dimension_numbers<[1], [0], [0], [1], [0, 0, 1, 1], [], []>} : vector<8x8xf32>, vector<8x2xf32>, vector<8x2xf32> -> vector<8x2xf32>
    %72 = math.log %71 : vector<8x2xf32>
    %73 = vector.broadcast %67 : vector<1x2xf32> to vector<8x2xf32>
    %74 = arith.addf %73, %72 : vector<8x2xf32>
    %75 = arith.addf %74, %57 : vector<8x2xf32>
    %76 = vector.shape_cast %60 : vector<1x2xi1> to vector<1x2xi1>
    %77 = vector.broadcast %76 : vector<1x2xi1> to vector<8x2xi1>
    %78 = arith.select %77, %75, %50 : vector<8x2xi1>, vector<8x2xf32>
    %cst_26 = arith.constant dense<0.000000e+00> : vector<8x2xf32>
    %79 = tpu.matmul %2, %41, %cst_26 {dimension_numbers = #tpu.dot_dimension_numbers<[1], [0], [0], [1], [0, 0, 1, 1], [], []>} : vector<8x8xf32>, vector<8x2xf32>, vector<8x2xf32> -> vector<8x2xf32>
    %80 = arith.addf %57, %79 : vector<8x2xf32>
    %81 = arith.mulf %65, %80 : vector<8x2xf32>
    %cst_27 = arith.constant dense<0.000000e+00> : vector<2xf32>
    %82 = vector.multi_reduction <add>, %81, %cst_27 [0] : vector<8x2xf32> to vector<2xf32>
    %83 = vector.shape_cast %82 : vector<2xf32> to vector<1x2xf32>
    %cst_28 = arith.constant 0.000000e+00 : f32
    %84 = vector.broadcast %cst_28 : f32 to vector<1x2xf32>
    %85 = arith.select %60, %83, %84 : vector<1x2xi1>, vector<1x2xf32>
    %86 = arith.addf %51, %85 : vector<1x2xf32>
    %c0_i32 = arith.constant 0 : i32
    %87 = vector.broadcast %c0_i32 : i32 to vector<1x2xi32>
    %88 = arith.addf %50, %8 : vector<8x2xf32>
    %cst_29 = arith.constant dense<0xFF800000> : vector<2xf32>
    %89 = vector.multi_reduction <maximumf>, %88, %cst_29 [0] : vector<8x2xf32> to vector<2xf32>
    %90 = vector.shape_cast %89 : vector<2xf32> to vector<1x2xf32>
    %91 = vector.broadcast %90 : vector<1x2xf32> to vector<8x2xf32>
    %92 = arith.cmpf oge, %88, %91 : vector<8x2xf32>
    %c8_i32 = arith.constant 8 : i32
    %93 = vector.broadcast %c8_i32 : i32 to vector<8x2xi32>
    %94 = arith.select %92, %37, %93 : vector<8x2xi1>, vector<8x2xi32>
    %cst_30 = arith.constant dense<2147483647> : vector<2xi32>
    %95 = vector.multi_reduction <minsi>, %94, %cst_30 [0] : vector<8x2xi32> to vector<2xi32>
    %96 = vector.shape_cast %95 : vector<2xi32> to vector<1x2xi32>
    %c0_i32_31 = arith.constant 0 : i32
    %97 = vector.broadcast %c0_i32_31 : i32 to vector<1x2xi32>
    %98 = arith.shli %96, %97 : vector<1x2xi32>
    %99 = arith.ori %87, %98 : vector<1x2xi32>
    %100 = arith.addf %50, %12 : vector<8x2xf32>
    %cst_32 = arith.constant dense<0xFF800000> : vector<2xf32>
    %101 = vector.multi_reduction <maximumf>, %100, %cst_32 [0] : vector<8x2xf32> to vector<2xf32>
    %102 = vector.shape_cast %101 : vector<2xf32> to vector<1x2xf32>
    %103 = vector.broadcast %102 : vector<1x2xf32> to vector<8x2xf32>
    %104 = arith.cmpf oge, %100, %103 : vector<8x2xf32>
    %c8_i32_33 = arith.constant 8 : i32
    %105 = vector.broadcast %c8_i32_33 : i32 to vector<8x2xi32>
    %106 = arith.select %104, %37, %105 : vector<8x2xi1>, vector<8x2xi32>
    %cst_34 = arith.constant dense<2147483647> : vector<2xi32>
    %107 = vector.multi_reduction <minsi>, %106, %cst_34 [0] : vector<8x2xi32> to vector<2xi32>
    %108 = vector.shape_cast %107 : vector<2xi32> to vector<1x2xi32>
    %c4_i32 = arith.constant 4 : i32
    %109 = vector.broadcast %c4_i32 : i32 to vector<1x2xi32>
    %110 = arith.shli %108, %109 : vector<1x2xi32>
    %111 = arith.ori %99, %110 : vector<1x2xi32>
    %112 = arith.addf %50, %16 : vector<8x2xf32>
    %cst_35 = arith.constant dense<0xFF800000> : vector<2xf32>
    %113 = vector.multi_reduction <maximumf>, %112, %cst_35 [0] : vector<8x2xf32> to vector<2xf32>
    %114 = vector.shape_cast %113 : vector<2xf32> to vector<1x2xf32>
    %115 = vector.broadcast %114 : vector<1x2xf32> to vector<8x2xf32>
    %116 = arith.cmpf oge, %112, %115 : vector<8x2xf32>
    %c8_i32_36 = arith.constant 8 : i32
    %117 = vector.broadcast %c8_i32_36 : i32 to vector<8x2xi32>
    %118 = arith.select %116, %37, %117 : vector<8x2xi1>, vector<8x2xi32>
    %cst_37 = arith.constant dense<2147483647> : vector<2xi32>
    %119 = vector.multi_reduction <minsi>, %118, %cst_37 [0] : vector<8x2xi32> to vector<2xi32>
    %120 = vector.shape_cast %119 : vector<2xi32> to vector<1x2xi32>
    %c8_i32_38 = arith.constant 8 : i32
    %121 = vector.broadcast %c8_i32_38 : i32 to vector<1x2xi32>
    %122 = arith.shli %120, %121 : vector<1x2xi32>
    %123 = arith.ori %111, %122 : vector<1x2xi32>
    %124 = arith.addf %50, %20 : vector<8x2xf32>
    %cst_39 = arith.constant dense<0xFF800000> : vector<2xf32>
    %125 = vector.multi_reduction <maximumf>, %124, %cst_39 [0] : vector<8x2xf32> to vector<2xf32>
    %126 = vector.shape_cast %125 : vector<2xf32> to vector<1x2xf32>
    %127 = vector.broadcast %126 : vector<1x2xf32> to vector<8x2xf32>
    %128 = arith.cmpf oge, %124, %127 : vector<8x2xf32>
    %c8_i32_40 = arith.constant 8 : i32
    %129 = vector.broadcast %c8_i32_40 : i32 to vector<8x2xi32>
    %130 = arith.select %128, %37, %129 : vector<8x2xi1>, vector<8x2xi32>
    %cst_41 = arith.constant dense<2147483647> : vector<2xi32>
    %131 = vector.multi_reduction <minsi>, %130, %cst_41 [0] : vector<8x2xi32> to vector<2xi32>
    %132 = vector.shape_cast %131 : vector<2xi32> to vector<1x2xi32>
    %c12_i32 = arith.constant 12 : i32
    %133 = vector.broadcast %c12_i32 : i32 to vector<1x2xi32>
    %134 = arith.shli %132, %133 : vector<1x2xi32>
    %135 = arith.ori %123, %134 : vector<1x2xi32>
    %136 = arith.addf %50, %24 : vector<8x2xf32>
    %cst_42 = arith.constant dense<0xFF800000> : vector<2xf32>
    %137 = vector.multi_reduction <maximumf>, %136, %cst_42 [0] : vector<8x2xf32> to vector<2xf32>
    %138 = vector.shape_cast %137 : vector<2xf32> to vector<1x2xf32>
    %139 = vector.broadcast %138 : vector<1x2xf32> to vector<8x2xf32>
    %140 = arith.cmpf oge, %136, %139 : vector<8x2xf32>
    %c8_i32_43 = arith.constant 8 : i32
    %141 = vector.broadcast %c8_i32_43 : i32 to vector<8x2xi32>
    %142 = arith.select %140, %37, %141 : vector<8x2xi1>, vector<8x2xi32>
    %cst_44 = arith.constant dense<2147483647> : vector<2xi32>
    %143 = vector.multi_reduction <minsi>, %142, %cst_44 [0] : vector<8x2xi32> to vector<2xi32>
    %144 = vector.shape_cast %143 : vector<2xi32> to vector<1x2xi32>
    %c16_i32 = arith.constant 16 : i32
    %145 = vector.broadcast %c16_i32 : i32 to vector<1x2xi32>
    %146 = arith.shli %144, %145 : vector<1x2xi32>
    %147 = arith.ori %135, %146 : vector<1x2xi32>
    %148 = arith.addf %50, %28 : vector<8x2xf32>
    %cst_45 = arith.constant dense<0xFF800000> : vector<2xf32>
    %149 = vector.multi_reduction <maximumf>, %148, %cst_45 [0] : vector<8x2xf32> to vector<2xf32>
    %150 = vector.shape_cast %149 : vector<2xf32> to vector<1x2xf32>
    %151 = vector.broadcast %150 : vector<1x2xf32> to vector<8x2xf32>
    %152 = arith.cmpf oge, %148, %151 : vector<8x2xf32>
    %c8_i32_46 = arith.constant 8 : i32
    %153 = vector.broadcast %c8_i32_46 : i32 to vector<8x2xi32>
    %154 = arith.select %152, %37, %153 : vector<8x2xi1>, vector<8x2xi32>
    %cst_47 = arith.constant dense<2147483647> : vector<2xi32>
    %155 = vector.multi_reduction <minsi>, %154, %cst_47 [0] : vector<8x2xi32> to vector<2xi32>
    %156 = vector.shape_cast %155 : vector<2xi32> to vector<1x2xi32>
    %c20_i32 = arith.constant 20 : i32
    %157 = vector.broadcast %c20_i32 : i32 to vector<1x2xi32>
    %158 = arith.shli %156, %157 : vector<1x2xi32>
    %159 = arith.ori %147, %158 : vector<1x2xi32>
    %160 = arith.addf %50, %32 : vector<8x2xf32>
    %cst_48 = arith.constant dense<0xFF800000> : vector<2xf32>
    %161 = vector.multi_reduction <maximumf>, %160, %cst_48 [0] : vector<8x2xf32> to vector<2xf32>
    %162 = vector.shape_cast %161 : vector<2xf32> to vector<1x2xf32>
    %163 = vector.broadcast %162 : vector<1x2xf32> to vector<8x2xf32>
    %164 = arith.cmpf oge, %160, %163 : vector<8x2xf32>
    %c8_i32_49 = arith.constant 8 : i32
    %165 = vector.broadcast %c8_i32_49 : i32 to vector<8x2xi32>
    %166 = arith.select %164, %37, %165 : vector<8x2xi1>, vector<8x2xi32>
    %cst_50 = arith.constant dense<2147483647> : vector<2xi32>
    %167 = vector.multi_reduction <minsi>, %166, %cst_50 [0] : vector<8x2xi32> to vector<2xi32>
    %168 = vector.shape_cast %167 : vector<2xi32> to vector<1x2xi32>
    %c24_i32 = arith.constant 24 : i32
    %169 = vector.broadcast %c24_i32 : i32 to vector<1x2xi32>
    %170 = arith.shli %168, %169 : vector<1x2xi32>
    %171 = arith.ori %159, %170 : vector<1x2xi32>
    %172 = arith.addf %50, %36 : vector<8x2xf32>
    %cst_51 = arith.constant dense<0xFF800000> : vector<2xf32>
    %173 = vector.multi_reduction <maximumf>, %172, %cst_51 [0] : vector<8x2xf32> to vector<2xf32>
    %174 = vector.shape_cast %173 : vector<2xf32> to vector<1x2xf32>
    %175 = vector.broadcast %174 : vector<1x2xf32> to vector<8x2xf32>
    %176 = arith.cmpf oge, %172, %175 : vector<8x2xf32>
    %c8_i32_52 = arith.constant 8 : i32
    %177 = vector.broadcast %c8_i32_52 : i32 to vector<8x2xi32>
    %178 = arith.select %176, %37, %177 : vector<8x2xi1>, vector<8x2xi32>
    %cst_53 = arith.constant dense<2147483647> : vector<2xi32>
    %179 = vector.multi_reduction <minsi>, %178, %cst_53 [0] : vector<8x2xi32> to vector<2xi32>
    %180 = vector.shape_cast %179 : vector<2xi32> to vector<1x2xi32>
    %c28_i32 = arith.constant 28 : i32
    %181 = vector.broadcast %c28_i32 : i32 to vector<1x2xi32>
    %182 = arith.shli %180, %181 : vector<1x2xi32>
    %183 = arith.ori %171, %182 : vector<1x2xi32>
    %184 = tpu.concatenate %90, %102, %114, %126, %138, %150, %162, %174 in 0 : vector<1x2xf32>, vector<1x2xf32>, vector<1x2xf32>, vector<1x2xf32>, vector<1x2xf32>, vector<1x2xf32>, vector<1x2xf32>, vector<1x2xf32> -> vector<8x2xf32>
    %185 = arith.addf %184, %57 : vector<8x2xf32>
    %186 = vector.shape_cast %60 : vector<1x2xi1> to vector<1x2xi1>
    %187 = vector.broadcast %186 : vector<1x2xi1> to vector<8x2xi1>
    %188 = arith.select %187, %185, %50 : vector<8x2xi1>, vector<8x2xf32>
    %c0_54 = arith.constant 0 : index
    %c0_55 = arith.constant 0 : index
    %189 = vector.load %arg10[%c0_54, %c0_55] : memref<8x2xi32, #tpu.memory_space<vmem>>, vector<1x2xi32>
    tpu.vector_store %arg10[%c0_54, %c0_55], %183 {strides = array<i32>} : memref<8x2xi32, #tpu.memory_space<vmem>>, vector<1x2xi32>,
    %c1_i32 = arith.constant 1 : i32
    %190 = vector.broadcast %c1_i32 : i32 to vector<1x2xi32>
    %191 = arith.cmpi eq, %45, %190 : vector<1x2xi32>
    %192 = arith.extui %191 : vector<1x2xi1> to vector<1x2xi32>
    %193 = arith.sitofp %192 : vector<1x2xi32> to vector<1x2xf32>
    %194 = vector.broadcast %193 : vector<1x2xf32> to vector<8x2xf32>
    %195 = arith.mulf %65, %194 : vector<8x2xf32>
    %196 = arith.addf %52, %195 : vector<8x2xf32>
    %c1 = arith.constant 1 : index
    %c0_56 = arith.constant 0 : index
    %c0_57 = arith.constant 0 : index
    %197 = vector.load %arg1[%c1, %c0_56, %c0_57] : memref<8x2x32xf32, #tpu.memory_space<vmem>>, vector<1x2x32xf32>
    %198 = vector.shape_cast %197 : vector<1x2x32xf32> to vector<2x32xf32>
    %cst_58 = arith.constant dense<0.000000e+00> : vector<8x2xf32>
    %199 = tpu.matmul %0, %198, %cst_58 {dimension_numbers = #tpu.dot_dimension_numbers<[1], [1], [0], [0], [0, 0, 1, 0], [], []>} : vector<8x32xf32>, vector<2x32xf32>, vector<8x2xf32> -> vector<8x2xf32>
    %200 = vector.broadcast %1 : vector<8x1xf32> to vector<8x2xf32>
    %201 = arith.addf %199, %200 : vector<8x2xf32>
    %c1_59 = arith.constant 1 : index
    %c0_60 = arith.constant 0 : index
    %202 = vector.load %arg3[%c1_59, %c0_60] : memref<8x2xf32, #tpu.memory_space<vmem>>, vector<1x2xf32>
    %cst_61 = arith.constant 0.000000e+00 : f32
    %203 = vector.broadcast %cst_61 : f32 to vector<1x2xf32>
    %204 = arith.cmpf ogt, %202, %203 : vector<1x2xf32>
    %c1_62 = arith.constant 1 : index
    %c0_63 = arith.constant 0 : index
    %205 = vector.load %arg2[%c1_62, %c0_63] : memref<8x2xi32, #tpu.memory_space<vmem>>, vector<1x2xi32>
    %206 = vector.broadcast %205 : vector<1x2xi32> to vector<8x2xi32>
    %207 = arith.cmpi eq, %37, %206 : vector<8x2xi32>
    %208 = arith.extui %207 : vector<8x2xi1> to vector<8x2xi32>
    %209 = arith.sitofp %208 : vector<8x2xi32> to vector<8x2xf32>
    %cst_64 = arith.constant dense<0xFF800000> : vector<2xf32>
    %210 = vector.multi_reduction <maximumf>, %78, %cst_64 [0] : vector<8x2xf32> to vector<2xf32>
    %211 = vector.shape_cast %210 : vector<2xf32> to vector<1x2xf32>
    %212 = vector.broadcast %211 : vector<1x2xf32> to vector<8x2xf32>
    %213 = arith.subf %78, %212 : vector<8x2xf32>
    %214 = math.exp %213 : vector<8x2xf32>
    %cst_65 = arith.constant dense<0.000000e+00> : vector<8x2xf32>
    %215 = tpu.matmul %3, %214, %cst_65 {dimension_numbers = #tpu.dot_dimension_numbers<[1], [0], [0], [1], [0, 0, 1, 1], [], []>} : vector<8x8xf32>, vector<8x2xf32>, vector<8x2xf32> -> vector<8x2xf32>
    %216 = math.log %215 : vector<8x2xf32>
    %217 = vector.broadcast %211 : vector<1x2xf32> to vector<8x2xf32>
    %218 = arith.addf %217, %216 : vector<8x2xf32>
    %219 = arith.addf %218, %201 : vector<8x2xf32>
    %220 = vector.shape_cast %204 : vector<1x2xi1> to vector<1x2xi1>
    %221 = vector.broadcast %220 : vector<1x2xi1> to vector<8x2xi1>
    %222 = arith.select %221, %219, %78 : vector<8x2xi1>, vector<8x2xf32>
    %cst_66 = arith.constant dense<0.000000e+00> : vector<8x2xf32>
    %223 = tpu.matmul %2, %65, %cst_66 {dimension_numbers = #tpu.dot_dimension_numbers<[1], [0], [0], [1], [0, 0, 1, 1], [], []>} : vector<8x8xf32>, vector<8x2xf32>, vector<8x2xf32> -> vector<8x2xf32>
    %224 = arith.addf %201, %223 : vector<8x2xf32>
    %225 = arith.mulf %209, %224 : vector<8x2xf32>
    %cst_67 = arith.constant dense<0.000000e+00> : vector<2xf32>
    %226 = vector.multi_reduction <add>, %225, %cst_67 [0] : vector<8x2xf32> to vector<2xf32>
    %227 = vector.shape_cast %226 : vector<2xf32> to vector<1x2xf32>
    %cst_68 = arith.constant 0.000000e+00 : f32
    %228 = vector.broadcast %cst_68 : f32 to vector<1x2xf32>
    %229 = arith.select %204, %227, %228 : vector<1x2xi1>, vector<1x2xf32>
    %230 = arith.addf %86, %229 : vector<1x2xf32>
    %c0_i32_69 = arith.constant 0 : i32
    %231 = vector.broadcast %c0_i32_69 : i32 to vector<1x2xi32>
    %232 = arith.addf %188, %8 : vector<8x2xf32>
    %cst_70 = arith.constant dense<0xFF800000> : vector<2xf32>
    %233 = vector.multi_reduction <maximumf>, %232, %cst_70 [0] : vector<8x2xf32> to vector<2xf32>
    %234 = vector.shape_cast %233 : vector<2xf32> to vector<1x2xf32>
    %235 = vector.broadcast %234 : vector<1x2xf32> to vector<8x2xf32>
    %236 = arith.cmpf oge, %232, %235 : vector<8x2xf32>
    %c8_i32_71 = arith.constant 8 : i32
    %237 = vector.broadcast %c8_i32_71 : i32 to vector<8x2xi32>
    %238 = arith.select %236, %37, %237 : vector<8x2xi1>, vector<8x2xi32>
    %cst_72 = arith.constant dense<2147483647> : vector<2xi32>
    %239 = vector.multi_reduction <minsi>, %238, %cst_72 [0] : vector<8x2xi32> to vector<2xi32>
    %240 = vector.shape_cast %239 : vector<2xi32> to vector<1x2xi32>
    %c0_i32_73 = arith.constant 0 : i32
    %241 = vector.broadcast %c0_i32_73 : i32 to vector<1x2xi32>
    %242 = arith.shli %240, %241 : vector<1x2xi32>
    %243 = arith.ori %231, %242 : vector<1x2xi32>
    %244 = arith.addf %188, %12 : vector<8x2xf32>
    %cst_74 = arith.constant dense<0xFF800000> : vector<2xf32>
    %245 = vector.multi_reduction <maximumf>, %244, %cst_74 [0] : vector<8x2xf32> to vector<2xf32>
    %246 = vector.shape_cast %245 : vector<2xf32> to vector<1x2xf32>
    %247 = vector.broadcast %246 : vector<1x2xf32> to vector<8x2xf32>
    %248 = arith.cmpf oge, %244, %247 : vector<8x2xf32>
    %c8_i32_75 = arith.constant 8 : i32
    %249 = vector.broadcast %c8_i32_75 : i32 to vector<8x2xi32>
    %250 = arith.select %248, %37, %249 : vector<8x2xi1>, vector<8x2xi32>
    %cst_76 = arith.constant dense<2147483647> : vector<2xi32>
    %251 = vector.multi_reduction <minsi>, %250, %cst_76 [0] : vector<8x2xi32> to vector<2xi32>
    %252 = vector.shape_cast %251 : vector<2xi32> to vector<1x2xi32>
    %c4_i32_77 = arith.constant 4 : i32
    %253 = vector.broadcast %c4_i32_77 : i32 to vector<1x2xi32>
    %254 = arith.shli %252, %253 : vector<1x2xi32>
    %255 = arith.ori %243, %254 : vector<1x2xi32>
    %256 = arith.addf %188, %16 : vector<8x2xf32>
    %cst_78 = arith.constant dense<0xFF800000> : vector<2xf32>
    %257 = vector.multi_reduction <maximumf>, %256, %cst_78 [0] : vector<8x2xf32> to vector<2xf32>
    %258 = vector.shape_cast %257 : vector<2xf32> to vector<1x2xf32>
    %259 = vector.broadcast %258 : vector<1x2xf32> to vector<8x2xf32>
    %260 = arith.cmpf oge, %256, %259 : vector<8x2xf32>
    %c8_i32_79 = arith.constant 8 : i32
    %261 = vector.broadcast %c8_i32_79 : i32 to vector<8x2xi32>
    %262 = arith.select %260, %37, %261 : vector<8x2xi1>, vector<8x2xi32>
    %cst_80 = arith.constant dense<2147483647> : vector<2xi32>
    %263 = vector.multi_reduction <minsi>, %262, %cst_80 [0] : vector<8x2xi32> to vector<2xi32>
    %264 = vector.shape_cast %263 : vector<2xi32> to vector<1x2xi32>
    %c8_i32_81 = arith.constant 8 : i32
    %265 = vector.broadcast %c8_i32_81 : i32 to vector<1x2xi32>
    %266 = arith.shli %264, %265 : vector<1x2xi32>
    %267 = arith.ori %255, %266 : vector<1x2xi32>
    %268 = arith.addf %188, %20 : vector<8x2xf32>
    %cst_82 = arith.constant dense<0xFF800000> : vector<2xf32>
    %269 = vector.multi_reduction <maximumf>, %268, %cst_82 [0] : vector<8x2xf32> to vector<2xf32>
    %270 = vector.shape_cast %269 : vector<2xf32> to vector<1x2xf32>
    %271 = vector.broadcast %270 : vector<1x2xf32> to vector<8x2xf32>
    %272 = arith.cmpf oge, %268, %271 : vector<8x2xf32>
    %c8_i32_83 = arith.constant 8 : i32
    %273 = vector.broadcast %c8_i32_83 : i32 to vector<8x2xi32>
    %274 = arith.select %272, %37, %273 : vector<8x2xi1>, vector<8x2xi32>
    %cst_84 = arith.constant dense<2147483647> : vector<2xi32>
    %275 = vector.multi_reduction <minsi>, %274, %cst_84 [0] : vector<8x2xi32> to vector<2xi32>
    %276 = vector.shape_cast %275 : vector<2xi32> to vector<1x2xi32>
    %c12_i32_85 = arith.constant 12 : i32
    %277 = vector.broadcast %c12_i32_85 : i32 to vector<1x2xi32>
    %278 = arith.shli %276, %277 : vector<1x2xi32>
    %279 = arith.ori %267, %278 : vector<1x2xi32>
    %280 = arith.addf %188, %24 : vector<8x2xf32>
    %cst_86 = arith.constant dense<0xFF800000> : vector<2xf32>
    %281 = vector.multi_reduction <maximumf>, %280, %cst_86 [0] : vector<8x2xf32> to vector<2xf32>
    %282 = vector.shape_cast %281 : vector<2xf32> to vector<1x2xf32>
    %283 = vector.broadcast %282 : vector<1x2xf32> to vector<8x2xf32>
    %284 = arith.cmpf oge, %280, %283 : vector<8x2xf32>
    %c8_i32_87 = arith.constant 8 : i32
    %285 = vector.broadcast %c8_i32_87 : i32 to vector<8x2xi32>
    %286 = arith.select %284, %37, %285 : vector<8x2xi1>, vector<8x2xi32>
    %cst_88 = arith.constant dense<2147483647> : vector<2xi32>
    %287 = vector.multi_reduction <minsi>, %286, %cst_88 [0] : vector<8x2xi32> to vector<2xi32>
    %288 = vector.shape_cast %287 : vector<2xi32> to vector<1x2xi32>
    %c16_i32_89 = arith.constant 16 : i32
    %289 = vector.broadcast %c16_i32_89 : i32 to vector<1x2xi32>
    %290 = arith.shli %288, %289 : vector<1x2xi32>
    %291 = arith.ori %279, %290 : vector<1x2xi32>
    %292 = arith.addf %188, %28 : vector<8x2xf32>
    %cst_90 = arith.constant dense<0xFF800000> : vector<2xf32>
    %293 = vector.multi_reduction <maximumf>, %292, %cst_90 [0] : vector<8x2xf32> to vector<2xf32>
    %294 = vector.shape_cast %293 : vector<2xf32> to vector<1x2xf32>
    %295 = vector.broadcast %294 : vector<1x2xf32> to vector<8x2xf32>
    %296 = arith.cmpf oge, %292, %295 : vector<8x2xf32>
    %c8_i32_91 = arith.constant 8 : i32
    %297 = vector.broadcast %c8_i32_91 : i32 to vector<8x2xi32>
    %298 = arith.select %296, %37, %297 : vector<8x2xi1>, vector<8x2xi32>
    %cst_92 = arith.constant dense<2147483647> : vector<2xi32>
    %299 = vector.multi_reduction <minsi>, %298, %cst_92 [0] : vector<8x2xi32> to vector<2xi32>
    %300 = vector.shape_cast %299 : vector<2xi32> to vector<1x2xi32>
    %c20_i32_93 = arith.constant 20 : i32
    %301 = vector.broadcast %c20_i32_93 : i32 to vector<1x2xi32>
    %302 = arith.shli %300, %301 : vector<1x2xi32>
    %303 = arith.ori %291, %302 : vector<1x2xi32>
    %304 = arith.addf %188, %32 : vector<8x2xf32>
    %cst_94 = arith.constant dense<0xFF800000> : vector<2xf32>
    %305 = vector.multi_reduction <maximumf>, %304, %cst_94 [0] : vector<8x2xf32> to vector<2xf32>
    %306 = vector.shape_cast %305 : vector<2xf32> to vector<1x2xf32>
    %307 = vector.broadcast %306 : vector<1x2xf32> to vector<8x2xf32>
    %308 = arith.cmpf oge, %304, %307 : vector<8x2xf32>
    %c8_i32_95 = arith.constant 8 : i32
    %309 = vector.broadcast %c8_i32_95 : i32 to vector<8x2xi32>
    %310 = arith.select %308, %37, %309 : vector<8x2xi1>, vector<8x2xi32>
    %cst_96 = arith.constant dense<2147483647> : vector<2xi32>
    %311 = vector.multi_reduction <minsi>, %310, %cst_96 [0] : vector<8x2xi32> to vector<2xi32>
    %312 = vector.shape_cast %311 : vector<2xi32> to vector<1x2xi32>
    %c24_i32_97 = arith.constant 24 : i32
    %313 = vector.broadcast %c24_i32_97 : i32 to vector<1x2xi32>
    %314 = arith.shli %312, %313 : vector<1x2xi32>
    %315 = arith.ori %303, %314 : vector<1x2xi32>
    %316 = arith.addf %188, %36 : vector<8x2xf32>
    %cst_98 = arith.constant dense<0xFF800000> : vector<2xf32>
    %317 = vector.multi_reduction <maximumf>, %316, %cst_98 [0] : vector<8x2xf32> to vector<2xf32>
    %318 = vector.shape_cast %317 : vector<2xf32> to vector<1x2xf32>
    %319 = vector.broadcast %318 : vector<1x2xf32> to vector<8x2xf32>
    %320 = arith.cmpf oge, %316, %319 : vector<8x2xf32>
    %c8_i32_99 = arith.constant 8 : i32
    %321 = vector.broadcast %c8_i32_99 : i32 to vector<8x2xi32>
    %322 = arith.select %320, %37, %321 : vector<8x2xi1>, vector<8x2xi32>
    %cst_100 = arith.constant dense<2147483647> : vector<2xi32>
    %323 = vector.multi_reduction <minsi>, %322, %cst_100 [0] : vector<8x2xi32> to vector<2xi32>
    %324 = vector.shape_cast %323 : vector<2xi32> to vector<1x2xi32>
    %c28_i32_101 = arith.constant 28 : i32
    %325 = vector.broadcast %c28_i32_101 : i32 to vector<1x2xi32>
    %326 = arith.shli %324, %325 : vector<1x2xi32>
    %327 = arith.ori %315, %326 : vector<1x2xi32>
    %328 = tpu.concatenate %234, %246, %258, %270, %282, %294, %306, %318 in 0 : vector<1x2xf32>, vector<1x2xf32>, vector<1x2xf32>, vector<1x2xf32>, vector<1x2xf32>, vector<1x2xf32>, vector<1x2xf32>, vector<1x2xf32> -> vector<8x2xf32>
    %329 = arith.addf %328, %201 : vector<8x2xf32>
    %330 = vector.shape_cast %204 : vector<1x2xi1> to vector<1x2xi1>
    %331 = vector.broadcast %330 : vector<1x2xi1> to vector<8x2xi1>
    %332 = arith.select %331, %329, %188 : vector<8x2xi1>, vector<8x2xf32>
    %c1_102 = arith.constant 1 : index
    %c0_103 = arith.constant 0 : index
    %333 = vector.load %arg10[%c1_102, %c0_103] : memref<8x2xi32, #tpu.memory_space<vmem>>, vector<1x2xi32>
    tpu.vector_store %arg10[%c1_102, %c0_103], %327 {strides = array<i32>} : memref<8x2xi32, #tpu.memory_space<vmem>>, vector<1x2xi32>,
    %c2_i32 = arith.constant 2 : i32
    %334 = vector.broadcast %c2_i32 : i32 to vector<1x2xi32>
    %335 = arith.cmpi eq, %45, %334 : vector<1x2xi32>
    %336 = arith.extui %335 : vector<1x2xi1> to vector<1x2xi32>
    %337 = arith.sitofp %336 : vector<1x2xi32> to vector<1x2xf32>
    %338 = vector.broadcast %337 : vector<1x2xf32> to vector<8x2xf32>
    %339 = arith.mulf %209, %338 : vector<8x2xf32>
    %340 = arith.addf %196, %339 : vector<8x2xf32>
    %c2 = arith.constant 2 : index
    %c0_104 = arith.constant 0 : index
    %c0_105 = arith.constant 0 : index
    %341 = vector.load %arg1[%c2, %c0_104, %c0_105] : memref<8x2x32xf32, #tpu.memory_space<vmem>>, vector<1x2x32xf32>
    %342 = vector.shape_cast %341 : vector<1x2x32xf32> to vector<2x32xf32>
    %cst_106 = arith.constant dense<0.000000e+00> : vector<8x2xf32>
    %343 = tpu.matmul %0, %342, %cst_106 {dimension_numbers = #tpu.dot_dimension_numbers<[1], [1], [0], [0], [0, 0, 1, 0], [], []>} : vector<8x32xf32>, vector<2x32xf32>, vector<8x2xf32> -> vector<8x2xf32>
    %344 = vector.broadcast %1 : vector<8x1xf32> to vector<8x2xf32>
    %345 = arith.addf %343, %344 : vector<8x2xf32>
    %c2_107 = arith.constant 2 : index
    %c0_108 = arith.constant 0 : index
    %346 = vector.load %arg3[%c2_107, %c0_108] : memref<8x2xf32, #tpu.memory_space<vmem>>, vector<1x2xf32>
    %cst_109 = arith.constant 0.000000e+00 : f32
    %347 = vector.broadcast %cst_109 : f32 to vector<1x2xf32>
    %348 = arith.cmpf ogt, %346, %347 : vector<1x2xf32>
    %c2_110 = arith.constant 2 : index
    %c0_111 = arith.constant 0 : index
    %349 = vector.load %arg2[%c2_110, %c0_111] : memref<8x2xi32, #tpu.memory_space<vmem>>, vector<1x2xi32>
    %350 = vector.broadcast %349 : vector<1x2xi32> to vector<8x2xi32>
    %351 = arith.cmpi eq, %37, %350 : vector<8x2xi32>
    %352 = arith.extui %351 : vector<8x2xi1> to vector<8x2xi32>
    %353 = arith.sitofp %352 : vector<8x2xi32> to vector<8x2xf32>
    %cst_112 = arith.constant dense<0xFF800000> : vector<2xf32>
    %354 = vector.multi_reduction <maximumf>, %222, %cst_112 [0] : vector<8x2xf32> to vector<2xf32>
    %355 = vector.shape_cast %354 : vector<2xf32> to vector<1x2xf32>
    %356 = vector.broadcast %355 : vector<1x2xf32> to vector<8x2xf32>
    %357 = arith.subf %222, %356 : vector<8x2xf32>
    %358 = math.exp %357 : vector<8x2xf32>
    %cst_113 = arith.constant dense<0.000000e+00> : vector<8x2xf32>
    %359 = tpu.matmul %3, %358, %cst_113 {dimension_numbers = #tpu.dot_dimension_numbers<[1], [0], [0], [1], [0, 0, 1, 1], [], []>} : vector<8x8xf32>, vector<8x2xf32>, vector<8x2xf32> -> vector<8x2xf32>
    %360 = math.log %359 : vector<8x2xf32>
    %361 = vector.broadcast %355 : vector<1x2xf32> to vector<8x2xf32>
    %362 = arith.addf %361, %360 : vector<8x2xf32>
    %363 = arith.addf %362, %345 : vector<8x2xf32>
    %364 = vector.shape_cast %348 : vector<1x2xi1> to vector<1x2xi1>
    %365 = vector.broadcast %364 : vector<1x2xi1> to vector<8x2xi1>
    %366 = arith.select %365, %363, %222 : vector<8x2xi1>, vector<8x2xf32>
    %cst_114 = arith.constant dense<0.000000e+00> : vector<8x2xf32>
    %367 = tpu.matmul %2, %209, %cst_114 {dimension_numbers = #tpu.dot_dimension_numbers<[1], [0], [0], [1], [0, 0, 1, 1], [], []>} : vector<8x8xf32>, vector<8x2xf32>, vector<8x2xf32> -> vector<8x2xf32>
    %368 = arith.addf %345, %367 : vector<8x2xf32>
    %369 = arith.mulf %353, %368 : vector<8x2xf32>
    %cst_115 = arith.constant dense<0.000000e+00> : vector<2xf32>
    %370 = vector.multi_reduction <add>, %369, %cst_115 [0] : vector<8x2xf32> to vector<2xf32>
    %371 = vector.shape_cast %370 : vector<2xf32> to vector<1x2xf32>
    %cst_116 = arith.constant 0.000000e+00 : f32
    %372 = vector.broadcast %cst_116 : f32 to vector<1x2xf32>
    %373 = arith.select %348, %371, %372 : vector<1x2xi1>, vector<1x2xf32>
    %374 = arith.addf %230, %373 : vector<1x2xf32>
    %c0_i32_117 = arith.constant 0 : i32
    %375 = vector.broadcast %c0_i32_117 : i32 to vector<1x2xi32>
    %376 = arith.addf %332, %8 : vector<8x2xf32>
    %cst_118 = arith.constant dense<0xFF800000> : vector<2xf32>
    %377 = vector.multi_reduction <maximumf>, %376, %cst_118 [0] : vector<8x2xf32> to vector<2xf32>
    %378 = vector.shape_cast %377 : vector<2xf32> to vector<1x2xf32>
    %379 = vector.broadcast %378 : vector<1x2xf32> to vector<8x2xf32>
    %380 = arith.cmpf oge, %376, %379 : vector<8x2xf32>
    %c8_i32_119 = arith.constant 8 : i32
    %381 = vector.broadcast %c8_i32_119 : i32 to vector<8x2xi32>
    %382 = arith.select %380, %37, %381 : vector<8x2xi1>, vector<8x2xi32>
    %cst_120 = arith.constant dense<2147483647> : vector<2xi32>
    %383 = vector.multi_reduction <minsi>, %382, %cst_120 [0] : vector<8x2xi32> to vector<2xi32>
    %384 = vector.shape_cast %383 : vector<2xi32> to vector<1x2xi32>
    %c0_i32_121 = arith.constant 0 : i32
    %385 = vector.broadcast %c0_i32_121 : i32 to vector<1x2xi32>
    %386 = arith.shli %384, %385 : vector<1x2xi32>
    %387 = arith.ori %375, %386 : vector<1x2xi32>
    %388 = arith.addf %332, %12 : vector<8x2xf32>
    %cst_122 = arith.constant dense<0xFF800000> : vector<2xf32>
    %389 = vector.multi_reduction <maximumf>, %388, %cst_122 [0] : vector<8x2xf32> to vector<2xf32>
    %390 = vector.shape_cast %389 : vector<2xf32> to vector<1x2xf32>
    %391 = vector.broadcast %390 : vector<1x2xf32> to vector<8x2xf32>
    %392 = arith.cmpf oge, %388, %391 : vector<8x2xf32>
    %c8_i32_123 = arith.constant 8 : i32
    %393 = vector.broadcast %c8_i32_123 : i32 to vector<8x2xi32>
    %394 = arith.select %392, %37, %393 : vector<8x2xi1>, vector<8x2xi32>
    %cst_124 = arith.constant dense<2147483647> : vector<2xi32>
    %395 = vector.multi_reduction <minsi>, %394, %cst_124 [0] : vector<8x2xi32> to vector<2xi32>
    %396 = vector.shape_cast %395 : vector<2xi32> to vector<1x2xi32>
    %c4_i32_125 = arith.constant 4 : i32
    %397 = vector.broadcast %c4_i32_125 : i32 to vector<1x2xi32>
    %398 = arith.shli %396, %397 : vector<1x2xi32>
    %399 = arith.ori %387, %398 : vector<1x2xi32>
    %400 = arith.addf %332, %16 : vector<8x2xf32>
    %cst_126 = arith.constant dense<0xFF800000> : vector<2xf32>
    %401 = vector.multi_reduction <maximumf>, %400, %cst_126 [0] : vector<8x2xf32> to vector<2xf32>
    %402 = vector.shape_cast %401 : vector<2xf32> to vector<1x2xf32>
    %403 = vector.broadcast %402 : vector<1x2xf32> to vector<8x2xf32>
    %404 = arith.cmpf oge, %400, %403 : vector<8x2xf32>
    %c8_i32_127 = arith.constant 8 : i32
    %405 = vector.broadcast %c8_i32_127 : i32 to vector<8x2xi32>
    %406 = arith.select %404, %37, %405 : vector<8x2xi1>, vector<8x2xi32>
    %cst_128 = arith.constant dense<2147483647> : vector<2xi32>
    %407 = vector.multi_reduction <minsi>, %406, %cst_128 [0] : vector<8x2xi32> to vector<2xi32>
    %408 = vector.shape_cast %407 : vector<2xi32> to vector<1x2xi32>
    %c8_i32_129 = arith.constant 8 : i32
    %409 = vector.broadcast %c8_i32_129 : i32 to vector<1x2xi32>
    %410 = arith.shli %408, %409 : vector<1x2xi32>
    %411 = arith.ori %399, %410 : vector<1x2xi32>
    %412 = arith.addf %332, %20 : vector<8x2xf32>
    %cst_130 = arith.constant dense<0xFF800000> : vector<2xf32>
    %413 = vector.multi_reduction <maximumf>, %412, %cst_130 [0] : vector<8x2xf32> to vector<2xf32>
    %414 = vector.shape_cast %413 : vector<2xf32> to vector<1x2xf32>
    %415 = vector.broadcast %414 : vector<1x2xf32> to vector<8x2xf32>
    %416 = arith.cmpf oge, %412, %415 : vector<8x2xf32>
    %c8_i32_131 = arith.constant 8 : i32
    %417 = vector.broadcast %c8_i32_131 : i32 to vector<8x2xi32>
    %418 = arith.select %416, %37, %417 : vector<8x2xi1>, vector<8x2xi32>
    %cst_132 = arith.constant dense<2147483647> : vector<2xi32>
    %419 = vector.multi_reduction <minsi>, %418, %cst_132 [0] : vector<8x2xi32> to vector<2xi32>
    %420 = vector.shape_cast %419 : vector<2xi32> to vector<1x2xi32>
    %c12_i32_133 = arith.constant 12 : i32
    %421 = vector.broadcast %c12_i32_133 : i32 to vector<1x2xi32>
    %422 = arith.shli %420, %421 : vector<1x2xi32>
    %423 = arith.ori %411, %422 : vector<1x2xi32>
    %424 = arith.addf %332, %24 : vector<8x2xf32>
    %cst_134 = arith.constant dense<0xFF800000> : vector<2xf32>
    %425 = vector.multi_reduction <maximumf>, %424, %cst_134 [0] : vector<8x2xf32> to vector<2xf32>
    %426 = vector.shape_cast %425 : vector<2xf32> to vector<1x2xf32>
    %427 = vector.broadcast %426 : vector<1x2xf32> to vector<8x2xf32>
    %428 = arith.cmpf oge, %424, %427 : vector<8x2xf32>
    %c8_i32_135 = arith.constant 8 : i32
    %429 = vector.broadcast %c8_i32_135 : i32 to vector<8x2xi32>
    %430 = arith.select %428, %37, %429 : vector<8x2xi1>, vector<8x2xi32>
    %cst_136 = arith.constant dense<2147483647> : vector<2xi32>
    %431 = vector.multi_reduction <minsi>, %430, %cst_136 [0] : vector<8x2xi32> to vector<2xi32>
    %432 = vector.shape_cast %431 : vector<2xi32> to vector<1x2xi32>
    %c16_i32_137 = arith.constant 16 : i32
    %433 = vector.broadcast %c16_i32_137 : i32 to vector<1x2xi32>
    %434 = arith.shli %432, %433 : vector<1x2xi32>
    %435 = arith.ori %423, %434 : vector<1x2xi32>
    %436 = arith.addf %332, %28 : vector<8x2xf32>
    %cst_138 = arith.constant dense<0xFF800000> : vector<2xf32>
    %437 = vector.multi_reduction <maximumf>, %436, %cst_138 [0] : vector<8x2xf32> to vector<2xf32>
    %438 = vector.shape_cast %437 : vector<2xf32> to vector<1x2xf32>
    %439 = vector.broadcast %438 : vector<1x2xf32> to vector<8x2xf32>
    %440 = arith.cmpf oge, %436, %439 : vector<8x2xf32>
    %c8_i32_139 = arith.constant 8 : i32
    %441 = vector.broadcast %c8_i32_139 : i32 to vector<8x2xi32>
    %442 = arith.select %440, %37, %441 : vector<8x2xi1>, vector<8x2xi32>
    %cst_140 = arith.constant dense<2147483647> : vector<2xi32>
    %443 = vector.multi_reduction <minsi>, %442, %cst_140 [0] : vector<8x2xi32> to vector<2xi32>
    %444 = vector.shape_cast %443 : vector<2xi32> to vector<1x2xi32>
    %c20_i32_141 = arith.constant 20 : i32
    %445 = vector.broadcast %c20_i32_141 : i32 to vector<1x2xi32>
    %446 = arith.shli %444, %445 : vector<1x2xi32>
    %447 = arith.ori %435, %446 : vector<1x2xi32>
    %448 = arith.addf %332, %32 : vector<8x2xf32>
    %cst_142 = arith.constant dense<0xFF800000> : vector<2xf32>
    %449 = vector.multi_reduction <maximumf>, %448, %cst_142 [0] : vector<8x2xf32> to vector<2xf32>
    %450 = vector.shape_cast %449 : vector<2xf32> to vector<1x2xf32>
    %451 = vector.broadcast %450 : vector<1x2xf32> to vector<8x2xf32>
    %452 = arith.cmpf oge, %448, %451 : vector<8x2xf32>
    %c8_i32_143 = arith.constant 8 : i32
    %453 = vector.broadcast %c8_i32_143 : i32 to vector<8x2xi32>
    %454 = arith.select %452, %37, %453 : vector<8x2xi1>, vector<8x2xi32>
    %cst_144 = arith.constant dense<2147483647> : vector<2xi32>
    %455 = vector.multi_reduction <minsi>, %454, %cst_144 [0] : vector<8x2xi32> to vector<2xi32>
    %456 = vector.shape_cast %455 : vector<2xi32> to vector<1x2xi32>
    %c24_i32_145 = arith.constant 24 : i32
    %457 = vector.broadcast %c24_i32_145 : i32 to vector<1x2xi32>
    %458 = arith.shli %456, %457 : vector<1x2xi32>
    %459 = arith.ori %447, %458 : vector<1x2xi32>
    %460 = arith.addf %332, %36 : vector<8x2xf32>
    %cst_146 = arith.constant dense<0xFF800000> : vector<2xf32>
    %461 = vector.multi_reduction <maximumf>, %460, %cst_146 [0] : vector<8x2xf32> to vector<2xf32>
    %462 = vector.shape_cast %461 : vector<2xf32> to vector<1x2xf32>
    %463 = vector.broadcast %462 : vector<1x2xf32> to vector<8x2xf32>
    %464 = arith.cmpf oge, %460, %463 : vector<8x2xf32>
    %c8_i32_147 = arith.constant 8 : i32
    %465 = vector.broadcast %c8_i32_147 : i32 to vector<8x2xi32>
    %466 = arith.select %464, %37, %465 : vector<8x2xi1>, vector<8x2xi32>
    %cst_148 = arith.constant dense<2147483647> : vector<2xi32>
    %467 = vector.multi_reduction <minsi>, %466, %cst_148 [0] : vector<8x2xi32> to vector<2xi32>
    %468 = vector.shape_cast %467 : vector<2xi32> to vector<1x2xi32>
    %c28_i32_149 = arith.constant 28 : i32
    %469 = vector.broadcast %c28_i32_149 : i32 to vector<1x2xi32>
    %470 = arith.shli %468, %469 : vector<1x2xi32>
    %471 = arith.ori %459, %470 : vector<1x2xi32>
    %472 = tpu.concatenate %378, %390, %402, %414, %426, %438, %450, %462 in 0 : vector<1x2xf32>, vector<1x2xf32>, vector<1x2xf32>, vector<1x2xf32>, vector<1x2xf32>, vector<1x2xf32>, vector<1x2xf32>, vector<1x2xf32> -> vector<8x2xf32>
    %473 = arith.addf %472, %345 : vector<8x2xf32>
    %474 = vector.shape_cast %348 : vector<1x2xi1> to vector<1x2xi1>
    %475 = vector.broadcast %474 : vector<1x2xi1> to vector<8x2xi1>
    %476 = arith.select %475, %473, %332 : vector<8x2xi1>, vector<8x2xf32>
    %c2_150 = arith.constant 2 : index
    %c0_151 = arith.constant 0 : index
    %477 = vector.load %arg10[%c2_150, %c0_151] : memref<8x2xi32, #tpu.memory_space<vmem>>, vector<1x2xi32>
    tpu.vector_store %arg10[%c2_150, %c0_151], %471 {strides = array<i32>} : memref<8x2xi32, #tpu.memory_space<vmem>>, vector<1x2xi32>,
    %c3_i32 = arith.constant 3 : i32
    %478 = vector.broadcast %c3_i32 : i32 to vector<1x2xi32>
    %479 = arith.cmpi eq, %45, %478 : vector<1x2xi32>
    %480 = arith.extui %479 : vector<1x2xi1> to vector<1x2xi32>
    %481 = arith.sitofp %480 : vector<1x2xi32> to vector<1x2xf32>
    %482 = vector.broadcast %481 : vector<1x2xf32> to vector<8x2xf32>
    %483 = arith.mulf %353, %482 : vector<8x2xf32>
    %484 = arith.addf %340, %483 : vector<8x2xf32>
    %c3 = arith.constant 3 : index
    %c0_152 = arith.constant 0 : index
    %c0_153 = arith.constant 0 : index
    %485 = vector.load %arg1[%c3, %c0_152, %c0_153] : memref<8x2x32xf32, #tpu.memory_space<vmem>>, vector<1x2x32xf32>
    %486 = vector.shape_cast %485 : vector<1x2x32xf32> to vector<2x32xf32>
    %cst_154 = arith.constant dense<0.000000e+00> : vector<8x2xf32>
    %487 = tpu.matmul %0, %486, %cst_154 {dimension_numbers = #tpu.dot_dimension_numbers<[1], [1], [0], [0], [0, 0, 1, 0], [], []>} : vector<8x32xf32>, vector<2x32xf32>, vector<8x2xf32> -> vector<8x2xf32>
    %488 = vector.broadcast %1 : vector<8x1xf32> to vector<8x2xf32>
    %489 = arith.addf %487, %488 : vector<8x2xf32>
    %c3_155 = arith.constant 3 : index
    %c0_156 = arith.constant 0 : index
    %490 = vector.load %arg3[%c3_155, %c0_156] : memref<8x2xf32, #tpu.memory_space<vmem>>, vector<1x2xf32>
    %cst_157 = arith.constant 0.000000e+00 : f32
    %491 = vector.broadcast %cst_157 : f32 to vector<1x2xf32>
    %492 = arith.cmpf ogt, %490, %491 : vector<1x2xf32>
    %c3_158 = arith.constant 3 : index
    %c0_159 = arith.constant 0 : index
    %493 = vector.load %arg2[%c3_158, %c0_159] : memref<8x2xi32, #tpu.memory_space<vmem>>, vector<1x2xi32>
    %494 = vector.broadcast %493 : vector<1x2xi32> to vector<8x2xi32>
    %495 = arith.cmpi eq, %37, %494 : vector<8x2xi32>
    %496 = arith.extui %495 : vector<8x2xi1> to vector<8x2xi32>
    %497 = arith.sitofp %496 : vector<8x2xi32> to vector<8x2xf32>
    %cst_160 = arith.constant dense<0xFF800000> : vector<2xf32>
    %498 = vector.multi_reduction <maximumf>, %366, %cst_160 [0] : vector<8x2xf32> to vector<2xf32>
    %499 = vector.shape_cast %498 : vector<2xf32> to vector<1x2xf32>
    %500 = vector.broadcast %499 : vector<1x2xf32> to vector<8x2xf32>
    %501 = arith.subf %366, %500 : vector<8x2xf32>
    %502 = math.exp %501 : vector<8x2xf32>
    %cst_161 = arith.constant dense<0.000000e+00> : vector<8x2xf32>
    %503 = tpu.matmul %3, %502, %cst_161 {dimension_numbers = #tpu.dot_dimension_numbers<[1], [0], [0], [1], [0, 0, 1, 1], [], []>} : vector<8x8xf32>, vector<8x2xf32>, vector<8x2xf32> -> vector<8x2xf32>
    %504 = math.log %503 : vector<8x2xf32>
    %505 = vector.broadcast %499 : vector<1x2xf32> to vector<8x2xf32>
    %506 = arith.addf %505, %504 : vector<8x2xf32>
    %507 = arith.addf %506, %489 : vector<8x2xf32>
    %508 = vector.shape_cast %492 : vector<1x2xi1> to vector<1x2xi1>
    %509 = vector.broadcast %508 : vector<1x2xi1> to vector<8x2xi1>
    %510 = arith.select %509, %507, %366 : vector<8x2xi1>, vector<8x2xf32>
    %cst_162 = arith.constant dense<0.000000e+00> : vector<8x2xf32>
    %511 = tpu.matmul %2, %353, %cst_162 {dimension_numbers = #tpu.dot_dimension_numbers<[1], [0], [0], [1], [0, 0, 1, 1], [], []>} : vector<8x8xf32>, vector<8x2xf32>, vector<8x2xf32> -> vector<8x2xf32>
    %512 = arith.addf %489, %511 : vector<8x2xf32>
    %513 = arith.mulf %497, %512 : vector<8x2xf32>
    %cst_163 = arith.constant dense<0.000000e+00> : vector<2xf32>
    %514 = vector.multi_reduction <add>, %513, %cst_163 [0] : vector<8x2xf32> to vector<2xf32>
    %515 = vector.shape_cast %514 : vector<2xf32> to vector<1x2xf32>
    %cst_164 = arith.constant 0.000000e+00 : f32
    %516 = vector.broadcast %cst_164 : f32 to vector<1x2xf32>
    %517 = arith.select %492, %515, %516 : vector<1x2xi1>, vector<1x2xf32>
    %518 = arith.addf %374, %517 : vector<1x2xf32>
    %c0_i32_165 = arith.constant 0 : i32
    %519 = vector.broadcast %c0_i32_165 : i32 to vector<1x2xi32>
    %520 = arith.addf %476, %8 : vector<8x2xf32>
    %cst_166 = arith.constant dense<0xFF800000> : vector<2xf32>
    %521 = vector.multi_reduction <maximumf>, %520, %cst_166 [0] : vector<8x2xf32> to vector<2xf32>
    %522 = vector.shape_cast %521 : vector<2xf32> to vector<1x2xf32>
    %523 = vector.broadcast %522 : vector<1x2xf32> to vector<8x2xf32>
    %524 = arith.cmpf oge, %520, %523 : vector<8x2xf32>
    %c8_i32_167 = arith.constant 8 : i32
    %525 = vector.broadcast %c8_i32_167 : i32 to vector<8x2xi32>
    %526 = arith.select %524, %37, %525 : vector<8x2xi1>, vector<8x2xi32>
    %cst_168 = arith.constant dense<2147483647> : vector<2xi32>
    %527 = vector.multi_reduction <minsi>, %526, %cst_168 [0] : vector<8x2xi32> to vector<2xi32>
    %528 = vector.shape_cast %527 : vector<2xi32> to vector<1x2xi32>
    %c0_i32_169 = arith.constant 0 : i32
    %529 = vector.broadcast %c0_i32_169 : i32 to vector<1x2xi32>
    %530 = arith.shli %528, %529 : vector<1x2xi32>
    %531 = arith.ori %519, %530 : vector<1x2xi32>
    %532 = arith.addf %476, %12 : vector<8x2xf32>
    %cst_170 = arith.constant dense<0xFF800000> : vector<2xf32>
    %533 = vector.multi_reduction <maximumf>, %532, %cst_170 [0] : vector<8x2xf32> to vector<2xf32>
    %534 = vector.shape_cast %533 : vector<2xf32> to vector<1x2xf32>
    %535 = vector.broadcast %534 : vector<1x2xf32> to vector<8x2xf32>
    %536 = arith.cmpf oge, %532, %535 : vector<8x2xf32>
    %c8_i32_171 = arith.constant 8 : i32
    %537 = vector.broadcast %c8_i32_171 : i32 to vector<8x2xi32>
    %538 = arith.select %536, %37, %537 : vector<8x2xi1>, vector<8x2xi32>
    %cst_172 = arith.constant dense<2147483647> : vector<2xi32>
    %539 = vector.multi_reduction <minsi>, %538, %cst_172 [0] : vector<8x2xi32> to vector<2xi32>
    %540 = vector.shape_cast %539 : vector<2xi32> to vector<1x2xi32>
    %c4_i32_173 = arith.constant 4 : i32
    %541 = vector.broadcast %c4_i32_173 : i32 to vector<1x2xi32>
    %542 = arith.shli %540, %541 : vector<1x2xi32>
    %543 = arith.ori %531, %542 : vector<1x2xi32>
    %544 = arith.addf %476, %16 : vector<8x2xf32>
    %cst_174 = arith.constant dense<0xFF800000> : vector<2xf32>
    %545 = vector.multi_reduction <maximumf>, %544, %cst_174 [0] : vector<8x2xf32> to vector<2xf32>
    %546 = vector.shape_cast %545 : vector<2xf32> to vector<1x2xf32>
    %547 = vector.broadcast %546 : vector<1x2xf32> to vector<8x2xf32>
    %548 = arith.cmpf oge, %544, %547 : vector<8x2xf32>
    %c8_i32_175 = arith.constant 8 : i32
    %549 = vector.broadcast %c8_i32_175 : i32 to vector<8x2xi32>
    %550 = arith.select %548, %37, %549 : vector<8x2xi1>, vector<8x2xi32>
    %cst_176 = arith.constant dense<2147483647> : vector<2xi32>
    %551 = vector.multi_reduction <minsi>, %550, %cst_176 [0] : vector<8x2xi32> to vector<2xi32>
    %552 = vector.shape_cast %551 : vector<2xi32> to vector<1x2xi32>
    %c8_i32_177 = arith.constant 8 : i32
    %553 = vector.broadcast %c8_i32_177 : i32 to vector<1x2xi32>
    %554 = arith.shli %552, %553 : vector<1x2xi32>
    %555 = arith.ori %543, %554 : vector<1x2xi32>
    %556 = arith.addf %476, %20 : vector<8x2xf32>
    %cst_178 = arith.constant dense<0xFF800000> : vector<2xf32>
    %557 = vector.multi_reduction <maximumf>, %556, %cst_178 [0] : vector<8x2xf32> to vector<2xf32>
    %558 = vector.shape_cast %557 : vector<2xf32> to vector<1x2xf32>
    %559 = vector.broadcast %558 : vector<1x2xf32> to vector<8x2xf32>
    %560 = arith.cmpf oge, %556, %559 : vector<8x2xf32>
    %c8_i32_179 = arith.constant 8 : i32
    %561 = vector.broadcast %c8_i32_179 : i32 to vector<8x2xi32>
    %562 = arith.select %560, %37, %561 : vector<8x2xi1>, vector<8x2xi32>
    %cst_180 = arith.constant dense<2147483647> : vector<2xi32>
    %563 = vector.multi_reduction <minsi>, %562, %cst_180 [0] : vector<8x2xi32> to vector<2xi32>
    %564 = vector.shape_cast %563 : vector<2xi32> to vector<1x2xi32>
    %c12_i32_181 = arith.constant 12 : i32
    %565 = vector.broadcast %c12_i32_181 : i32 to vector<1x2xi32>
    %566 = arith.shli %564, %565 : vector<1x2xi32>
    %567 = arith.ori %555, %566 : vector<1x2xi32>
    %568 = arith.addf %476, %24 : vector<8x2xf32>
    %cst_182 = arith.constant dense<0xFF800000> : vector<2xf32>
    %569 = vector.multi_reduction <maximumf>, %568, %cst_182 [0] : vector<8x2xf32> to vector<2xf32>
    %570 = vector.shape_cast %569 : vector<2xf32> to vector<1x2xf32>
    %571 = vector.broadcast %570 : vector<1x2xf32> to vector<8x2xf32>
    %572 = arith.cmpf oge, %568, %571 : vector<8x2xf32>
    %c8_i32_183 = arith.constant 8 : i32
    %573 = vector.broadcast %c8_i32_183 : i32 to vector<8x2xi32>
    %574 = arith.select %572, %37, %573 : vector<8x2xi1>, vector<8x2xi32>
    %cst_184 = arith.constant dense<2147483647> : vector<2xi32>
    %575 = vector.multi_reduction <minsi>, %574, %cst_184 [0] : vector<8x2xi32> to vector<2xi32>
    %576 = vector.shape_cast %575 : vector<2xi32> to vector<1x2xi32>
    %c16_i32_185 = arith.constant 16 : i32
    %577 = vector.broadcast %c16_i32_185 : i32 to vector<1x2xi32>
    %578 = arith.shli %576, %577 : vector<1x2xi32>
    %579 = arith.ori %567, %578 : vector<1x2xi32>
    %580 = arith.addf %476, %28 : vector<8x2xf32>
    %cst_186 = arith.constant dense<0xFF800000> : vector<2xf32>
    %581 = vector.multi_reduction <maximumf>, %580, %cst_186 [0] : vector<8x2xf32> to vector<2xf32>
    %582 = vector.shape_cast %581 : vector<2xf32> to vector<1x2xf32>
    %583 = vector.broadcast %582 : vector<1x2xf32> to vector<8x2xf32>
    %584 = arith.cmpf oge, %580, %583 : vector<8x2xf32>
    %c8_i32_187 = arith.constant 8 : i32
    %585 = vector.broadcast %c8_i32_187 : i32 to vector<8x2xi32>
    %586 = arith.select %584, %37, %585 : vector<8x2xi1>, vector<8x2xi32>
    %cst_188 = arith.constant dense<2147483647> : vector<2xi32>
    %587 = vector.multi_reduction <minsi>, %586, %cst_188 [0] : vector<8x2xi32> to vector<2xi32>
    %588 = vector.shape_cast %587 : vector<2xi32> to vector<1x2xi32>
    %c20_i32_189 = arith.constant 20 : i32
    %589 = vector.broadcast %c20_i32_189 : i32 to vector<1x2xi32>
    %590 = arith.shli %588, %589 : vector<1x2xi32>
    %591 = arith.ori %579, %590 : vector<1x2xi32>
    %592 = arith.addf %476, %32 : vector<8x2xf32>
    %cst_190 = arith.constant dense<0xFF800000> : vector<2xf32>
    %593 = vector.multi_reduction <maximumf>, %592, %cst_190 [0] : vector<8x2xf32> to vector<2xf32>
    %594 = vector.shape_cast %593 : vector<2xf32> to vector<1x2xf32>
    %595 = vector.broadcast %594 : vector<1x2xf32> to vector<8x2xf32>
    %596 = arith.cmpf oge, %592, %595 : vector<8x2xf32>
    %c8_i32_191 = arith.constant 8 : i32
    %597 = vector.broadcast %c8_i32_191 : i32 to vector<8x2xi32>
    %598 = arith.select %596, %37, %597 : vector<8x2xi1>, vector<8x2xi32>
    %cst_192 = arith.constant dense<2147483647> : vector<2xi32>
    %599 = vector.multi_reduction <minsi>, %598, %cst_192 [0] : vector<8x2xi32> to vector<2xi32>
    %600 = vector.shape_cast %599 : vector<2xi32> to vector<1x2xi32>
    %c24_i32_193 = arith.constant 24 : i32
    %601 = vector.broadcast %c24_i32_193 : i32 to vector<1x2xi32>
    %602 = arith.shli %600, %601 : vector<1x2xi32>
    %603 = arith.ori %591, %602 : vector<1x2xi32>
    %604 = arith.addf %476, %36 : vector<8x2xf32>
    %cst_194 = arith.constant dense<0xFF800000> : vector<2xf32>
    %605 = vector.multi_reduction <maximumf>, %604, %cst_194 [0] : vector<8x2xf32> to vector<2xf32>
    %606 = vector.shape_cast %605 : vector<2xf32> to vector<1x2xf32>
    %607 = vector.broadcast %606 : vector<1x2xf32> to vector<8x2xf32>
    %608 = arith.cmpf oge, %604, %607 : vector<8x2xf32>
    %c8_i32_195 = arith.constant 8 : i32
    %609 = vector.broadcast %c8_i32_195 : i32 to vector<8x2xi32>
    %610 = arith.select %608, %37, %609 : vector<8x2xi1>, vector<8x2xi32>
    %cst_196 = arith.constant dense<2147483647> : vector<2xi32>
    %611 = vector.multi_reduction <minsi>, %610, %cst_196 [0] : vector<8x2xi32> to vector<2xi32>
    %612 = vector.shape_cast %611 : vector<2xi32> to vector<1x2xi32>
    %c28_i32_197 = arith.constant 28 : i32
    %613 = vector.broadcast %c28_i32_197 : i32 to vector<1x2xi32>
    %614 = arith.shli %612, %613 : vector<1x2xi32>
    %615 = arith.ori %603, %614 : vector<1x2xi32>
    %616 = tpu.concatenate %522, %534, %546, %558, %570, %582, %594, %606 in 0 : vector<1x2xf32>, vector<1x2xf32>, vector<1x2xf32>, vector<1x2xf32>, vector<1x2xf32>, vector<1x2xf32>, vector<1x2xf32>, vector<1x2xf32> -> vector<8x2xf32>
    %617 = arith.addf %616, %489 : vector<8x2xf32>
    %618 = vector.shape_cast %492 : vector<1x2xi1> to vector<1x2xi1>
    %619 = vector.broadcast %618 : vector<1x2xi1> to vector<8x2xi1>
    %620 = arith.select %619, %617, %476 : vector<8x2xi1>, vector<8x2xf32>
    %c3_198 = arith.constant 3 : index
    %c0_199 = arith.constant 0 : index
    %621 = vector.load %arg10[%c3_198, %c0_199] : memref<8x2xi32, #tpu.memory_space<vmem>>, vector<1x2xi32>
    tpu.vector_store %arg10[%c3_198, %c0_199], %615 {strides = array<i32>} : memref<8x2xi32, #tpu.memory_space<vmem>>, vector<1x2xi32>,
    %c4_i32_200 = arith.constant 4 : i32
    %622 = vector.broadcast %c4_i32_200 : i32 to vector<1x2xi32>
    %623 = arith.cmpi eq, %45, %622 : vector<1x2xi32>
    %624 = arith.extui %623 : vector<1x2xi1> to vector<1x2xi32>
    %625 = arith.sitofp %624 : vector<1x2xi32> to vector<1x2xf32>
    %626 = vector.broadcast %625 : vector<1x2xf32> to vector<8x2xf32>
    %627 = arith.mulf %497, %626 : vector<8x2xf32>
    %628 = arith.addf %484, %627 : vector<8x2xf32>
    %c4 = arith.constant 4 : index
    %c0_201 = arith.constant 0 : index
    %c0_202 = arith.constant 0 : index
    %629 = vector.load %arg1[%c4, %c0_201, %c0_202] : memref<8x2x32xf32, #tpu.memory_space<vmem>>, vector<1x2x32xf32>
    %630 = vector.shape_cast %629 : vector<1x2x32xf32> to vector<2x32xf32>
    %cst_203 = arith.constant dense<0.000000e+00> : vector<8x2xf32>
    %631 = tpu.matmul %0, %630, %cst_203 {dimension_numbers = #tpu.dot_dimension_numbers<[1], [1], [0], [0], [0, 0, 1, 0], [], []>} : vector<8x32xf32>, vector<2x32xf32>, vector<8x2xf32> -> vector<8x2xf32>
    %632 = vector.broadcast %1 : vector<8x1xf32> to vector<8x2xf32>
    %633 = arith.addf %631, %632 : vector<8x2xf32>
    %c4_204 = arith.constant 4 : index
    %c0_205 = arith.constant 0 : index
    %634 = vector.load %arg3[%c4_204, %c0_205] : memref<8x2xf32, #tpu.memory_space<vmem>>, vector<1x2xf32>
    %cst_206 = arith.constant 0.000000e+00 : f32
    %635 = vector.broadcast %cst_206 : f32 to vector<1x2xf32>
    %636 = arith.cmpf ogt, %634, %635 : vector<1x2xf32>
    %c4_207 = arith.constant 4 : index
    %c0_208 = arith.constant 0 : index
    %637 = vector.load %arg2[%c4_207, %c0_208] : memref<8x2xi32, #tpu.memory_space<vmem>>, vector<1x2xi32>
    %638 = vector.broadcast %637 : vector<1x2xi32> to vector<8x2xi32>
    %639 = arith.cmpi eq, %37, %638 : vector<8x2xi32>
    %640 = arith.extui %639 : vector<8x2xi1> to vector<8x2xi32>
    %641 = arith.sitofp %640 : vector<8x2xi32> to vector<8x2xf32>
    %cst_209 = arith.constant dense<0xFF800000> : vector<2xf32>
    %642 = vector.multi_reduction <maximumf>, %510, %cst_209 [0] : vector<8x2xf32> to vector<2xf32>
    %643 = vector.shape_cast %642 : vector<2xf32> to vector<1x2xf32>
    %644 = vector.broadcast %643 : vector<1x2xf32> to vector<8x2xf32>
    %645 = arith.subf %510, %644 : vector<8x2xf32>
    %646 = math.exp %645 : vector<8x2xf32>
    %cst_210 = arith.constant dense<0.000000e+00> : vector<8x2xf32>
    %647 = tpu.matmul %3, %646, %cst_210 {dimension_numbers = #tpu.dot_dimension_numbers<[1], [0], [0], [1], [0, 0, 1, 1], [], []>} : vector<8x8xf32>, vector<8x2xf32>, vector<8x2xf32> -> vector<8x2xf32>
    %648 = math.log %647 : vector<8x2xf32>
    %649 = vector.broadcast %643 : vector<1x2xf32> to vector<8x2xf32>
    %650 = arith.addf %649, %648 : vector<8x2xf32>
    %651 = arith.addf %650, %633 : vector<8x2xf32>
    %652 = vector.shape_cast %636 : vector<1x2xi1> to vector<1x2xi1>
    %653 = vector.broadcast %652 : vector<1x2xi1> to vector<8x2xi1>
    %654 = arith.select %653, %651, %510 : vector<8x2xi1>, vector<8x2xf32>
    %cst_211 = arith.constant dense<0.000000e+00> : vector<8x2xf32>
    %655 = tpu.matmul %2, %497, %cst_211 {dimension_numbers = #tpu.dot_dimension_numbers<[1], [0], [0], [1], [0, 0, 1, 1], [], []>} : vector<8x8xf32>, vector<8x2xf32>, vector<8x2xf32> -> vector<8x2xf32>
    %656 = arith.addf %633, %655 : vector<8x2xf32>
    %657 = arith.mulf %641, %656 : vector<8x2xf32>
    %cst_212 = arith.constant dense<0.000000e+00> : vector<2xf32>
    %658 = vector.multi_reduction <add>, %657, %cst_212 [0] : vector<8x2xf32> to vector<2xf32>
    %659 = vector.shape_cast %658 : vector<2xf32> to vector<1x2xf32>
    %cst_213 = arith.constant 0.000000e+00 : f32
    %660 = vector.broadcast %cst_213 : f32 to vector<1x2xf32>
    %661 = arith.select %636, %659, %660 : vector<1x2xi1>, vector<1x2xf32>
    %662 = arith.addf %518, %661 : vector<1x2xf32>
    %c0_i32_214 = arith.constant 0 : i32
    %663 = vector.broadcast %c0_i32_214 : i32 to vector<1x2xi32>
    %664 = arith.addf %620, %8 : vector<8x2xf32>
    %cst_215 = arith.constant dense<0xFF800000> : vector<2xf32>
    %665 = vector.multi_reduction <maximumf>, %664, %cst_215 [0] : vector<8x2xf32> to vector<2xf32>
    %666 = vector.shape_cast %665 : vector<2xf32> to vector<1x2xf32>
    %667 = vector.broadcast %666 : vector<1x2xf32> to vector<8x2xf32>
    %668 = arith.cmpf oge, %664, %667 : vector<8x2xf32>
    %c8_i32_216 = arith.constant 8 : i32
    %669 = vector.broadcast %c8_i32_216 : i32 to vector<8x2xi32>
    %670 = arith.select %668, %37, %669 : vector<8x2xi1>, vector<8x2xi32>
    %cst_217 = arith.constant dense<2147483647> : vector<2xi32>
    %671 = vector.multi_reduction <minsi>, %670, %cst_217 [0] : vector<8x2xi32> to vector<2xi32>
    %672 = vector.shape_cast %671 : vector<2xi32> to vector<1x2xi32>
    %c0_i32_218 = arith.constant 0 : i32
    %673 = vector.broadcast %c0_i32_218 : i32 to vector<1x2xi32>
    %674 = arith.shli %672, %673 : vector<1x2xi32>
    %675 = arith.ori %663, %674 : vector<1x2xi32>
    %676 = arith.addf %620, %12 : vector<8x2xf32>
    %cst_219 = arith.constant dense<0xFF800000> : vector<2xf32>
    %677 = vector.multi_reduction <maximumf>, %676, %cst_219 [0] : vector<8x2xf32> to vector<2xf32>
    %678 = vector.shape_cast %677 : vector<2xf32> to vector<1x2xf32>
    %679 = vector.broadcast %678 : vector<1x2xf32> to vector<8x2xf32>
    %680 = arith.cmpf oge, %676, %679 : vector<8x2xf32>
    %c8_i32_220 = arith.constant 8 : i32
    %681 = vector.broadcast %c8_i32_220 : i32 to vector<8x2xi32>
    %682 = arith.select %680, %37, %681 : vector<8x2xi1>, vector<8x2xi32>
    %cst_221 = arith.constant dense<2147483647> : vector<2xi32>
    %683 = vector.multi_reduction <minsi>, %682, %cst_221 [0] : vector<8x2xi32> to vector<2xi32>
    %684 = vector.shape_cast %683 : vector<2xi32> to vector<1x2xi32>
    %c4_i32_222 = arith.constant 4 : i32
    %685 = vector.broadcast %c4_i32_222 : i32 to vector<1x2xi32>
    %686 = arith.shli %684, %685 : vector<1x2xi32>
    %687 = arith.ori %675, %686 : vector<1x2xi32>
    %688 = arith.addf %620, %16 : vector<8x2xf32>
    %cst_223 = arith.constant dense<0xFF800000> : vector<2xf32>
    %689 = vector.multi_reduction <maximumf>, %688, %cst_223 [0] : vector<8x2xf32> to vector<2xf32>
    %690 = vector.shape_cast %689 : vector<2xf32> to vector<1x2xf32>
    %691 = vector.broadcast %690 : vector<1x2xf32> to vector<8x2xf32>
    %692 = arith.cmpf oge, %688, %691 : vector<8x2xf32>
    %c8_i32_224 = arith.constant 8 : i32
    %693 = vector.broadcast %c8_i32_224 : i32 to vector<8x2xi32>
    %694 = arith.select %692, %37, %693 : vector<8x2xi1>, vector<8x2xi32>
    %cst_225 = arith.constant dense<2147483647> : vector<2xi32>
    %695 = vector.multi_reduction <minsi>, %694, %cst_225 [0] : vector<8x2xi32> to vector<2xi32>
    %696 = vector.shape_cast %695 : vector<2xi32> to vector<1x2xi32>
    %c8_i32_226 = arith.constant 8 : i32
    %697 = vector.broadcast %c8_i32_226 : i32 to vector<1x2xi32>
    %698 = arith.shli %696, %697 : vector<1x2xi32>
    %699 = arith.ori %687, %698 : vector<1x2xi32>
    %700 = arith.addf %620, %20 : vector<8x2xf32>
    %cst_227 = arith.constant dense<0xFF800000> : vector<2xf32>
    %701 = vector.multi_reduction <maximumf>, %700, %cst_227 [0] : vector<8x2xf32> to vector<2xf32>
    %702 = vector.shape_cast %701 : vector<2xf32> to vector<1x2xf32>
    %703 = vector.broadcast %702 : vector<1x2xf32> to vector<8x2xf32>
    %704 = arith.cmpf oge, %700, %703 : vector<8x2xf32>
    %c8_i32_228 = arith.constant 8 : i32
    %705 = vector.broadcast %c8_i32_228 : i32 to vector<8x2xi32>
    %706 = arith.select %704, %37, %705 : vector<8x2xi1>, vector<8x2xi32>
    %cst_229 = arith.constant dense<2147483647> : vector<2xi32>
    %707 = vector.multi_reduction <minsi>, %706, %cst_229 [0] : vector<8x2xi32> to vector<2xi32>
    %708 = vector.shape_cast %707 : vector<2xi32> to vector<1x2xi32>
    %c12_i32_230 = arith.constant 12 : i32
    %709 = vector.broadcast %c12_i32_230 : i32 to vector<1x2xi32>
    %710 = arith.shli %708, %709 : vector<1x2xi32>
    %711 = arith.ori %699, %710 : vector<1x2xi32>
    %712 = arith.addf %620, %24 : vector<8x2xf32>
    %cst_231 = arith.constant dense<0xFF800000> : vector<2xf32>
    %713 = vector.multi_reduction <maximumf>, %712, %cst_231 [0] : vector<8x2xf32> to vector<2xf32>
    %714 = vector.shape_cast %713 : vector<2xf32> to vector<1x2xf32>
    %715 = vector.broadcast %714 : vector<1x2xf32> to vector<8x2xf32>
    %716 = arith.cmpf oge, %712, %715 : vector<8x2xf32>
    %c8_i32_232 = arith.constant 8 : i32
    %717 = vector.broadcast %c8_i32_232 : i32 to vector<8x2xi32>
    %718 = arith.select %716, %37, %717 : vector<8x2xi1>, vector<8x2xi32>
    %cst_233 = arith.constant dense<2147483647> : vector<2xi32>
    %719 = vector.multi_reduction <minsi>, %718, %cst_233 [0] : vector<8x2xi32> to vector<2xi32>
    %720 = vector.shape_cast %719 : vector<2xi32> to vector<1x2xi32>
    %c16_i32_234 = arith.constant 16 : i32
    %721 = vector.broadcast %c16_i32_234 : i32 to vector<1x2xi32>
    %722 = arith.shli %720, %721 : vector<1x2xi32>
    %723 = arith.ori %711, %722 : vector<1x2xi32>
    %724 = arith.addf %620, %28 : vector<8x2xf32>
    %cst_235 = arith.constant dense<0xFF800000> : vector<2xf32>
    %725 = vector.multi_reduction <maximumf>, %724, %cst_235 [0] : vector<8x2xf32> to vector<2xf32>
    %726 = vector.shape_cast %725 : vector<2xf32> to vector<1x2xf32>
    %727 = vector.broadcast %726 : vector<1x2xf32> to vector<8x2xf32>
    %728 = arith.cmpf oge, %724, %727 : vector<8x2xf32>
    %c8_i32_236 = arith.constant 8 : i32
    %729 = vector.broadcast %c8_i32_236 : i32 to vector<8x2xi32>
    %730 = arith.select %728, %37, %729 : vector<8x2xi1>, vector<8x2xi32>
    %cst_237 = arith.constant dense<2147483647> : vector<2xi32>
    %731 = vector.multi_reduction <minsi>, %730, %cst_237 [0] : vector<8x2xi32> to vector<2xi32>
    %732 = vector.shape_cast %731 : vector<2xi32> to vector<1x2xi32>
    %c20_i32_238 = arith.constant 20 : i32
    %733 = vector.broadcast %c20_i32_238 : i32 to vector<1x2xi32>
    %734 = arith.shli %732, %733 : vector<1x2xi32>
    %735 = arith.ori %723, %734 : vector<1x2xi32>
    %736 = arith.addf %620, %32 : vector<8x2xf32>
    %cst_239 = arith.constant dense<0xFF800000> : vector<2xf32>
    %737 = vector.multi_reduction <maximumf>, %736, %cst_239 [0] : vector<8x2xf32> to vector<2xf32>
    %738 = vector.shape_cast %737 : vector<2xf32> to vector<1x2xf32>
    %739 = vector.broadcast %738 : vector<1x2xf32> to vector<8x2xf32>
    %740 = arith.cmpf oge, %736, %739 : vector<8x2xf32>
    %c8_i32_240 = arith.constant 8 : i32
    %741 = vector.broadcast %c8_i32_240 : i32 to vector<8x2xi32>
    %742 = arith.select %740, %37, %741 : vector<8x2xi1>, vector<8x2xi32>
    %cst_241 = arith.constant dense<2147483647> : vector<2xi32>
    %743 = vector.multi_reduction <minsi>, %742, %cst_241 [0] : vector<8x2xi32> to vector<2xi32>
    %744 = vector.shape_cast %743 : vector<2xi32> to vector<1x2xi32>
    %c24_i32_242 = arith.constant 24 : i32
    %745 = vector.broadcast %c24_i32_242 : i32 to vector<1x2xi32>
    %746 = arith.shli %744, %745 : vector<1x2xi32>
    %747 = arith.ori %735, %746 : vector<1x2xi32>
    %748 = arith.addf %620, %36 : vector<8x2xf32>
    %cst_243 = arith.constant dense<0xFF800000> : vector<2xf32>
    %749 = vector.multi_reduction <maximumf>, %748, %cst_243 [0] : vector<8x2xf32> to vector<2xf32>
    %750 = vector.shape_cast %749 : vector<2xf32> to vector<1x2xf32>
    %751 = vector.broadcast %750 : vector<1x2xf32> to vector<8x2xf32>
    %752 = arith.cmpf oge, %748, %751 : vector<8x2xf32>
    %c8_i32_244 = arith.constant 8 : i32
    %753 = vector.broadcast %c8_i32_244 : i32 to vector<8x2xi32>
    %754 = arith.select %752, %37, %753 : vector<8x2xi1>, vector<8x2xi32>
    %cst_245 = arith.constant dense<2147483647> : vector<2xi32>
    %755 = vector.multi_reduction <minsi>, %754, %cst_245 [0] : vector<8x2xi32> to vector<2xi32>
    %756 = vector.shape_cast %755 : vector<2xi32> to vector<1x2xi32>
    %c28_i32_246 = arith.constant 28 : i32
    %757 = vector.broadcast %c28_i32_246 : i32 to vector<1x2xi32>
    %758 = arith.shli %756, %757 : vector<1x2xi32>
    %759 = arith.ori %747, %758 : vector<1x2xi32>
    %760 = tpu.concatenate %666, %678, %690, %702, %714, %726, %738, %750 in 0 : vector<1x2xf32>, vector<1x2xf32>, vector<1x2xf32>, vector<1x2xf32>, vector<1x2xf32>, vector<1x2xf32>, vector<1x2xf32>, vector<1x2xf32> -> vector<8x2xf32>
    %761 = arith.addf %760, %633 : vector<8x2xf32>
    %762 = vector.shape_cast %636 : vector<1x2xi1> to vector<1x2xi1>
    %763 = vector.broadcast %762 : vector<1x2xi1> to vector<8x2xi1>
    %764 = arith.select %763, %761, %620 : vector<8x2xi1>, vector<8x2xf32>
    %c4_247 = arith.constant 4 : index
    %c0_248 = arith.constant 0 : index
    %765 = vector.load %arg10[%c4_247, %c0_248] : memref<8x2xi32, #tpu.memory_space<vmem>>, vector<1x2xi32>
    tpu.vector_store %arg10[%c4_247, %c0_248], %759 {strides = array<i32>} : memref<8x2xi32, #tpu.memory_space<vmem>>, vector<1x2xi32>,
    %c5_i32 = arith.constant 5 : i32
    %766 = vector.broadcast %c5_i32 : i32 to vector<1x2xi32>
    %767 = arith.cmpi eq, %45, %766 : vector<1x2xi32>
    %768 = arith.extui %767 : vector<1x2xi1> to vector<1x2xi32>
    %769 = arith.sitofp %768 : vector<1x2xi32> to vector<1x2xf32>
    %770 = vector.broadcast %769 : vector<1x2xf32> to vector<8x2xf32>
    %771 = arith.mulf %641, %770 : vector<8x2xf32>
    %772 = arith.addf %628, %771 : vector<8x2xf32>
    %c5 = arith.constant 5 : index
    %c0_249 = arith.constant 0 : index
    %c0_250 = arith.constant 0 : index
    %773 = vector.load %arg1[%c5, %c0_249, %c0_250] : memref<8x2x32xf32, #tpu.memory_space<vmem>>, vector<1x2x32xf32>
    %774 = vector.shape_cast %773 : vector<1x2x32xf32> to vector<2x32xf32>
    %cst_251 = arith.constant dense<0.000000e+00> : vector<8x2xf32>
    %775 = tpu.matmul %0, %774, %cst_251 {dimension_numbers = #tpu.dot_dimension_numbers<[1], [1], [0], [0], [0, 0, 1, 0], [], []>} : vector<8x32xf32>, vector<2x32xf32>, vector<8x2xf32> -> vector<8x2xf32>
    %776 = vector.broadcast %1 : vector<8x1xf32> to vector<8x2xf32>
    %777 = arith.addf %775, %776 : vector<8x2xf32>
    %c5_252 = arith.constant 5 : index
    %c0_253 = arith.constant 0 : index
    %778 = vector.load %arg3[%c5_252, %c0_253] : memref<8x2xf32, #tpu.memory_space<vmem>>, vector<1x2xf32>
    %cst_254 = arith.constant 0.000000e+00 : f32
    %779 = vector.broadcast %cst_254 : f32 to vector<1x2xf32>
    %780 = arith.cmpf ogt, %778, %779 : vector<1x2xf32>
    %c5_255 = arith.constant 5 : index
    %c0_256 = arith.constant 0 : index
    %781 = vector.load %arg2[%c5_255, %c0_256] : memref<8x2xi32, #tpu.memory_space<vmem>>, vector<1x2xi32>
    %782 = vector.broadcast %781 : vector<1x2xi32> to vector<8x2xi32>
    %783 = arith.cmpi eq, %37, %782 : vector<8x2xi32>
    %784 = arith.extui %783 : vector<8x2xi1> to vector<8x2xi32>
    %785 = arith.sitofp %784 : vector<8x2xi32> to vector<8x2xf32>
    %cst_257 = arith.constant dense<0xFF800000> : vector<2xf32>
    %786 = vector.multi_reduction <maximumf>, %654, %cst_257 [0] : vector<8x2xf32> to vector<2xf32>
    %787 = vector.shape_cast %786 : vector<2xf32> to vector<1x2xf32>
    %788 = vector.broadcast %787 : vector<1x2xf32> to vector<8x2xf32>
    %789 = arith.subf %654, %788 : vector<8x2xf32>
    %790 = math.exp %789 : vector<8x2xf32>
    %cst_258 = arith.constant dense<0.000000e+00> : vector<8x2xf32>
    %791 = tpu.matmul %3, %790, %cst_258 {dimension_numbers = #tpu.dot_dimension_numbers<[1], [0], [0], [1], [0, 0, 1, 1], [], []>} : vector<8x8xf32>, vector<8x2xf32>, vector<8x2xf32> -> vector<8x2xf32>
    %792 = math.log %791 : vector<8x2xf32>
    %793 = vector.broadcast %787 : vector<1x2xf32> to vector<8x2xf32>
    %794 = arith.addf %793, %792 : vector<8x2xf32>
    %795 = arith.addf %794, %777 : vector<8x2xf32>
    %796 = vector.shape_cast %780 : vector<1x2xi1> to vector<1x2xi1>
    %797 = vector.broadcast %796 : vector<1x2xi1> to vector<8x2xi1>
    %798 = arith.select %797, %795, %654 : vector<8x2xi1>, vector<8x2xf32>
    %cst_259 = arith.constant dense<0.000000e+00> : vector<8x2xf32>
    %799 = tpu.matmul %2, %641, %cst_259 {dimension_numbers = #tpu.dot_dimension_numbers<[1], [0], [0], [1], [0, 0, 1, 1], [], []>} : vector<8x8xf32>, vector<8x2xf32>, vector<8x2xf32> -> vector<8x2xf32>
    %800 = arith.addf %777, %799 : vector<8x2xf32>
    %801 = arith.mulf %785, %800 : vector<8x2xf32>
    %cst_260 = arith.constant dense<0.000000e+00> : vector<2xf32>
    %802 = vector.multi_reduction <add>, %801, %cst_260 [0] : vector<8x2xf32> to vector<2xf32>
    %803 = vector.shape_cast %802 : vector<2xf32> to vector<1x2xf32>
    %cst_261 = arith.constant 0.000000e+00 : f32
    %804 = vector.broadcast %cst_261 : f32 to vector<1x2xf32>
    %805 = arith.select %780, %803, %804 : vector<1x2xi1>, vector<1x2xf32>
    %806 = arith.addf %662, %805 : vector<1x2xf32>
    %c0_i32_262 = arith.constant 0 : i32
    %807 = vector.broadcast %c0_i32_262 : i32 to vector<1x2xi32>
    %808 = arith.addf %764, %8 : vector<8x2xf32>
    %cst_263 = arith.constant dense<0xFF800000> : vector<2xf32>
    %809 = vector.multi_reduction <maximumf>, %808, %cst_263 [0] : vector<8x2xf32> to vector<2xf32>
    %810 = vector.shape_cast %809 : vector<2xf32> to vector<1x2xf32>
    %811 = vector.broadcast %810 : vector<1x2xf32> to vector<8x2xf32>
    %812 = arith.cmpf oge, %808, %811 : vector<8x2xf32>
    %c8_i32_264 = arith.constant 8 : i32
    %813 = vector.broadcast %c8_i32_264 : i32 to vector<8x2xi32>
    %814 = arith.select %812, %37, %813 : vector<8x2xi1>, vector<8x2xi32>
    %cst_265 = arith.constant dense<2147483647> : vector<2xi32>
    %815 = vector.multi_reduction <minsi>, %814, %cst_265 [0] : vector<8x2xi32> to vector<2xi32>
    %816 = vector.shape_cast %815 : vector<2xi32> to vector<1x2xi32>
    %c0_i32_266 = arith.constant 0 : i32
    %817 = vector.broadcast %c0_i32_266 : i32 to vector<1x2xi32>
    %818 = arith.shli %816, %817 : vector<1x2xi32>
    %819 = arith.ori %807, %818 : vector<1x2xi32>
    %820 = arith.addf %764, %12 : vector<8x2xf32>
    %cst_267 = arith.constant dense<0xFF800000> : vector<2xf32>
    %821 = vector.multi_reduction <maximumf>, %820, %cst_267 [0] : vector<8x2xf32> to vector<2xf32>
    %822 = vector.shape_cast %821 : vector<2xf32> to vector<1x2xf32>
    %823 = vector.broadcast %822 : vector<1x2xf32> to vector<8x2xf32>
    %824 = arith.cmpf oge, %820, %823 : vector<8x2xf32>
    %c8_i32_268 = arith.constant 8 : i32
    %825 = vector.broadcast %c8_i32_268 : i32 to vector<8x2xi32>
    %826 = arith.select %824, %37, %825 : vector<8x2xi1>, vector<8x2xi32>
    %cst_269 = arith.constant dense<2147483647> : vector<2xi32>
    %827 = vector.multi_reduction <minsi>, %826, %cst_269 [0] : vector<8x2xi32> to vector<2xi32>
    %828 = vector.shape_cast %827 : vector<2xi32> to vector<1x2xi32>
    %c4_i32_270 = arith.constant 4 : i32
    %829 = vector.broadcast %c4_i32_270 : i32 to vector<1x2xi32>
    %830 = arith.shli %828, %829 : vector<1x2xi32>
    %831 = arith.ori %819, %830 : vector<1x2xi32>
    %832 = arith.addf %764, %16 : vector<8x2xf32>
    %cst_271 = arith.constant dense<0xFF800000> : vector<2xf32>
    %833 = vector.multi_reduction <maximumf>, %832, %cst_271 [0] : vector<8x2xf32> to vector<2xf32>
    %834 = vector.shape_cast %833 : vector<2xf32> to vector<1x2xf32>
    %835 = vector.broadcast %834 : vector<1x2xf32> to vector<8x2xf32>
    %836 = arith.cmpf oge, %832, %835 : vector<8x2xf32>
    %c8_i32_272 = arith.constant 8 : i32
    %837 = vector.broadcast %c8_i32_272 : i32 to vector<8x2xi32>
    %838 = arith.select %836, %37, %837 : vector<8x2xi1>, vector<8x2xi32>
    %cst_273 = arith.constant dense<2147483647> : vector<2xi32>
    %839 = vector.multi_reduction <minsi>, %838, %cst_273 [0] : vector<8x2xi32> to vector<2xi32>
    %840 = vector.shape_cast %839 : vector<2xi32> to vector<1x2xi32>
    %c8_i32_274 = arith.constant 8 : i32
    %841 = vector.broadcast %c8_i32_274 : i32 to vector<1x2xi32>
    %842 = arith.shli %840, %841 : vector<1x2xi32>
    %843 = arith.ori %831, %842 : vector<1x2xi32>
    %844 = arith.addf %764, %20 : vector<8x2xf32>
    %cst_275 = arith.constant dense<0xFF800000> : vector<2xf32>
    %845 = vector.multi_reduction <maximumf>, %844, %cst_275 [0] : vector<8x2xf32> to vector<2xf32>
    %846 = vector.shape_cast %845 : vector<2xf32> to vector<1x2xf32>
    %847 = vector.broadcast %846 : vector<1x2xf32> to vector<8x2xf32>
    %848 = arith.cmpf oge, %844, %847 : vector<8x2xf32>
    %c8_i32_276 = arith.constant 8 : i32
    %849 = vector.broadcast %c8_i32_276 : i32 to vector<8x2xi32>
    %850 = arith.select %848, %37, %849 : vector<8x2xi1>, vector<8x2xi32>
    %cst_277 = arith.constant dense<2147483647> : vector<2xi32>
    %851 = vector.multi_reduction <minsi>, %850, %cst_277 [0] : vector<8x2xi32> to vector<2xi32>
    %852 = vector.shape_cast %851 : vector<2xi32> to vector<1x2xi32>
    %c12_i32_278 = arith.constant 12 : i32
    %853 = vector.broadcast %c12_i32_278 : i32 to vector<1x2xi32>
    %854 = arith.shli %852, %853 : vector<1x2xi32>
    %855 = arith.ori %843, %854 : vector<1x2xi32>
    %856 = arith.addf %764, %24 : vector<8x2xf32>
    %cst_279 = arith.constant dense<0xFF800000> : vector<2xf32>
    %857 = vector.multi_reduction <maximumf>, %856, %cst_279 [0] : vector<8x2xf32> to vector<2xf32>
    %858 = vector.shape_cast %857 : vector<2xf32> to vector<1x2xf32>
    %859 = vector.broadcast %858 : vector<1x2xf32> to vector<8x2xf32>
    %860 = arith.cmpf oge, %856, %859 : vector<8x2xf32>
    %c8_i32_280 = arith.constant 8 : i32
    %861 = vector.broadcast %c8_i32_280 : i32 to vector<8x2xi32>
    %862 = arith.select %860, %37, %861 : vector<8x2xi1>, vector<8x2xi32>
    %cst_281 = arith.constant dense<2147483647> : vector<2xi32>
    %863 = vector.multi_reduction <minsi>, %862, %cst_281 [0] : vector<8x2xi32> to vector<2xi32>
    %864 = vector.shape_cast %863 : vector<2xi32> to vector<1x2xi32>
    %c16_i32_282 = arith.constant 16 : i32
    %865 = vector.broadcast %c16_i32_282 : i32 to vector<1x2xi32>
    %866 = arith.shli %864, %865 : vector<1x2xi32>
    %867 = arith.ori %855, %866 : vector<1x2xi32>
    %868 = arith.addf %764, %28 : vector<8x2xf32>
    %cst_283 = arith.constant dense<0xFF800000> : vector<2xf32>
    %869 = vector.multi_reduction <maximumf>, %868, %cst_283 [0] : vector<8x2xf32> to vector<2xf32>
    %870 = vector.shape_cast %869 : vector<2xf32> to vector<1x2xf32>
    %871 = vector.broadcast %870 : vector<1x2xf32> to vector<8x2xf32>
    %872 = arith.cmpf oge, %868, %871 : vector<8x2xf32>
    %c8_i32_284 = arith.constant 8 : i32
    %873 = vector.broadcast %c8_i32_284 : i32 to vector<8x2xi32>
    %874 = arith.select %872, %37, %873 : vector<8x2xi1>, vector<8x2xi32>
    %cst_285 = arith.constant dense<2147483647> : vector<2xi32>
    %875 = vector.multi_reduction <minsi>, %874, %cst_285 [0] : vector<8x2xi32> to vector<2xi32>
    %876 = vector.shape_cast %875 : vector<2xi32> to vector<1x2xi32>
    %c20_i32_286 = arith.constant 20 : i32
    %877 = vector.broadcast %c20_i32_286 : i32 to vector<1x2xi32>
    %878 = arith.shli %876, %877 : vector<1x2xi32>
    %879 = arith.ori %867, %878 : vector<1x2xi32>
    %880 = arith.addf %764, %32 : vector<8x2xf32>
    %cst_287 = arith.constant dense<0xFF800000> : vector<2xf32>
    %881 = vector.multi_reduction <maximumf>, %880, %cst_287 [0] : vector<8x2xf32> to vector<2xf32>
    %882 = vector.shape_cast %881 : vector<2xf32> to vector<1x2xf32>
    %883 = vector.broadcast %882 : vector<1x2xf32> to vector<8x2xf32>
    %884 = arith.cmpf oge, %880, %883 : vector<8x2xf32>
    %c8_i32_288 = arith.constant 8 : i32
    %885 = vector.broadcast %c8_i32_288 : i32 to vector<8x2xi32>
    %886 = arith.select %884, %37, %885 : vector<8x2xi1>, vector<8x2xi32>
    %cst_289 = arith.constant dense<2147483647> : vector<2xi32>
    %887 = vector.multi_reduction <minsi>, %886, %cst_289 [0] : vector<8x2xi32> to vector<2xi32>
    %888 = vector.shape_cast %887 : vector<2xi32> to vector<1x2xi32>
    %c24_i32_290 = arith.constant 24 : i32
    %889 = vector.broadcast %c24_i32_290 : i32 to vector<1x2xi32>
    %890 = arith.shli %888, %889 : vector<1x2xi32>
    %891 = arith.ori %879, %890 : vector<1x2xi32>
    %892 = arith.addf %764, %36 : vector<8x2xf32>
    %cst_291 = arith.constant dense<0xFF800000> : vector<2xf32>
    %893 = vector.multi_reduction <maximumf>, %892, %cst_291 [0] : vector<8x2xf32> to vector<2xf32>
    %894 = vector.shape_cast %893 : vector<2xf32> to vector<1x2xf32>
    %895 = vector.broadcast %894 : vector<1x2xf32> to vector<8x2xf32>
    %896 = arith.cmpf oge, %892, %895 : vector<8x2xf32>
    %c8_i32_292 = arith.constant 8 : i32
    %897 = vector.broadcast %c8_i32_292 : i32 to vector<8x2xi32>
    %898 = arith.select %896, %37, %897 : vector<8x2xi1>, vector<8x2xi32>
    %cst_293 = arith.constant dense<2147483647> : vector<2xi32>
    %899 = vector.multi_reduction <minsi>, %898, %cst_293 [0] : vector<8x2xi32> to vector<2xi32>
    %900 = vector.shape_cast %899 : vector<2xi32> to vector<1x2xi32>
    %c28_i32_294 = arith.constant 28 : i32
    %901 = vector.broadcast %c28_i32_294 : i32 to vector<1x2xi32>
    %902 = arith.shli %900, %901 : vector<1x2xi32>
    %903 = arith.ori %891, %902 : vector<1x2xi32>
    %904 = tpu.concatenate %810, %822, %834, %846, %858, %870, %882, %894 in 0 : vector<1x2xf32>, vector<1x2xf32>, vector<1x2xf32>, vector<1x2xf32>, vector<1x2xf32>, vector<1x2xf32>, vector<1x2xf32>, vector<1x2xf32> -> vector<8x2xf32>
    %905 = arith.addf %904, %777 : vector<8x2xf32>
    %906 = vector.shape_cast %780 : vector<1x2xi1> to vector<1x2xi1>
    %907 = vector.broadcast %906 : vector<1x2xi1> to vector<8x2xi1>
    %908 = arith.select %907, %905, %764 : vector<8x2xi1>, vector<8x2xf32>
    %c5_295 = arith.constant 5 : index
    %c0_296 = arith.constant 0 : index
    %909 = vector.load %arg10[%c5_295, %c0_296] : memref<8x2xi32, #tpu.memory_space<vmem>>, vector<1x2xi32>
    tpu.vector_store %arg10[%c5_295, %c0_296], %903 {strides = array<i32>} : memref<8x2xi32, #tpu.memory_space<vmem>>, vector<1x2xi32>,
    %c6_i32_297 = arith.constant 6 : i32
    %910 = vector.broadcast %c6_i32_297 : i32 to vector<1x2xi32>
    %911 = arith.cmpi eq, %45, %910 : vector<1x2xi32>
    %912 = arith.extui %911 : vector<1x2xi1> to vector<1x2xi32>
    %913 = arith.sitofp %912 : vector<1x2xi32> to vector<1x2xf32>
    %914 = vector.broadcast %913 : vector<1x2xf32> to vector<8x2xf32>
    %915 = arith.mulf %785, %914 : vector<8x2xf32>
    %916 = arith.addf %772, %915 : vector<8x2xf32>
    %c6 = arith.constant 6 : index
    %c0_298 = arith.constant 0 : index
    %c0_299 = arith.constant 0 : index
    %917 = vector.load %arg1[%c6, %c0_298, %c0_299] : memref<8x2x32xf32, #tpu.memory_space<vmem>>, vector<1x2x32xf32>
    %918 = vector.shape_cast %917 : vector<1x2x32xf32> to vector<2x32xf32>
    %cst_300 = arith.constant dense<0.000000e+00> : vector<8x2xf32>
    %919 = tpu.matmul %0, %918, %cst_300 {dimension_numbers = #tpu.dot_dimension_numbers<[1], [1], [0], [0], [0, 0, 1, 0], [], []>} : vector<8x32xf32>, vector<2x32xf32>, vector<8x2xf32> -> vector<8x2xf32>
    %920 = vector.broadcast %1 : vector<8x1xf32> to vector<8x2xf32>
    %921 = arith.addf %919, %920 : vector<8x2xf32>
    %c6_301 = arith.constant 6 : index
    %c0_302 = arith.constant 0 : index
    %922 = vector.load %arg3[%c6_301, %c0_302] : memref<8x2xf32, #tpu.memory_space<vmem>>, vector<1x2xf32>
    %cst_303 = arith.constant 0.000000e+00 : f32
    %923 = vector.broadcast %cst_303 : f32 to vector<1x2xf32>
    %924 = arith.cmpf ogt, %922, %923 : vector<1x2xf32>
    %c6_304 = arith.constant 6 : index
    %c0_305 = arith.constant 0 : index
    %925 = vector.load %arg2[%c6_304, %c0_305] : memref<8x2xi32, #tpu.memory_space<vmem>>, vector<1x2xi32>
    %926 = vector.broadcast %925 : vector<1x2xi32> to vector<8x2xi32>
    %927 = arith.cmpi eq, %37, %926 : vector<8x2xi32>
    %928 = arith.extui %927 : vector<8x2xi1> to vector<8x2xi32>
    %929 = arith.sitofp %928 : vector<8x2xi32> to vector<8x2xf32>
    %cst_306 = arith.constant dense<0xFF800000> : vector<2xf32>
    %930 = vector.multi_reduction <maximumf>, %798, %cst_306 [0] : vector<8x2xf32> to vector<2xf32>
    %931 = vector.shape_cast %930 : vector<2xf32> to vector<1x2xf32>
    %932 = vector.broadcast %931 : vector<1x2xf32> to vector<8x2xf32>
    %933 = arith.subf %798, %932 : vector<8x2xf32>
    %934 = math.exp %933 : vector<8x2xf32>
    %cst_307 = arith.constant dense<0.000000e+00> : vector<8x2xf32>
    %935 = tpu.matmul %3, %934, %cst_307 {dimension_numbers = #tpu.dot_dimension_numbers<[1], [0], [0], [1], [0, 0, 1, 1], [], []>} : vector<8x8xf32>, vector<8x2xf32>, vector<8x2xf32> -> vector<8x2xf32>
    %936 = math.log %935 : vector<8x2xf32>
    %937 = vector.broadcast %931 : vector<1x2xf32> to vector<8x2xf32>
    %938 = arith.addf %937, %936 : vector<8x2xf32>
    %939 = arith.addf %938, %921 : vector<8x2xf32>
    %940 = vector.shape_cast %924 : vector<1x2xi1> to vector<1x2xi1>
    %941 = vector.broadcast %940 : vector<1x2xi1> to vector<8x2xi1>
    %942 = arith.select %941, %939, %798 : vector<8x2xi1>, vector<8x2xf32>
    %cst_308 = arith.constant dense<0.000000e+00> : vector<8x2xf32>
    %943 = tpu.matmul %2, %785, %cst_308 {dimension_numbers = #tpu.dot_dimension_numbers<[1], [0], [0], [1], [0, 0, 1, 1], [], []>} : vector<8x8xf32>, vector<8x2xf32>, vector<8x2xf32> -> vector<8x2xf32>
    %944 = arith.addf %921, %943 : vector<8x2xf32>
    %945 = arith.mulf %929, %944 : vector<8x2xf32>
    %cst_309 = arith.constant dense<0.000000e+00> : vector<2xf32>
    %946 = vector.multi_reduction <add>, %945, %cst_309 [0] : vector<8x2xf32> to vector<2xf32>
    %947 = vector.shape_cast %946 : vector<2xf32> to vector<1x2xf32>
    %cst_310 = arith.constant 0.000000e+00 : f32
    %948 = vector.broadcast %cst_310 : f32 to vector<1x2xf32>
    %949 = arith.select %924, %947, %948 : vector<1x2xi1>, vector<1x2xf32>
    %950 = arith.addf %806, %949 : vector<1x2xf32>
    %c0_i32_311 = arith.constant 0 : i32
    %951 = vector.broadcast %c0_i32_311 : i32 to vector<1x2xi32>
    %952 = arith.addf %908, %8 : vector<8x2xf32>
    %cst_312 = arith.constant dense<0xFF800000> : vector<2xf32>
    %953 = vector.multi_reduction <maximumf>, %952, %cst_312 [0] : vector<8x2xf32> to vector<2xf32>
    %954 = vector.shape_cast %953 : vector<2xf32> to vector<1x2xf32>
    %955 = vector.broadcast %954 : vector<1x2xf32> to vector<8x2xf32>
    %956 = arith.cmpf oge, %952, %955 : vector<8x2xf32>
    %c8_i32_313 = arith.constant 8 : i32
    %957 = vector.broadcast %c8_i32_313 : i32 to vector<8x2xi32>
    %958 = arith.select %956, %37, %957 : vector<8x2xi1>, vector<8x2xi32>
    %cst_314 = arith.constant dense<2147483647> : vector<2xi32>
    %959 = vector.multi_reduction <minsi>, %958, %cst_314 [0] : vector<8x2xi32> to vector<2xi32>
    %960 = vector.shape_cast %959 : vector<2xi32> to vector<1x2xi32>
    %c0_i32_315 = arith.constant 0 : i32
    %961 = vector.broadcast %c0_i32_315 : i32 to vector<1x2xi32>
    %962 = arith.shli %960, %961 : vector<1x2xi32>
    %963 = arith.ori %951, %962 : vector<1x2xi32>
    %964 = arith.addf %908, %12 : vector<8x2xf32>
    %cst_316 = arith.constant dense<0xFF800000> : vector<2xf32>
    %965 = vector.multi_reduction <maximumf>, %964, %cst_316 [0] : vector<8x2xf32> to vector<2xf32>
    %966 = vector.shape_cast %965 : vector<2xf32> to vector<1x2xf32>
    %967 = vector.broadcast %966 : vector<1x2xf32> to vector<8x2xf32>
    %968 = arith.cmpf oge, %964, %967 : vector<8x2xf32>
    %c8_i32_317 = arith.constant 8 : i32
    %969 = vector.broadcast %c8_i32_317 : i32 to vector<8x2xi32>
    %970 = arith.select %968, %37, %969 : vector<8x2xi1>, vector<8x2xi32>
    %cst_318 = arith.constant dense<2147483647> : vector<2xi32>
    %971 = vector.multi_reduction <minsi>, %970, %cst_318 [0] : vector<8x2xi32> to vector<2xi32>
    %972 = vector.shape_cast %971 : vector<2xi32> to vector<1x2xi32>
    %c4_i32_319 = arith.constant 4 : i32
    %973 = vector.broadcast %c4_i32_319 : i32 to vector<1x2xi32>
    %974 = arith.shli %972, %973 : vector<1x2xi32>
    %975 = arith.ori %963, %974 : vector<1x2xi32>
    %976 = arith.addf %908, %16 : vector<8x2xf32>
    %cst_320 = arith.constant dense<0xFF800000> : vector<2xf32>
    %977 = vector.multi_reduction <maximumf>, %976, %cst_320 [0] : vector<8x2xf32> to vector<2xf32>
    %978 = vector.shape_cast %977 : vector<2xf32> to vector<1x2xf32>
    %979 = vector.broadcast %978 : vector<1x2xf32> to vector<8x2xf32>
    %980 = arith.cmpf oge, %976, %979 : vector<8x2xf32>
    %c8_i32_321 = arith.constant 8 : i32
    %981 = vector.broadcast %c8_i32_321 : i32 to vector<8x2xi32>
    %982 = arith.select %980, %37, %981 : vector<8x2xi1>, vector<8x2xi32>
    %cst_322 = arith.constant dense<2147483647> : vector<2xi32>
    %983 = vector.multi_reduction <minsi>, %982, %cst_322 [0] : vector<8x2xi32> to vector<2xi32>
    %984 = vector.shape_cast %983 : vector<2xi32> to vector<1x2xi32>
    %c8_i32_323 = arith.constant 8 : i32
    %985 = vector.broadcast %c8_i32_323 : i32 to vector<1x2xi32>
    %986 = arith.shli %984, %985 : vector<1x2xi32>
    %987 = arith.ori %975, %986 : vector<1x2xi32>
    %988 = arith.addf %908, %20 : vector<8x2xf32>
    %cst_324 = arith.constant dense<0xFF800000> : vector<2xf32>
    %989 = vector.multi_reduction <maximumf>, %988, %cst_324 [0] : vector<8x2xf32> to vector<2xf32>
    %990 = vector.shape_cast %989 : vector<2xf32> to vector<1x2xf32>
    %991 = vector.broadcast %990 : vector<1x2xf32> to vector<8x2xf32>
    %992 = arith.cmpf oge, %988, %991 : vector<8x2xf32>
    %c8_i32_325 = arith.constant 8 : i32
    %993 = vector.broadcast %c8_i32_325 : i32 to vector<8x2xi32>
    %994 = arith.select %992, %37, %993 : vector<8x2xi1>, vector<8x2xi32>
    %cst_326 = arith.constant dense<2147483647> : vector<2xi32>
    %995 = vector.multi_reduction <minsi>, %994, %cst_326 [0] : vector<8x2xi32> to vector<2xi32>
    %996 = vector.shape_cast %995 : vector<2xi32> to vector<1x2xi32>
    %c12_i32_327 = arith.constant 12 : i32
    %997 = vector.broadcast %c12_i32_327 : i32 to vector<1x2xi32>
    %998 = arith.shli %996, %997 : vector<1x2xi32>
    %999 = arith.ori %987, %998 : vector<1x2xi32>
    %1000 = arith.addf %908, %24 : vector<8x2xf32>
    %cst_328 = arith.constant dense<0xFF800000> : vector<2xf32>
    %1001 = vector.multi_reduction <maximumf>, %1000, %cst_328 [0] : vector<8x2xf32> to vector<2xf32>
    %1002 = vector.shape_cast %1001 : vector<2xf32> to vector<1x2xf32>
    %1003 = vector.broadcast %1002 : vector<1x2xf32> to vector<8x2xf32>
    %1004 = arith.cmpf oge, %1000, %1003 : vector<8x2xf32>
    %c8_i32_329 = arith.constant 8 : i32
    %1005 = vector.broadcast %c8_i32_329 : i32 to vector<8x2xi32>
    %1006 = arith.select %1004, %37, %1005 : vector<8x2xi1>, vector<8x2xi32>
    %cst_330 = arith.constant dense<2147483647> : vector<2xi32>
    %1007 = vector.multi_reduction <minsi>, %1006, %cst_330 [0] : vector<8x2xi32> to vector<2xi32>
    %1008 = vector.shape_cast %1007 : vector<2xi32> to vector<1x2xi32>
    %c16_i32_331 = arith.constant 16 : i32
    %1009 = vector.broadcast %c16_i32_331 : i32 to vector<1x2xi32>
    %1010 = arith.shli %1008, %1009 : vector<1x2xi32>
    %1011 = arith.ori %999, %1010 : vector<1x2xi32>
    %1012 = arith.addf %908, %28 : vector<8x2xf32>
    %cst_332 = arith.constant dense<0xFF800000> : vector<2xf32>
    %1013 = vector.multi_reduction <maximumf>, %1012, %cst_332 [0] : vector<8x2xf32> to vector<2xf32>
    %1014 = vector.shape_cast %1013 : vector<2xf32> to vector<1x2xf32>
    %1015 = vector.broadcast %1014 : vector<1x2xf32> to vector<8x2xf32>
    %1016 = arith.cmpf oge, %1012, %1015 : vector<8x2xf32>
    %c8_i32_333 = arith.constant 8 : i32
    %1017 = vector.broadcast %c8_i32_333 : i32 to vector<8x2xi32>
    %1018 = arith.select %1016, %37, %1017 : vector<8x2xi1>, vector<8x2xi32>
    %cst_334 = arith.constant dense<2147483647> : vector<2xi32>
    %1019 = vector.multi_reduction <minsi>, %1018, %cst_334 [0] : vector<8x2xi32> to vector<2xi32>
    %1020 = vector.shape_cast %1019 : vector<2xi32> to vector<1x2xi32>
    %c20_i32_335 = arith.constant 20 : i32
    %1021 = vector.broadcast %c20_i32_335 : i32 to vector<1x2xi32>
    %1022 = arith.shli %1020, %1021 : vector<1x2xi32>
    %1023 = arith.ori %1011, %1022 : vector<1x2xi32>
    %1024 = arith.addf %908, %32 : vector<8x2xf32>
    %cst_336 = arith.constant dense<0xFF800000> : vector<2xf32>
    %1025 = vector.multi_reduction <maximumf>, %1024, %cst_336 [0] : vector<8x2xf32> to vector<2xf32>
    %1026 = vector.shape_cast %1025 : vector<2xf32> to vector<1x2xf32>
    %1027 = vector.broadcast %1026 : vector<1x2xf32> to vector<8x2xf32>
    %1028 = arith.cmpf oge, %1024, %1027 : vector<8x2xf32>
    %c8_i32_337 = arith.constant 8 : i32
    %1029 = vector.broadcast %c8_i32_337 : i32 to vector<8x2xi32>
    %1030 = arith.select %1028, %37, %1029 : vector<8x2xi1>, vector<8x2xi32>
    %cst_338 = arith.constant dense<2147483647> : vector<2xi32>
    %1031 = vector.multi_reduction <minsi>, %1030, %cst_338 [0] : vector<8x2xi32> to vector<2xi32>
    %1032 = vector.shape_cast %1031 : vector<2xi32> to vector<1x2xi32>
    %c24_i32_339 = arith.constant 24 : i32
    %1033 = vector.broadcast %c24_i32_339 : i32 to vector<1x2xi32>
    %1034 = arith.shli %1032, %1033 : vector<1x2xi32>
    %1035 = arith.ori %1023, %1034 : vector<1x2xi32>
    %1036 = arith.addf %908, %36 : vector<8x2xf32>
    %cst_340 = arith.constant dense<0xFF800000> : vector<2xf32>
    %1037 = vector.multi_reduction <maximumf>, %1036, %cst_340 [0] : vector<8x2xf32> to vector<2xf32>
    %1038 = vector.shape_cast %1037 : vector<2xf32> to vector<1x2xf32>
    %1039 = vector.broadcast %1038 : vector<1x2xf32> to vector<8x2xf32>
    %1040 = arith.cmpf oge, %1036, %1039 : vector<8x2xf32>
    %c8_i32_341 = arith.constant 8 : i32
    %1041 = vector.broadcast %c8_i32_341 : i32 to vector<8x2xi32>
    %1042 = arith.select %1040, %37, %1041 : vector<8x2xi1>, vector<8x2xi32>
    %cst_342 = arith.constant dense<2147483647> : vector<2xi32>
    %1043 = vector.multi_reduction <minsi>, %1042, %cst_342 [0] : vector<8x2xi32> to vector<2xi32>
    %1044 = vector.shape_cast %1043 : vector<2xi32> to vector<1x2xi32>
    %c28_i32_343 = arith.constant 28 : i32
    %1045 = vector.broadcast %c28_i32_343 : i32 to vector<1x2xi32>
    %1046 = arith.shli %1044, %1045 : vector<1x2xi32>
    %1047 = arith.ori %1035, %1046 : vector<1x2xi32>
    %1048 = tpu.concatenate %954, %966, %978, %990, %1002, %1014, %1026, %1038 in 0 : vector<1x2xf32>, vector<1x2xf32>, vector<1x2xf32>, vector<1x2xf32>, vector<1x2xf32>, vector<1x2xf32>, vector<1x2xf32>, vector<1x2xf32> -> vector<8x2xf32>
    %1049 = arith.addf %1048, %921 : vector<8x2xf32>
    %1050 = vector.shape_cast %924 : vector<1x2xi1> to vector<1x2xi1>
    %1051 = vector.broadcast %1050 : vector<1x2xi1> to vector<8x2xi1>
    %1052 = arith.select %1051, %1049, %908 : vector<8x2xi1>, vector<8x2xf32>
    %c6_344 = arith.constant 6 : index
    %c0_345 = arith.constant 0 : index
    %1053 = vector.load %arg10[%c6_344, %c0_345] : memref<8x2xi32, #tpu.memory_space<vmem>>, vector<1x2xi32>
    tpu.vector_store %arg10[%c6_344, %c0_345], %1047 {strides = array<i32>} : memref<8x2xi32, #tpu.memory_space<vmem>>, vector<1x2xi32>,
    %c7_i32 = arith.constant 7 : i32
    %1054 = vector.broadcast %c7_i32 : i32 to vector<1x2xi32>
    %1055 = arith.cmpi eq, %45, %1054 : vector<1x2xi32>
    %1056 = arith.extui %1055 : vector<1x2xi1> to vector<1x2xi32>
    %1057 = arith.sitofp %1056 : vector<1x2xi32> to vector<1x2xf32>
    %1058 = vector.broadcast %1057 : vector<1x2xf32> to vector<8x2xf32>
    %1059 = arith.mulf %929, %1058 : vector<8x2xf32>
    %1060 = arith.addf %916, %1059 : vector<8x2xf32>
    %c7 = arith.constant 7 : index
    %c0_346 = arith.constant 0 : index
    %c0_347 = arith.constant 0 : index
    %1061 = vector.load %arg1[%c7, %c0_346, %c0_347] : memref<8x2x32xf32, #tpu.memory_space<vmem>>, vector<1x2x32xf32>
    %1062 = vector.shape_cast %1061 : vector<1x2x32xf32> to vector<2x32xf32>
    %cst_348 = arith.constant dense<0.000000e+00> : vector<8x2xf32>
    %1063 = tpu.matmul %0, %1062, %cst_348 {dimension_numbers = #tpu.dot_dimension_numbers<[1], [1], [0], [0], [0, 0, 1, 0], [], []>} : vector<8x32xf32>, vector<2x32xf32>, vector<8x2xf32> -> vector<8x2xf32>
    %1064 = vector.broadcast %1 : vector<8x1xf32> to vector<8x2xf32>
    %1065 = arith.addf %1063, %1064 : vector<8x2xf32>
    %c7_349 = arith.constant 7 : index
    %c0_350 = arith.constant 0 : index
    %1066 = vector.load %arg3[%c7_349, %c0_350] : memref<8x2xf32, #tpu.memory_space<vmem>>, vector<1x2xf32>
    %cst_351 = arith.constant 0.000000e+00 : f32
    %1067 = vector.broadcast %cst_351 : f32 to vector<1x2xf32>
    %1068 = arith.cmpf ogt, %1066, %1067 : vector<1x2xf32>
    %c7_352 = arith.constant 7 : index
    %c0_353 = arith.constant 0 : index
    %1069 = vector.load %arg2[%c7_352, %c0_353] : memref<8x2xi32, #tpu.memory_space<vmem>>, vector<1x2xi32>
    %1070 = vector.broadcast %1069 : vector<1x2xi32> to vector<8x2xi32>
    %1071 = arith.cmpi eq, %37, %1070 : vector<8x2xi32>
    %1072 = arith.extui %1071 : vector<8x2xi1> to vector<8x2xi32>
    %1073 = arith.sitofp %1072 : vector<8x2xi32> to vector<8x2xf32>
    %cst_354 = arith.constant dense<0xFF800000> : vector<2xf32>
    %1074 = vector.multi_reduction <maximumf>, %942, %cst_354 [0] : vector<8x2xf32> to vector<2xf32>
    %1075 = vector.shape_cast %1074 : vector<2xf32> to vector<1x2xf32>
    %1076 = vector.broadcast %1075 : vector<1x2xf32> to vector<8x2xf32>
    %1077 = arith.subf %942, %1076 : vector<8x2xf32>
    %1078 = math.exp %1077 : vector<8x2xf32>
    %cst_355 = arith.constant dense<0.000000e+00> : vector<8x2xf32>
    %1079 = tpu.matmul %3, %1078, %cst_355 {dimension_numbers = #tpu.dot_dimension_numbers<[1], [0], [0], [1], [0, 0, 1, 1], [], []>} : vector<8x8xf32>, vector<8x2xf32>, vector<8x2xf32> -> vector<8x2xf32>
    %1080 = math.log %1079 : vector<8x2xf32>
    %1081 = vector.broadcast %1075 : vector<1x2xf32> to vector<8x2xf32>
    %1082 = arith.addf %1081, %1080 : vector<8x2xf32>
    %1083 = arith.addf %1082, %1065 : vector<8x2xf32>
    %1084 = vector.shape_cast %1068 : vector<1x2xi1> to vector<1x2xi1>
    %1085 = vector.broadcast %1084 : vector<1x2xi1> to vector<8x2xi1>
    %1086 = arith.select %1085, %1083, %942 : vector<8x2xi1>, vector<8x2xf32>
    %cst_356 = arith.constant dense<0.000000e+00> : vector<8x2xf32>
    %1087 = tpu.matmul %2, %929, %cst_356 {dimension_numbers = #tpu.dot_dimension_numbers<[1], [0], [0], [1], [0, 0, 1, 1], [], []>} : vector<8x8xf32>, vector<8x2xf32>, vector<8x2xf32> -> vector<8x2xf32>
    %1088 = arith.addf %1065, %1087 : vector<8x2xf32>
    %1089 = arith.mulf %1073, %1088 : vector<8x2xf32>
    %cst_357 = arith.constant dense<0.000000e+00> : vector<2xf32>
    %1090 = vector.multi_reduction <add>, %1089, %cst_357 [0] : vector<8x2xf32> to vector<2xf32>
    %1091 = vector.shape_cast %1090 : vector<2xf32> to vector<1x2xf32>
    %cst_358 = arith.constant 0.000000e+00 : f32
    %1092 = vector.broadcast %cst_358 : f32 to vector<1x2xf32>
    %1093 = arith.select %1068, %1091, %1092 : vector<1x2xi1>, vector<1x2xf32>
    %1094 = arith.addf %950, %1093 : vector<1x2xf32>
    %c0_i32_359 = arith.constant 0 : i32
    %1095 = vector.broadcast %c0_i32_359 : i32 to vector<1x2xi32>
    %1096 = arith.addf %1052, %8 : vector<8x2xf32>
    %cst_360 = arith.constant dense<0xFF800000> : vector<2xf32>
    %1097 = vector.multi_reduction <maximumf>, %1096, %cst_360 [0] : vector<8x2xf32> to vector<2xf32>
    %1098 = vector.shape_cast %1097 : vector<2xf32> to vector<1x2xf32>
    %1099 = vector.broadcast %1098 : vector<1x2xf32> to vector<8x2xf32>
    %1100 = arith.cmpf oge, %1096, %1099 : vector<8x2xf32>
    %c8_i32_361 = arith.constant 8 : i32
    %1101 = vector.broadcast %c8_i32_361 : i32 to vector<8x2xi32>
    %1102 = arith.select %1100, %37, %1101 : vector<8x2xi1>, vector<8x2xi32>
    %cst_362 = arith.constant dense<2147483647> : vector<2xi32>
    %1103 = vector.multi_reduction <minsi>, %1102, %cst_362 [0] : vector<8x2xi32> to vector<2xi32>
    %1104 = vector.shape_cast %1103 : vector<2xi32> to vector<1x2xi32>
    %c0_i32_363 = arith.constant 0 : i32
    %1105 = vector.broadcast %c0_i32_363 : i32 to vector<1x2xi32>
    %1106 = arith.shli %1104, %1105 : vector<1x2xi32>
    %1107 = arith.ori %1095, %1106 : vector<1x2xi32>
    %1108 = arith.addf %1052, %12 : vector<8x2xf32>
    %cst_364 = arith.constant dense<0xFF800000> : vector<2xf32>
    %1109 = vector.multi_reduction <maximumf>, %1108, %cst_364 [0] : vector<8x2xf32> to vector<2xf32>
    %1110 = vector.shape_cast %1109 : vector<2xf32> to vector<1x2xf32>
    %1111 = vector.broadcast %1110 : vector<1x2xf32> to vector<8x2xf32>
    %1112 = arith.cmpf oge, %1108, %1111 : vector<8x2xf32>
    %c8_i32_365 = arith.constant 8 : i32
    %1113 = vector.broadcast %c8_i32_365 : i32 to vector<8x2xi32>
    %1114 = arith.select %1112, %37, %1113 : vector<8x2xi1>, vector<8x2xi32>
    %cst_366 = arith.constant dense<2147483647> : vector<2xi32>
    %1115 = vector.multi_reduction <minsi>, %1114, %cst_366 [0] : vector<8x2xi32> to vector<2xi32>
    %1116 = vector.shape_cast %1115 : vector<2xi32> to vector<1x2xi32>
    %c4_i32_367 = arith.constant 4 : i32
    %1117 = vector.broadcast %c4_i32_367 : i32 to vector<1x2xi32>
    %1118 = arith.shli %1116, %1117 : vector<1x2xi32>
    %1119 = arith.ori %1107, %1118 : vector<1x2xi32>
    %1120 = arith.addf %1052, %16 : vector<8x2xf32>
    %cst_368 = arith.constant dense<0xFF800000> : vector<2xf32>
    %1121 = vector.multi_reduction <maximumf>, %1120, %cst_368 [0] : vector<8x2xf32> to vector<2xf32>
    %1122 = vector.shape_cast %1121 : vector<2xf32> to vector<1x2xf32>
    %1123 = vector.broadcast %1122 : vector<1x2xf32> to vector<8x2xf32>
    %1124 = arith.cmpf oge, %1120, %1123 : vector<8x2xf32>
    %c8_i32_369 = arith.constant 8 : i32
    %1125 = vector.broadcast %c8_i32_369 : i32 to vector<8x2xi32>
    %1126 = arith.select %1124, %37, %1125 : vector<8x2xi1>, vector<8x2xi32>
    %cst_370 = arith.constant dense<2147483647> : vector<2xi32>
    %1127 = vector.multi_reduction <minsi>, %1126, %cst_370 [0] : vector<8x2xi32> to vector<2xi32>
    %1128 = vector.shape_cast %1127 : vector<2xi32> to vector<1x2xi32>
    %c8_i32_371 = arith.constant 8 : i32
    %1129 = vector.broadcast %c8_i32_371 : i32 to vector<1x2xi32>
    %1130 = arith.shli %1128, %1129 : vector<1x2xi32>
    %1131 = arith.ori %1119, %1130 : vector<1x2xi32>
    %1132 = arith.addf %1052, %20 : vector<8x2xf32>
    %cst_372 = arith.constant dense<0xFF800000> : vector<2xf32>
    %1133 = vector.multi_reduction <maximumf>, %1132, %cst_372 [0] : vector<8x2xf32> to vector<2xf32>
    %1134 = vector.shape_cast %1133 : vector<2xf32> to vector<1x2xf32>
    %1135 = vector.broadcast %1134 : vector<1x2xf32> to vector<8x2xf32>
    %1136 = arith.cmpf oge, %1132, %1135 : vector<8x2xf32>
    %c8_i32_373 = arith.constant 8 : i32
    %1137 = vector.broadcast %c8_i32_373 : i32 to vector<8x2xi32>
    %1138 = arith.select %1136, %37, %1137 : vector<8x2xi1>, vector<8x2xi32>
    %cst_374 = arith.constant dense<2147483647> : vector<2xi32>
    %1139 = vector.multi_reduction <minsi>, %1138, %cst_374 [0] : vector<8x2xi32> to vector<2xi32>
    %1140 = vector.shape_cast %1139 : vector<2xi32> to vector<1x2xi32>
    %c12_i32_375 = arith.constant 12 : i32
    %1141 = vector.broadcast %c12_i32_375 : i32 to vector<1x2xi32>
    %1142 = arith.shli %1140, %1141 : vector<1x2xi32>
    %1143 = arith.ori %1131, %1142 : vector<1x2xi32>
    %1144 = arith.addf %1052, %24 : vector<8x2xf32>
    %cst_376 = arith.constant dense<0xFF800000> : vector<2xf32>
    %1145 = vector.multi_reduction <maximumf>, %1144, %cst_376 [0] : vector<8x2xf32> to vector<2xf32>
    %1146 = vector.shape_cast %1145 : vector<2xf32> to vector<1x2xf32>
    %1147 = vector.broadcast %1146 : vector<1x2xf32> to vector<8x2xf32>
    %1148 = arith.cmpf oge, %1144, %1147 : vector<8x2xf32>
    %c8_i32_377 = arith.constant 8 : i32
    %1149 = vector.broadcast %c8_i32_377 : i32 to vector<8x2xi32>
    %1150 = arith.select %1148, %37, %1149 : vector<8x2xi1>, vector<8x2xi32>
    %cst_378 = arith.constant dense<2147483647> : vector<2xi32>
    %1151 = vector.multi_reduction <minsi>, %1150, %cst_378 [0] : vector<8x2xi32> to vector<2xi32>
    %1152 = vector.shape_cast %1151 : vector<2xi32> to vector<1x2xi32>
    %c16_i32_379 = arith.constant 16 : i32
    %1153 = vector.broadcast %c16_i32_379 : i32 to vector<1x2xi32>
    %1154 = arith.shli %1152, %1153 : vector<1x2xi32>
    %1155 = arith.ori %1143, %1154 : vector<1x2xi32>
    %1156 = arith.addf %1052, %28 : vector<8x2xf32>
    %cst_380 = arith.constant dense<0xFF800000> : vector<2xf32>
    %1157 = vector.multi_reduction <maximumf>, %1156, %cst_380 [0] : vector<8x2xf32> to vector<2xf32>
    %1158 = vector.shape_cast %1157 : vector<2xf32> to vector<1x2xf32>
    %1159 = vector.broadcast %1158 : vector<1x2xf32> to vector<8x2xf32>
    %1160 = arith.cmpf oge, %1156, %1159 : vector<8x2xf32>
    %c8_i32_381 = arith.constant 8 : i32
    %1161 = vector.broadcast %c8_i32_381 : i32 to vector<8x2xi32>
    %1162 = arith.select %1160, %37, %1161 : vector<8x2xi1>, vector<8x2xi32>
    %cst_382 = arith.constant dense<2147483647> : vector<2xi32>
    %1163 = vector.multi_reduction <minsi>, %1162, %cst_382 [0] : vector<8x2xi32> to vector<2xi32>
    %1164 = vector.shape_cast %1163 : vector<2xi32> to vector<1x2xi32>
    %c20_i32_383 = arith.constant 20 : i32
    %1165 = vector.broadcast %c20_i32_383 : i32 to vector<1x2xi32>
    %1166 = arith.shli %1164, %1165 : vector<1x2xi32>
    %1167 = arith.ori %1155, %1166 : vector<1x2xi32>
    %1168 = arith.addf %1052, %32 : vector<8x2xf32>
    %cst_384 = arith.constant dense<0xFF800000> : vector<2xf32>
    %1169 = vector.multi_reduction <maximumf>, %1168, %cst_384 [0] : vector<8x2xf32> to vector<2xf32>
    %1170 = vector.shape_cast %1169 : vector<2xf32> to vector<1x2xf32>
    %1171 = vector.broadcast %1170 : vector<1x2xf32> to vector<8x2xf32>
    %1172 = arith.cmpf oge, %1168, %1171 : vector<8x2xf32>
    %c8_i32_385 = arith.constant 8 : i32
    %1173 = vector.broadcast %c8_i32_385 : i32 to vector<8x2xi32>
    %1174 = arith.select %1172, %37, %1173 : vector<8x2xi1>, vector<8x2xi32>
    %cst_386 = arith.constant dense<2147483647> : vector<2xi32>
    %1175 = vector.multi_reduction <minsi>, %1174, %cst_386 [0] : vector<8x2xi32> to vector<2xi32>
    %1176 = vector.shape_cast %1175 : vector<2xi32> to vector<1x2xi32>
    %c24_i32_387 = arith.constant 24 : i32
    %1177 = vector.broadcast %c24_i32_387 : i32 to vector<1x2xi32>
    %1178 = arith.shli %1176, %1177 : vector<1x2xi32>
    %1179 = arith.ori %1167, %1178 : vector<1x2xi32>
    %1180 = arith.addf %1052, %36 : vector<8x2xf32>
    %cst_388 = arith.constant dense<0xFF800000> : vector<2xf32>
    %1181 = vector.multi_reduction <maximumf>, %1180, %cst_388 [0] : vector<8x2xf32> to vector<2xf32>
    %1182 = vector.shape_cast %1181 : vector<2xf32> to vector<1x2xf32>
    %1183 = vector.broadcast %1182 : vector<1x2xf32> to vector<8x2xf32>
    %1184 = arith.cmpf oge, %1180, %1183 : vector<8x2xf32>
    %c8_i32_389 = arith.constant 8 : i32
    %1185 = vector.broadcast %c8_i32_389 : i32 to vector<8x2xi32>
    %1186 = arith.select %1184, %37, %1185 : vector<8x2xi1>, vector<8x2xi32>
    %cst_390 = arith.constant dense<2147483647> : vector<2xi32>
    %1187 = vector.multi_reduction <minsi>, %1186, %cst_390 [0] : vector<8x2xi32> to vector<2xi32>
    %1188 = vector.shape_cast %1187 : vector<2xi32> to vector<1x2xi32>
    %c28_i32_391 = arith.constant 28 : i32
    %1189 = vector.broadcast %c28_i32_391 : i32 to vector<1x2xi32>
    %1190 = arith.shli %1188, %1189 : vector<1x2xi32>
    %1191 = arith.ori %1179, %1190 : vector<1x2xi32>
    %1192 = tpu.concatenate %1098, %1110, %1122, %1134, %1146, %1158, %1170, %1182 in 0 : vector<1x2xf32>, vector<1x2xf32>, vector<1x2xf32>, vector<1x2xf32>, vector<1x2xf32>, vector<1x2xf32>, vector<1x2xf32>, vector<1x2xf32> -> vector<8x2xf32>
    %1193 = arith.addf %1192, %1065 : vector<8x2xf32>
    %1194 = vector.shape_cast %1068 : vector<1x2xi1> to vector<1x2xi1>
    %1195 = vector.broadcast %1194 : vector<1x2xi1> to vector<8x2xi1>
    %1196 = arith.select %1195, %1193, %1052 : vector<8x2xi1>, vector<8x2xf32>
    %c7_392 = arith.constant 7 : index
    %c0_393 = arith.constant 0 : index
    %1197 = vector.load %arg10[%c7_392, %c0_393] : memref<8x2xi32, #tpu.memory_space<vmem>>, vector<1x2xi32>
    tpu.vector_store %arg10[%c7_392, %c0_393], %1191 {strides = array<i32>} : memref<8x2xi32, #tpu.memory_space<vmem>>, vector<1x2xi32>,
    %c8_i32_394 = arith.constant 8 : i32
    %1198 = vector.broadcast %c8_i32_394 : i32 to vector<1x2xi32>
    %1199 = arith.cmpi eq, %45, %1198 : vector<1x2xi32>
    %1200 = arith.extui %1199 : vector<1x2xi1> to vector<1x2xi32>
    %1201 = arith.sitofp %1200 : vector<1x2xi32> to vector<1x2xf32>
    %1202 = vector.broadcast %1201 : vector<1x2xf32> to vector<8x2xf32>
    %1203 = arith.mulf %1073, %1202 : vector<8x2xf32>
    %1204 = arith.addf %1060, %1203 : vector<8x2xf32>
    %c0_i32_395 = arith.constant 0 : i32
    %1205 = vector.broadcast %c0_i32_395 : i32 to vector<1x2xi32>
    %1206 = arith.cmpi eq, %45, %1205 : vector<1x2xi32>
    %1207 = vector.shape_cast %1206 : vector<1x2xi1> to vector<1x2xi1>
    %1208 = vector.broadcast %1207 : vector<1x2xi1> to vector<8x2xi1>
    %1209 = arith.select %1208, %41, %1204 : vector<8x2xi1>, vector<8x2xf32>
    %1210 = arith.mulf %36, %1209 : vector<8x2xf32>
    %cst_396 = arith.constant dense<0.000000e+00> : vector<2xf32>
    %1211 = vector.multi_reduction <add>, %1210, %cst_396 [0] : vector<8x2xf32> to vector<2xf32>
    %1212 = vector.shape_cast %1211 : vector<2xf32> to vector<1x2xf32>
    %1213 = arith.addf %1094, %1212 : vector<1x2xf32>
    %1214 = arith.addf %1086, %36 : vector<8x2xf32>
    %cst_397 = arith.constant dense<0xFF800000> : vector<2xf32>
    %1215 = vector.multi_reduction <maximumf>, %1214, %cst_397 [0] : vector<8x2xf32> to vector<2xf32>
    %1216 = vector.shape_cast %1215 : vector<2xf32> to vector<1x2xf32>
    %1217 = vector.broadcast %1216 : vector<1x2xf32> to vector<8x2xf32>
    %1218 = arith.subf %1214, %1217 : vector<8x2xf32>
    %1219 = math.exp %1218 : vector<8x2xf32>
    %cst_398 = arith.constant dense<0.000000e+00> : vector<2xf32>
    %1220 = vector.multi_reduction <add>, %1219, %cst_398 [0] : vector<8x2xf32> to vector<2xf32>
    %1221 = vector.shape_cast %1220 : vector<2xf32> to vector<1x2xf32>
    %1222 = math.log %1221 : vector<1x2xf32>
    %1223 = arith.addf %1216, %1222 : vector<1x2xf32>
    %1224 = tpu.concatenate %1223, %1213 in 0 : vector<1x2xf32>, vector<1x2xf32> -> vector<2x2xf32>
    %c0_399 = arith.constant 0 : index
    %c0_400 = arith.constant 0 : index
    %1225 = vector.load %arg8[%c0_399, %c0_400] : memref<2x2xf32, #tpu.memory_space<vmem>>, vector<2x2xf32>
    tpu.vector_store %arg8[%c0_399, %c0_400], %1224 {strides = array<i32>} : memref<2x2xf32, #tpu.memory_space<vmem>>, vector<2x2xf32>,
    %1226 = arith.addf %1196, %36 : vector<8x2xf32>
    %c0_401 = arith.constant 0 : index
    %c0_402 = arith.constant 0 : index
    %1227 = vector.load %arg9[%c0_401, %c0_402] : memref<8x2xf32, #tpu.memory_space<vmem>>, vector<8x2xf32>
    tpu.vector_store %arg9[%c0_401, %c0_402], %1226 {strides = array<i32>} : memref<8x2xf32, #tpu.memory_space<vmem>>, vector<8x2xf32>,
    return
  }
  func.func @transform_0(%arg0: i32) -> (i32, i32, i32) {
    %c0_i32 = arith.constant 0 : i32
    %c0_i32_0 = arith.constant 0 : i32
    %c0_i32_1 = arith.constant 0 : i32
    return %c0_i32, %arg0, %c0_i32_0 : i32, i32, i32
  }
  func.func @transform_1(%arg0: i32) -> (i32, i32) {
    %c0_i32 = arith.constant 0 : i32
    %c0_i32_0 = arith.constant 0 : i32
    return %c0_i32, %arg0 : i32, i32
  }
  func.func @transform_2(%arg0: i32) -> (i32, i32) {
    %c0_i32 = arith.constant 0 : i32
    %c0_i32_0 = arith.constant 0 : i32
    return %c0_i32, %arg0 : i32, i32
  }
  func.func @transform_3(%arg0: i32) -> (i32, i32) {
    %c0_i32 = arith.constant 0 : i32
    %c0_i32_0 = arith.constant 0 : i32
    %c0_i32_1 = arith.constant 0 : i32
    return %c0_i32, %c0_i32_0 : i32, i32
  }
  func.func @transform_4(%arg0: i32) -> (i32, i32, i32) {
    %c0_i32 = arith.constant 0 : i32
    %c0_i32_0 = arith.constant 0 : i32
    %c0_i32_1 = arith.constant 0 : i32
    %c0_i32_2 = arith.constant 0 : i32
    return %c0_i32, %c0_i32_0, %c0_i32_1 : i32, i32, i32
  }
  func.func @transform_5(%arg0: i32) -> (i32, i32) {
    %c0_i32 = arith.constant 0 : i32
    %c0_i32_0 = arith.constant 0 : i32
    %c0_i32_1 = arith.constant 0 : i32
    return %c0_i32, %c0_i32_0 : i32, i32
  }
  func.func @transform_6(%arg0: i32) -> (i32, i32) {
    %c0_i32 = arith.constant 0 : i32
    %c0_i32_0 = arith.constant 0 : i32
    %c0_i32_1 = arith.constant 0 : i32
    return %c0_i32, %c0_i32_0 : i32, i32
  }
  func.func @transform_7(%arg0: i32) -> (i32, i32) {
    %c0_i32 = arith.constant 0 : i32
    %c0_i32_0 = arith.constant 0 : i32
    return %c0_i32, %arg0 : i32, i32
  }
  func.func @transform_8(%arg0: i32) -> (i32, i32) {
    %c0_i32 = arith.constant 0 : i32
    %c0_i32_0 = arith.constant 0 : i32
    return %c0_i32, %arg0 : i32, i32
  }
  func.func @transform_9(%arg0: i32) -> (i32, i32) {
    %c0_i32 = arith.constant 0 : i32
    %c0_i32_0 = arith.constant 0 : i32
    return %c0_i32, %arg0 : i32, i32
  }
}

</mosaic_0001>

<llo_original>
// kernel: bert_crf_forward.1
$region0: #{bert_crf_forward.1}
  #allocation0 [shape = 'u32[]', space=smem, size = 0x4, offset = 0x4, fixed_abs, tag = 'smem constant byte address 0x4 - core index']
  #allocation1 [shape = 'u32[72,128]{1,0:T(1,128)}', space=vmem, size = 0x9000, scoped, tag = 'internal scratch']
  %s0 = inlined_call_operand.vmem [shape: f32[8,2,32], index: 0, kind: input, shape index: {}]
  %s1 = inlined_call_operand.vmem [shape: s32[8,2], index: 1, kind: input, shape index: {}]
  %s2 = inlined_call_operand.vmem [shape: f32[8,2], index: 2, kind: input, shape index: {}]
  %s3 = inlined_call_operand.vmem [shape: f32[8,8], index: 3, kind: input, shape index: {}]
  %s4 = inlined_call_operand.vmem [shape: f32[8,8,1], index: 4, kind: input, shape index: {}]
  %s5 = inlined_call_operand.vmem [shape: f32[8,32], index: 5, kind: input, shape index: {}]
  %s6 = inlined_call_operand.vmem [shape: f32[8,1], index: 6, kind: input, shape index: {}]
  %s7 = inlined_call_operand.vmem [shape: f32[2,2], index: 7, kind: output, shape index: {0}]
  %s8 = inlined_call_operand.vmem [shape: f32[8,2], index: 8, kind: output, shape index: {1}]
  %s9 = inlined_call_operand.vmem [shape: s32[8,2], index: 9, kind: output, shape index: {2}]
  %10 = xla_tuple %s7, %s8, %s9
  %s11 = sld [smem:[#allocation0]]
  $region54: #{bert_crf_forward.1} parent=0
    _
  %s13 = ssub.s32 1, %s11
  %s14 = scalar_select 0, %s13, %s11
  // Predicated region
  $region2: #{bert_crf_forward.1} parent=0 // pred_check
    _
  $region3: #{bert_crf_forward.1} parent=0 // pred_check_branch
    %16 = sbr.rel (0) target = $region5
  $region4: #{bert_crf_forward.1} parent=0 // pred_region
    _
  $region5: #{bert_crf_forward.1} parent=0 // pred_fallthru
    _
  // Predicated region
  $region6: #{bert_crf_forward.1} parent=0 // pred_check
    _
  $region7: #{bert_crf_forward.1} parent=0 // pred_check_branch
    %18 = sbr.rel (0) target = $region9
  $region8: #{bert_crf_forward.1} parent=0 // pred_region
    _
  $region9: #{bert_crf_forward.1} parent=0 // pred_fallthru
    _
  // Predicated region
  $region10: #{bert_crf_forward.1} parent=0 // pred_check
    _
  $region11: #{bert_crf_forward.1} parent=0 // pred_check_branch
    %20 = sbr.rel (0) target = $region13
  $region12: #{bert_crf_forward.1} parent=0 // pred_region
    _
  $region13: #{bert_crf_forward.1} parent=0 // pred_fallthru
    _
  // Predicated region
  $region14: #{bert_crf_forward.1} parent=0 // pred_check
    _
  $region15: #{bert_crf_forward.1} parent=0 // pred_check_branch
    %22 = sbr.rel (0) target = $region17
  $region16: #{bert_crf_forward.1} parent=0 // pred_region
    _
  $region17: #{bert_crf_forward.1} parent=0 // pred_fallthru
    _
  // Predicated region
  $region18: #{bert_crf_forward.1} parent=0 // pred_check
    _
  $region19: #{bert_crf_forward.1} parent=0 // pred_check_branch
    %24 = sbr.rel (0) target = $region21
  $region20: #{bert_crf_forward.1} parent=0 // pred_region
    _
  $region21: #{bert_crf_forward.1} parent=0 // pred_fallthru
    _
  // Predicated region
  $region22: #{bert_crf_forward.1} parent=0 // pred_check
    _
  $region23: #{bert_crf_forward.1} parent=0 // pred_check_branch
    %26 = sbr.rel (0) target = $region25
  $region24: #{bert_crf_forward.1} parent=0 // pred_region
    _
  $region25: #{bert_crf_forward.1} parent=0 // pred_fallthru
    _
  // Predicated region
  $region26: #{bert_crf_forward.1} parent=0 // pred_check
    _
  $region27: #{bert_crf_forward.1} parent=0 // pred_check_branch
    %28 = sbr.rel (0) target = $region29
  $region28: #{bert_crf_forward.1} parent=0 // pred_region
    _
  $region29: #{bert_crf_forward.1} parent=0 // pred_fallthru
    _
  %v29 = vld [vmem:[%s5] sm:$0xff]
  %v30 = vld [vmem:[%s6] sm:$0xff]
  %v31 = vld [vmem:[%s3] sm:$0xff]
  %v32 = vmul.f32 %v31, 1.442695
  %v33 = vpow.pop %v32
  %v34 = vld [vmem:[%s4] sm:$0xff]
  %v35 = vld [vmem:[%s4 + $0x8] sm:$0xff]
  %v36 = vld [vmem:[%s4 + $0x10] sm:$0xff]
  %v37 = vld [vmem:[%s4 + $0x18] sm:$0xff]
  %v38 = vld [vmem:[%s4 + $0x20] sm:$0xff]
  %v39 = vld [vmem:[%s4 + $0x28] sm:$0xff]
  %v40 = vld [vmem:[%s4 + $0x30] sm:$0xff]
  %v41 = vld [vmem:[%s4 + $0x38] sm:$0xff]
  %43 = vset.pattern.permute.xlu0 0
  %44 = vperm.xlu0 %43, %v34
  %v45 = vpop.permute.xlu0 %44
  %48 = vset.pattern.permute.xlu0 0
  %49 = vperm.xlu0 %48, %v35
  %v50 = vpop.permute.xlu0 %49
  %53 = vset.pattern.permute.xlu0 0
  %54 = vperm.xlu0 %53, %v36
  %v55 = vpop.permute.xlu0 %54
  %58 = vset.pattern.permute.xlu0 0
  %59 = vperm.xlu0 %58, %v37
  %v60 = vpop.permute.xlu0 %59
  %63 = vset.pattern.permute.xlu0 0
  %64 = vperm.xlu0 %63, %v38
  %v65 = vpop.permute.xlu0 %64
  %68 = vset.pattern.permute.xlu0 0
  %69 = vperm.xlu0 %68, %v39
  %v70 = vpop.permute.xlu0 %69
  %73 = vset.pattern.permute.xlu0 0
  %74 = vperm.xlu0 %73, %v40
  %v75 = vpop.permute.xlu0 %74
  %78 = vset.pattern.permute.xlu0 0
  %79 = vperm.xlu0 %78, %v41
  %v80 = vpop.permute.xlu0 %79
  %v82 = vlaneseq
  %v83 = vshrl.u32 %v82, 7
  %vm84 = vcmp.eq.s32.totalorder %v83, 6
  %v85 = vsel %vm84, 1, 0
  %v86 = vcvt.s32.f32 %v85
  %v87 = vld [vmem:[%s2] sm:$0xff]
  %vm88 = vcmask 15360
  %v89 = vsel %vm88, %v87, 0.0
  %v90 = vrot.slane %v89, 4
  %v91 = vadd.f32 %v89, %v90
  %v92 = vrot.slane %v91, 2
  %v93 = vadd.f32 %v91, %v92
  %v94 = vrot.slane %v93, 1
  %v95 = vadd.f32 %v93, %v94
  %v96 = vcvt.f32.s32.to.zero.pseudo %v95
  %v97 = vsel %vm84, 0.0, -10000.0
  %v98 = vld [vmem:[%s0] sm:$0x3]
  %100 = vset.pattern.permute.xlu0 0
  %101 = vperm.xlu0 %100, %v30
  %v102 = vpop.permute.xlu0 %101
  %vm104 = vcmask 261120
  %v106 = vsel %vm104, %v29, 0
  %v109 = vsel %vm104, %v98, 0
  %111 = vmatpush.xpose.msra.mxu0 0.0
  %112 = vmatpush.xpose.msra.mxu0 0.0
  %113 = vmatpush.xpose.msra.mxu0 0.0
  %114 = vmatpush.xpose.msra.mxu0 0.0
  %115 = vmatpush.xpose.msra.mxu0 0.0
  %116 = vmatpush.xpose.msra.mxu0 0.0
  %117 = vmatpush.xpose.msra.mxu0 0.0
  %118 = vmatpush.xpose.msra.mxu0 0.0
  %119 = vmatpush.xpose.msra.mxu0 0.0
  %120 = vmatpush.xpose.msra.mxu0 0.0
  %121 = vmatpush.xpose.msra.mxu0 0.0
  %122 = vmatpush.xpose.msra.mxu0 0.0
  %123 = vmatpush.xpose.msra.mxu0 0.0
  %124 = vmatpush.xpose.msra.mxu0 0.0
  %125 = vmatpush.xpose.msra.mxu0 0.0
  %126 = vmatpush.xpose.msra.mxu0 %v109
  %127 = vmatmul.f32.gmra.mxu0 %v106
  %v128 = vpop.f32.mrf.mxu0
  %v129 = vadd.f32 %v102, %v128
  %130 = vdwg.mxu0
  %v131 = vld [vmem:[%s2] sm:$0x1]
  %vm132 = vcmp.gt.f32.partialorder %v131, 0.0
  %v133 = vld [vmem:[%s1] sm:$0x1]
  %v134 = vperm.slane %v133, 0
  %vm135 = vcmp.eq.s32.totalorder %v83, %v134
  %v136 = vsel %vm135, 1, 0
  %v137 = vcvt.s32.f32 %v136
  %v138 = vrot.slane %v97, 4
  %v139 = vmax.f32 %v97, %v138
  %v140 = vrot.slane %v139, 2
  %v141 = vmax.f32 %v139, %v140
  %v142 = vrot.slane %v141, 1
  %v143 = vmax.f32 %v141, %v142
  %v144 = vsub.f32 %v97, %v143
  %v145 = vmul.f32 %v144, 1.442695
  %v146 = vpow.pop %v145
  %vm147 = vcmask 64512
  %v149 = vsel %vm147, %v33, 0
  %151 = vmatpush.msra.mxu0 0.0
  %152 = vmatpush.msra.mxu0 0.0
  %153 = vmatpush.msra.mxu0 0.0
  %154 = vmatpush.msra.mxu0 0.0
  %155 = vmatpush.msra.mxu0 0.0
  %156 = vmatpush.msra.mxu0 0.0
  %157 = vmatpush.msra.mxu0 0.0
  %158 = vmatpush.msra.mxu0 0.0
  %159 = vmatpush.msra.mxu0 0.0
  %160 = vmatpush.msra.mxu0 0.0
  %161 = vmatpush.msra.mxu0 0.0
  %162 = vmatpush.msra.mxu0 0.0
  %163 = vmatpush.msra.mxu0 0.0
  %164 = vmatpush.msra.mxu0 0.0
  %165 = vmatpush.msra.mxu0 0.0
  %166 = vmatpush.msra.mxu0 %v146
  %167 = vmatmul.f32.gmra.mxu0 %v149
  %v168 = vpop.f32.mrf.mxu0
  %v169 = vadd.f32 0.0, %v168
  %170 = vdwg.mxu0
  %v171 = vlog2.pop %v169
  %v172 = vmul.f32 %v171, 0.6931472
  %v173 = vadd.f32 %v143, %v172
  %v174 = vadd.f32 %v173, %v129
  %v175 = vsel %vm132, 1, 0
  %v176 = vperm.slane %v175, 0
  %vm177 = vcmp.eq.s32.totalorder %v176, 1
  %v178 = vsel %vm177, %v174, %v97
  %v180 = vsel %vm147, %v31, 0
  %182 = vmatpush.msra.mxu0 0.0
  %183 = vmatpush.msra.mxu0 0.0
  %184 = vmatpush.msra.mxu0 0.0
  %185 = vmatpush.msra.mxu0 0.0
  %186 = vmatpush.msra.mxu0 0.0
  %187 = vmatpush.msra.mxu0 0.0
  %188 = vmatpush.msra.mxu0 0.0
  %189 = vmatpush.msra.mxu0 0.0
  %190 = vmatpush.msra.mxu0 0.0
  %191 = vmatpush.msra.mxu0 0.0
  %192 = vmatpush.msra.mxu0 0.0
  %193 = vmatpush.msra.mxu0 0.0
  %194 = vmatpush.msra.mxu0 0.0
  %195 = vmatpush.msra.mxu0 0.0
  %196 = vmatpush.msra.mxu0 0.0
  %197 = vmatpush.msra.mxu0 %v86
  %198 = vmatmul.f32.gmra.mxu0 %v180
  %v199 = vpop.f32.mrf.mxu0
  %v200 = vadd.f32 0.0, %v199
  %201 = vdwg.mxu0
  %v202 = vadd.f32 %v129, %v200
  %v203 = vmul.f32 %v137, %v202
  %v204 = vsel %vm88, %v203, 0.0
  %v205 = vrot.slane %v204, 4
  %v206 = vadd.f32 %v204, %v205
  %v207 = vrot.slane %v206, 2
  %v208 = vadd.f32 %v206, %v207
  %v209 = vrot.slane %v208, 1
  %v210 = vadd.f32 %v208, %v209
  %v211 = vsel %vm132, %v210, 0.0
  %v212 = vadd.f32 %v211, 0.0
  %v213 = vadd.f32 %v97, %v45
  %v214 = vrot.slane %v213, 4
  %v215 = vmax.f32 %v213, %v214
  %v216 = vrot.slane %v215, 2
  %v217 = vmax.f32 %v215, %v216
  %v218 = vrot.slane %v217, 1
  %v219 = vmax.f32 %v217, %v218
  %vm220 = vcmp.ge.f32.partialorder %v213, %v219
  %v221 = vsel %vm220, %v83, 8
  %v222 = vrot.slane %v221, 4
  %vm223 = vcmp.lt.s32.totalorder %v221, %v222
  %v224 = vsel %vm223, %v221, %v222
  %v225 = vrot.slane %v224, 2
  %vm226 = vcmp.lt.s32.totalorder %v224, %v225
  %v227 = vsel %vm226, %v224, %v225
  %v228 = vrot.slane %v227, 1
  %vm229 = vcmp.lt.s32.totalorder %v227, %v228
  %v230 = vsel %vm229, %v227, %v228
  %v231 = vadd.f32 %v97, %v50
  %v232 = vrot.slane %v231, 4
  %v233 = vmax.f32 %v231, %v232
  %v234 = vrot.slane %v233, 2
  %v235 = vmax.f32 %v233, %v234
  %v236 = vrot.slane %v235, 1
  %v237 = vmax.f32 %v235, %v236
  %vm238 = vcmp.ge.f32.partialorder %v231, %v237
  %v239 = vsel %vm238, %v83, 8
  %v240 = vrot.slane %v239, 4
  %vm241 = vcmp.lt.s32.totalorder %v239, %v240
  %v242 = vsel %vm241, %v239, %v240
  %v243 = vrot.slane %v242, 2
  %vm244 = vcmp.lt.s32.totalorder %v242, %v243
  %v245 = vsel %vm244, %v242, %v243
  %v246 = vrot.slane %v245, 1
  %vm247 = vcmp.lt.s32.totalorder %v245, %v246
  %v248 = vsel %vm247, %v245, %v246
  %v249 = vshll.u32 %v248, 4
  %v250 = vor.u32 %v230, %v249
  %v251 = vadd.f32 %v97, %v55
  %v252 = vrot.slane %v251, 4
  %v253 = vmax.f32 %v251, %v252
  %v254 = vrot.slane %v253, 2
  %v255 = vmax.f32 %v253, %v254
  %v256 = vrot.slane %v255, 1
  %v257 = vmax.f32 %v255, %v256
  %vm258 = vcmp.ge.f32.partialorder %v251, %v257
  %v259 = vsel %vm258, %v83, 8
  %v260 = vrot.slane %v259, 4
  %vm261 = vcmp.lt.s32.totalorder %v259, %v260
  %v262 = vsel %vm261, %v259, %v260
  %v263 = vrot.slane %v262, 2
  %vm264 = vcmp.lt.s32.totalorder %v262, %v263
  %v265 = vsel %vm264, %v262, %v263
  %v266 = vrot.slane %v265, 1
  %vm267 = vcmp.lt.s32.totalorder %v265, %v266
  %v268 = vsel %vm267, %v265, %v266
  %v269 = vshll.u32 %v268, 8
  %v270 = vor.u32 %v250, %v269
  %v271 = vadd.f32 %v97, %v60
  %v272 = vrot.slane %v271, 4
  %v273 = vmax.f32 %v271, %v272
  %v274 = vrot.slane %v273, 2
  %v275 = vmax.f32 %v273, %v274
  %v276 = vrot.slane %v275, 1
  %v277 = vmax.f32 %v275, %v276
  %vm278 = vcmp.ge.f32.partialorder %v271, %v277
  %v279 = vsel %vm278, %v83, 8
  %v280 = vrot.slane %v279, 4
  %vm281 = vcmp.lt.s32.totalorder %v279, %v280
  %v282 = vsel %vm281, %v279, %v280
  %v283 = vrot.slane %v282, 2
  %vm284 = vcmp.lt.s32.totalorder %v282, %v283
  %v285 = vsel %vm284, %v282, %v283
  %v286 = vrot.slane %v285, 1
  %vm287 = vcmp.lt.s32.totalorder %v285, %v286
  %v288 = vsel %vm287, %v285, %v286
  %v289 = vshll.u32 %v288, 12
  %v290 = vor.u32 %v270, %v289
  %v291 = vadd.f32 %v97, %v65
  %v292 = vrot.slane %v291, 4
  %v293 = vmax.f32 %v291, %v292
  %v294 = vrot.slane %v293, 2
  %v295 = vmax.f32 %v293, %v294
  %v296 = vrot.slane %v295, 1
  %v297 = vmax.f32 %v295, %v296
  %vm298 = vcmp.ge.f32.partialorder %v291, %v297
  %v299 = vsel %vm298, %v83, 8
  %v300 = vrot.slane %v299, 4
  %vm301 = vcmp.lt.s32.totalorder %v299, %v300
  %v302 = vsel %vm301, %v299, %v300
  %v303 = vrot.slane %v302, 2
  %vm304 = vcmp.lt.s32.totalorder %v302, %v303
  %v305 = vsel %vm304, %v302, %v303
  %v306 = vrot.slane %v305, 1
  %vm307 = vcmp.lt.s32.totalorder %v305, %v306
  %v308 = vsel %vm307, %v305, %v306
  %v309 = vshll.u32 %v308, 16
  %v310 = vor.u32 %v290, %v309
  %v311 = vadd.f32 %v97, %v70
  %v312 = vrot.slane %v311, 4
  %v313 = vmax.f32 %v311, %v312
  %v314 = vrot.slane %v313, 2
  %v315 = vmax.f32 %v313, %v314
  %v316 = vrot.slane %v315, 1
  %v317 = vmax.f32 %v315, %v316
  %vm318 = vcmp.ge.f32.partialorder %v311, %v317
  %v319 = vsel %vm318, %v83, 8
  %v320 = vrot.slane %v319, 4
  %vm321 = vcmp.lt.s32.totalorder %v319, %v320
  %v322 = vsel %vm321, %v319, %v320
  %v323 = vrot.slane %v322, 2
  %vm324 = vcmp.lt.s32.totalorder %v322, %v323
  %v325 = vsel %vm324, %v322, %v323
  %v326 = vrot.slane %v325, 1
  %vm327 = vcmp.lt.s32.totalorder %v325, %v326
  %v328 = vsel %vm327, %v325, %v326
  %v329 = vshll.u32 %v328, 20
  %v330 = vor.u32 %v310, %v329
  %v331 = vadd.f32 %v97, %v75
  %v332 = vrot.slane %v331, 4
  %v333 = vmax.f32 %v331, %v332
  %v334 = vrot.slane %v333, 2
  %v335 = vmax.f32 %v333, %v334
  %v336 = vrot.slane %v335, 1
  %v337 = vmax.f32 %v335, %v336
  %vm338 = vcmp.ge.f32.partialorder %v331, %v337
  %v339 = vsel %vm338, %v83, 8
  %v340 = vrot.slane %v339, 4
  %vm341 = vcmp.lt.s32.totalorder %v339, %v340
  %v342 = vsel %vm341, %v339, %v340
  %v343 = vrot.slane %v342, 2
  %vm344 = vcmp.lt.s32.totalorder %v342, %v343
  %v345 = vsel %vm344, %v342, %v343
  %v346 = vrot.slane %v345, 1
  %vm347 = vcmp.lt.s32.totalorder %v345, %v346
  %v348 = vsel %vm347, %v345, %v346
  %v349 = vshll.u32 %v348, 24
  %v350 = vor.u32 %v330, %v349
  %v351 = vadd.f32 %v97, %v80
  %v352 = vrot.slane %v351, 4
  %v353 = vmax.f32 %v351, %v352
  %v354 = vrot.slane %v353, 2
  %v355 = vmax.f32 %v353, %v354
  %v356 = vrot.slane %v355, 1
  %v357 = vmax.f32 %v355, %v356
  %vm358 = vcmp.ge.f32.partialorder %v351, %v357
  %v359 = vsel %vm358, %v83, 8
  %v360 = vrot.slane %v359, 4
  %vm361 = vcmp.lt.s32.totalorder %v359, %v360
  %v362 = vsel %vm361, %v359, %v360
  %v363 = vrot.slane %v362, 2
  %vm364 = vcmp.lt.s32.totalorder %v362, %v363
  %v365 = vsel %vm364, %v362, %v363
  %v366 = vrot.slane %v365, 1
  %vm367 = vcmp.lt.s32.totalorder %v365, %v366
  %v368 = vsel %vm367, %v365, %v366
  %v369 = vshll.u32 %v368, 28
  %v370 = vor.u32 %v350, %v369
  %vm371 = vcmask 1040384
  %v372 = vsel %vm371, %v219, %v237
  %vm373 = vcmask 1041408
  %v374 = vsel %vm373, %v372, %v257
  %vm375 = vcmask 1042432
  %v376 = vsel %vm375, %v374, %v277
  %vm377 = vcmask 1043456
  %v378 = vsel %vm377, %v376, %v297
  %vm379 = vcmask 1044480
  %v380 = vsel %vm379, %v378, %v317
  %vm381 = vcmask 1045504
  %v382 = vsel %vm381, %v380, %v337
  %vm383 = vcmask 1046528
  %v384 = vsel %vm383, %v382, %v357
  %v385 = vadd.f32 %v384, %v129
  %v386 = vsel %vm177, %v385, %v97
  %vm387 = vcmask 8192
  %388 = vst.msk [vmem:[%s9] sm:$0x1] %vm387, %v370
  %vm389 = vcmp.eq.s32.totalorder %v96, 1
  %v390 = vsel %vm389, 1, 0
  %v391 = vcvt.s32.f32 %v390
  %v392 = vmul.f32 %v137, %v391
  %v393 = vadd.f32 %v392, 0.0
  %s394 = scalar_lea.vmem %s0, 2
  %v395 = vld [vmem:[%s394] sm:$0x3]
  %v397 = vsel %vm104, %v395, 0
  %399 = vmatpush.xpose.msra.mxu0 0.0
  %400 = vmatpush.xpose.msra.mxu0 0.0
  %401 = vmatpush.xpose.msra.mxu0 0.0
  %402 = vmatpush.xpose.msra.mxu0 0.0
  %403 = vmatpush.xpose.msra.mxu0 0.0
  %404 = vmatpush.xpose.msra.mxu0 0.0
  %405 = vmatpush.xpose.msra.mxu0 0.0
  %406 = vmatpush.xpose.msra.mxu0 0.0
  %407 = vmatpush.xpose.msra.mxu0 0.0
  %408 = vmatpush.xpose.msra.mxu0 0.0
  %409 = vmatpush.xpose.msra.mxu0 0.0
  %410 = vmatpush.xpose.msra.mxu0 0.0
  %411 = vmatpush.xpose.msra.mxu0 0.0
  %412 = vmatpush.xpose.msra.mxu0 0.0
  %413 = vmatpush.xpose.msra.mxu0 0.0
  %414 = vmatpush.xpose.msra.mxu0 %v397
  %415 = vmatmul.f32.gmra.mxu0 %v106
  %v416 = vpop.f32.mrf.mxu0
  %v417 = vadd.f32 %v102, %v416
  %418 = vdwg.mxu0
  %v419 = vld [vmem:[%s2 + $0x1] sm:$0x1]
  %vm420 = vcmp.gt.f32.partialorder %v419, 0.0
  %v421 = vld [vmem:[%s1 + $0x1] sm:$0x1]
  %v422 = vperm.slane %v421, 0
  %vm423 = vcmp.eq.s32.totalorder %v83, %v422
  %v424 = vsel %vm423, 1, 0
  %v425 = vcvt.s32.f32 %v424
  %v426 = vsel %vm88, %v178, -inf
  %v427 = vrot.slane %v426, 4
  %v428 = vmax.f32 %v426, %v427
  %v429 = vrot.slane %v428, 2
  %v430 = vmax.f32 %v428, %v429
  %v431 = vrot.slane %v430, 1
  %v432 = vmax.f32 %v430, %v431
  %v433 = vsub.f32 %v178, %v432
  %v434 = vmul.f32 %v433, 1.442695
  %v435 = vpow.pop %v434
  %436 = vmatpush.msra.mxu0 0.0
  %437 = vmatpush.msra.mxu0 0.0
  %438 = vmatpush.msra.mxu0 0.0
  %439 = vmatpush.msra.mxu0 0.0
  %440 = vmatpush.msra.mxu0 0.0
  %441 = vmatpush.msra.mxu0 0.0
  %442 = vmatpush.msra.mxu0 0.0
  %443 = vmatpush.msra.mxu0 0.0
  %444 = vmatpush.msra.mxu0 0.0
  %445 = vmatpush.msra.mxu0 0.0
  %446 = vmatpush.msra.mxu0 0.0
  %447 = vmatpush.msra.mxu0 0.0
  %448 = vmatpush.msra.mxu0 0.0
  %449 = vmatpush.msra.mxu0 0.0
  %450 = vmatpush.msra.mxu0 0.0
  %451 = vmatpush.msra.mxu0 %v435
  %452 = vmatmul.f32.gmra.mxu0 %v149
  %v453 = vpop.f32.mrf.mxu0
  %v454 = vadd.f32 0.0, %v453
  %455 = vdwg.mxu0
  %v456 = vlog2.pop %v454
  %v457 = vmul.f32 %v456, 0.6931472
  %v458 = vadd.f32 %v432, %v457
  %v459 = vadd.f32 %v458, %v417
  %v460 = vsel %vm420, 1, 0
  %v461 = vperm.slane %v460, 0
  %vm462 = vcmp.eq.s32.totalorder %v461, 1
  %v463 = vsel %vm462, %v459, %v178
  %464 = vmatpush.msra.mxu0 0.0
  %465 = vmatpush.msra.mxu0 0.0
  %466 = vmatpush.msra.mxu0 0.0
  %467 = vmatpush.msra.mxu0 0.0
  %468 = vmatpush.msra.mxu0 0.0
  %469 = vmatpush.msra.mxu0 0.0
  %470 = vmatpush.msra.mxu0 0.0
  %471 = vmatpush.msra.mxu0 0.0
  %472 = vmatpush.msra.mxu0 0.0
  %473 = vmatpush.msra.mxu0 0.0
  %474 = vmatpush.msra.mxu0 0.0
  %475 = vmatpush.msra.mxu0 0.0
  %476 = vmatpush.msra.mxu0 0.0
  %477 = vmatpush.msra.mxu0 0.0
  %478 = vmatpush.msra.mxu0 0.0
  %479 = vmatpush.msra.mxu0 %v137
  %480 = vmatmul.f32.gmra.mxu0 %v180
  %v481 = vpop.f32.mrf.mxu0
  %v482 = vadd.f32 0.0, %v481
  %483 = vdwg.mxu0
  %v484 = vadd.f32 %v417, %v482
  %v485 = vmul.f32 %v425, %v484
  %v486 = vsel %vm88, %v485, 0.0
  %v487 = vrot.slane %v486, 4
  %v488 = vadd.f32 %v486, %v487
  %v489 = vrot.slane %v488, 2
  %v490 = vadd.f32 %v488, %v489
  %v491 = vrot.slane %v490, 1
  %v492 = vadd.f32 %v490, %v491
  %v493 = vsel %vm420, %v492, 0.0
  %v494 = vadd.f32 %v212, %v493
  %v495 = vadd.f32 %v386, %v45
  %v496 = vsel %vm88, %v495, -inf
  %v497 = vrot.slane %v496, 4
  %v498 = vmax.f32 %v496, %v497
  %v499 = vrot.slane %v498, 2
  %v500 = vmax.f32 %v498, %v499
  %v501 = vrot.slane %v500, 1
  %v502 = vmax.f32 %v500, %v501
  %vm503 = vcmp.ge.f32.partialorder %v495, %v502
  %v504 = vsel %vm503, %v83, 8
  %v505 = vsel %vm88, %v504, 2147483647
  %v506 = vrot.slane %v505, 4
  %vm507 = vcmp.lt.s32.totalorder %v505, %v506
  %v508 = vsel %vm507, %v505, %v506
  %v509 = vrot.slane %v508, 2
  %vm510 = vcmp.lt.s32.totalorder %v508, %v509
  %v511 = vsel %vm510, %v508, %v509
  %v512 = vrot.slane %v511, 1
  %vm513 = vcmp.lt.s32.totalorder %v511, %v512
  %v514 = vsel %vm513, %v511, %v512
  %v515 = vadd.f32 %v386, %v50
  %v516 = vsel %vm88, %v515, -inf
  %v517 = vrot.slane %v516, 4
  %v518 = vmax.f32 %v516, %v517
  %v519 = vrot.slane %v518, 2
  %v520 = vmax.f32 %v518, %v519
  %v521 = vrot.slane %v520, 1
  %v522 = vmax.f32 %v520, %v521
  %vm523 = vcmp.ge.f32.partialorder %v515, %v522
  %v524 = vsel %vm523, %v83, 8
  %v525 = vsel %vm88, %v524, 2147483647
  %v526 = vrot.slane %v525, 4
  %vm527 = vcmp.lt.s32.totalorder %v525, %v526
  %v528 = vsel %vm527, %v525, %v526
  %v529 = vrot.slane %v528, 2
  %vm530 = vcmp.lt.s32.totalorder %v528, %v529
  %v531 = vsel %vm530, %v528, %v529
  %v532 = vrot.slane %v531, 1
  %vm533 = vcmp.lt.s32.totalorder %v531, %v532
  %v534 = vsel %vm533, %v531, %v532
  %v535 = vshll.u32 %v534, 4
  %v536 = vor.u32 %v514, %v535
  %v537 = vadd.f32 %v386, %v55
  %v538 = vsel %vm88, %v537, -inf
  %v539 = vrot.slane %v538, 4
  %v540 = vmax.f32 %v538, %v539
  %v541 = vrot.slane %v540, 2
  %v542 = vmax.f32 %v540, %v541
  %v543 = vrot.slane %v542, 1
  %v544 = vmax.f32 %v542, %v543
  %vm545 = vcmp.ge.f32.partialorder %v537, %v544
  %v546 = vsel %vm545, %v83, 8
  %v547 = vsel %vm88, %v546, 2147483647
  %v548 = vrot.slane %v547, 4
  %vm549 = vcmp.lt.s32.totalorder %v547, %v548
  %v550 = vsel %vm549, %v547, %v548
  %v551 = vrot.slane %v550, 2
  %vm552 = vcmp.lt.s32.totalorder %v550, %v551
  %v553 = vsel %vm552, %v550, %v551
  %v554 = vrot.slane %v553, 1
  %vm555 = vcmp.lt.s32.totalorder %v553, %v554
  %v556 = vsel %vm555, %v553, %v554
  %v557 = vshll.u32 %v556, 8
  %v558 = vor.u32 %v536, %v557
  %v559 = vadd.f32 %v386, %v60
  %v560 = vsel %vm88, %v559, -inf
  %v561 = vrot.slane %v560, 4
  %v562 = vmax.f32 %v560, %v561
  %v563 = vrot.slane %v562, 2
  %v564 = vmax.f32 %v562, %v563
  %v565 = vrot.slane %v564, 1
  %v566 = vmax.f32 %v564, %v565
  %vm567 = vcmp.ge.f32.partialorder %v559, %v566
  %v568 = vsel %vm567, %v83, 8
  %v569 = vsel %vm88, %v568, 2147483647
  %v570 = vrot.slane %v569, 4
  %vm571 = vcmp.lt.s32.totalorder %v569, %v570
  %v572 = vsel %vm571, %v569, %v570
  %v573 = vrot.slane %v572, 2
  %vm574 = vcmp.lt.s32.totalorder %v572, %v573
  %v575 = vsel %vm574, %v572, %v573
  %v576 = vrot.slane %v575, 1
  %vm577 = vcmp.lt.s32.totalorder %v575, %v576
  %v578 = vsel %vm577, %v575, %v576
  %v579 = vshll.u32 %v578, 12
  %v580 = vor.u32 %v558, %v579
  %v581 = vadd.f32 %v386, %v65
  %v582 = vsel %vm88, %v581, -inf
  %v583 = vrot.slane %v582, 4
  %v584 = vmax.f32 %v582, %v583
  %v585 = vrot.slane %v584, 2
  %v586 = vmax.f32 %v584, %v585
  %v587 = vrot.slane %v586, 1
  %v588 = vmax.f32 %v586, %v587
  %vm589 = vcmp.ge.f32.partialorder %v581, %v588
  %v590 = vsel %vm589, %v83, 8
  %v591 = vsel %vm88, %v590, 2147483647
  %v592 = vrot.slane %v591, 4
  %vm593 = vcmp.lt.s32.totalorder %v591, %v592
  %v594 = vsel %vm593, %v591, %v592
  %v595 = vrot.slane %v594, 2
  %vm596 = vcmp.lt.s32.totalorder %v594, %v595
  %v597 = vsel %vm596, %v594, %v595
  %v598 = vrot.slane %v597, 1
  %vm599 = vcmp.lt.s32.totalorder %v597, %v598
  %v600 = vsel %vm599, %v597, %v598
  %v601 = vshll.u32 %v600, 16
  %v602 = vor.u32 %v580, %v601
  %v603 = vadd.f32 %v386, %v70
  %v604 = vsel %vm88, %v603, -inf
  %v605 = vrot.slane %v604, 4
  %v606 = vmax.f32 %v604, %v605
  %v607 = vrot.slane %v606, 2
  %v608 = vmax.f32 %v606, %v607
  %v609 = vrot.slane %v608, 1
  %v610 = vmax.f32 %v608, %v609
  %vm611 = vcmp.ge.f32.partialorder %v603, %v610
  %v612 = vsel %vm611, %v83, 8
  %v613 = vsel %vm88, %v612, 2147483647
  %v614 = vrot.slane %v613, 4
  %vm615 = vcmp.lt.s32.totalorder %v613, %v614
  %v616 = vsel %vm615, %v613, %v614
  %v617 = vrot.slane %v616, 2
  %vm618 = vcmp.lt.s32.totalorder %v616, %v617
  %v619 = vsel %vm618, %v616, %v617
  %v620 = vrot.slane %v619, 1
  %vm621 = vcmp.lt.s32.totalorder %v619, %v620
  %v622 = vsel %vm621, %v619, %v620
  %v623 = vshll.u32 %v622, 20
  %v624 = vor.u32 %v602, %v623
  %v625 = vadd.f32 %v386, %v75
  %v626 = vsel %vm88, %v625, -inf
  %v627 = vrot.slane %v626, 4
  %v628 = vmax.f32 %v626, %v627
  %v629 = vrot.slane %v628, 2
  %v630 = vmax.f32 %v628, %v629
  %v631 = vrot.slane %v630, 1
  %v632 = vmax.f32 %v630, %v631
  %vm633 = vcmp.ge.f32.partialorder %v625, %v632
  %v634 = vsel %vm633, %v83, 8
  %v635 = vsel %vm88, %v634, 2147483647
  %v636 = vrot.slane %v635, 4
  %vm637 = vcmp.lt.s32.totalorder %v635, %v636
  %v638 = vsel %vm637, %v635, %v636
  %v639 = vrot.slane %v638, 2
  %vm640 = vcmp.lt.s32.totalorder %v638, %v639
  %v641 = vsel %vm640, %v638, %v639
  %v642 = vrot.slane %v641, 1
  %vm643 = vcmp.lt.s32.totalorder %v641, %v642
  %v644 = vsel %vm643, %v641, %v642
  %v645 = vshll.u32 %v644, 24
  %v646 = vor.u32 %v624, %v645
  %v647 = vadd.f32 %v386, %v80
  %v648 = vsel %vm88, %v647, -inf
  %v649 = vrot.slane %v648, 4
  %v650 = vmax.f32 %v648, %v649
  %v651 = vrot.slane %v650, 2
  %v652 = vmax.f32 %v650, %v651
  %v653 = vrot.slane %v652, 1
  %v654 = vmax.f32 %v652, %v653
  %vm655 = vcmp.ge.f32.partialorder %v647, %v654
  %v656 = vsel %vm655, %v83, 8
  %v657 = vsel %vm88, %v656, 2147483647
  %v658 = vrot.slane %v657, 4
  %vm659 = vcmp.lt.s32.totalorder %v657, %v658
  %v660 = vsel %vm659, %v657, %v658
  %v661 = vrot.slane %v660, 2
  %vm662 = vcmp.lt.s32.totalorder %v660, %v661
  %v663 = vsel %vm662, %v660, %v661
  %v664 = vrot.slane %v663, 1
  %vm665 = vcmp.lt.s32.totalorder %v663, %v664
  %v666 = vsel %vm665, %v663, %v664
  %v667 = vshll.u32 %v666, 28
  %v668 = vor.u32 %v646, %v667
  %v669 = vsel %vm371, %v502, %v522
  %v670 = vsel %vm373, %v669, %v544
  %v671 = vsel %vm375, %v670, %v566
  %v672 = vsel %vm377, %v671, %v588
  %v673 = vsel %vm379, %v672, %v610
  %v674 = vsel %vm381, %v673, %v632
  %v675 = vsel %vm383, %v674, %v654
  %v676 = vadd.f32 %v675, %v417
  %v677 = vsel %vm462, %v676, %v386
  %678 = vst.msk [vmem:[%s9 + $0x1] sm:$0x1] %vm387, %v668
  %vm679 = vcmp.eq.s32.totalorder %v96, 2
  %v680 = vsel %vm679, 1, 0
  %v681 = vcvt.s32.f32 %v680
  %v682 = vmul.f32 %v425, %v681
  %v683 = vadd.f32 %v393, %v682
  %s684 = scalar_lea.vmem %s0, 4
  %v685 = vld [vmem:[%s684] sm:$0x3]
  %v687 = vsel %vm104, %v685, 0
  %689 = vmatpush.xpose.msra.mxu0 0.0
  %690 = vmatpush.xpose.msra.mxu0 0.0
  %691 = vmatpush.xpose.msra.mxu0 0.0
  %692 = vmatpush.xpose.msra.mxu0 0.0
  %693 = vmatpush.xpose.msra.mxu0 0.0
  %694 = vmatpush.xpose.msra.mxu0 0.0
  %695 = vmatpush.xpose.msra.mxu0 0.0
  %696 = vmatpush.xpose.msra.mxu0 0.0
  %697 = vmatpush.xpose.msra.mxu0 0.0
  %698 = vmatpush.xpose.msra.mxu0 0.0
  %699 = vmatpush.xpose.msra.mxu0 0.0
  %700 = vmatpush.xpose.msra.mxu0 0.0
  %701 = vmatpush.xpose.msra.mxu0 0.0
  %702 = vmatpush.xpose.msra.mxu0 0.0
  %703 = vmatpush.xpose.msra.mxu0 0.0
  %704 = vmatpush.xpose.msra.mxu0 %v687
  %705 = vmatmul.f32.gmra.mxu0 %v106
  %v706 = vpop.f32.mrf.mxu0
  %v707 = vadd.f32 %v102, %v706
  %708 = vdwg.mxu0
  %v709 = vld [vmem:[%s2 + $0x2] sm:$0x1]
  %vm710 = vcmp.gt.f32.partialorder %v709, 0.0
  %v711 = vld [vmem:[%s1 + $0x2] sm:$0x1]
  %v712 = vperm.slane %v711, 0
  %vm713 = vcmp.eq.s32.totalorder %v83, %v712
  %v714 = vsel %vm713, 1, 0
  %v715 = vcvt.s32.f32 %v714
  %v716 = vsel %vm88, %v463, -inf
  %v717 = vrot.slane %v716, 4
  %v718 = vmax.f32 %v716, %v717
  %v719 = vrot.slane %v718, 2
  %v720 = vmax.f32 %v718, %v719
  %v721 = vrot.slane %v720, 1
  %v722 = vmax.f32 %v720, %v721
  %v723 = vsub.f32 %v463, %v722
  %v724 = vmul.f32 %v723, 1.442695
  %v725 = vpow.pop %v724
  %726 = vmatpush.msra.mxu0 0.0
  %727 = vmatpush.msra.mxu0 0.0
  %728 = vmatpush.msra.mxu0 0.0
  %729 = vmatpush.msra.mxu0 0.0
  %730 = vmatpush.msra.mxu0 0.0
  %731 = vmatpush.msra.mxu0 0.0
  %732 = vmatpush.msra.mxu0 0.0
  %733 = vmatpush.msra.mxu0 0.0
  %734 = vmatpush.msra.mxu0 0.0
  %735 = vmatpush.msra.mxu0 0.0
  %736 = vmatpush.msra.mxu0 0.0
  %737 = vmatpush.msra.mxu0 0.0
  %738 = vmatpush.msra.mxu0 0.0
  %739 = vmatpush.msra.mxu0 0.0
  %740 = vmatpush.msra.mxu0 0.0
  %741 = vmatpush.msra.mxu0 %v725
  %742 = vmatmul.f32.gmra.mxu0 %v149
  %v743 = vpop.f32.mrf.mxu0
  %v744 = vadd.f32 0.0, %v743
  %745 = vdwg.mxu0
  %v746 = vlog2.pop %v744
  %v747 = vmul.f32 %v746, 0.6931472
  %v748 = vadd.f32 %v722, %v747
  %v749 = vadd.f32 %v748, %v707
  %v750 = vsel %vm710, 1, 0
  %v751 = vperm.slane %v750, 0
  %vm752 = vcmp.eq.s32.totalorder %v751, 1
  %v753 = vsel %vm752, %v749, %v463
  %754 = vmatpush.msra.mxu0 0.0
  %755 = vmatpush.msra.mxu0 0.0
  %756 = vmatpush.msra.mxu0 0.0
  %757 = vmatpush.msra.mxu0 0.0
  %758 = vmatpush.msra.mxu0 0.0
  %759 = vmatpush.msra.mxu0 0.0
  %760 = vmatpush.msra.mxu0 0.0
  %761 = vmatpush.msra.mxu0 0.0
  %762 = vmatpush.msra.mxu0 0.0
  %763 = vmatpush.msra.mxu0 0.0
  %764 = vmatpush.msra.mxu0 0.0
  %765 = vmatpush.msra.mxu0 0.0
  %766 = vmatpush.msra.mxu0 0.0
  %767 = vmatpush.msra.mxu0 0.0
  %768 = vmatpush.msra.mxu0 0.0
  %769 = vmatpush.msra.mxu0 %v425
  %770 = vmatmul.f32.gmra.mxu0 %v180
  %v771 = vpop.f32.mrf.mxu0
  %v772 = vadd.f32 0.0, %v771
  %773 = vdwg.mxu0
  %v774 = vadd.f32 %v707, %v772
  %v775 = vmul.f32 %v715, %v774
  %v776 = vsel %vm88, %v775, 0.0
  %v777 = vrot.slane %v776, 4
  %v778 = vadd.f32 %v776, %v777
  %v779 = vrot.slane %v778, 2
  %v780 = vadd.f32 %v778, %v779
  %v781 = vrot.slane %v780, 1
  %v782 = vadd.f32 %v780, %v781
  %v783 = vsel %vm710, %v782, 0.0
  %v784 = vadd.f32 %v494, %v783
  %v785 = vadd.f32 %v677, %v45
  %v786 = vsel %vm88, %v785, -inf
  %v787 = vrot.slane %v786, 4
  %v788 = vmax.f32 %v786, %v787
  %v789 = vrot.slane %v788, 2
  %v790 = vmax.f32 %v788, %v789
  %v791 = vrot.slane %v790, 1
  %v792 = vmax.f32 %v790, %v791
  %vm793 = vcmp.ge.f32.partialorder %v785, %v792
  %v794 = vsel %vm793, %v83, 8
  %v795 = vsel %vm88, %v794, 2147483647
  %v796 = vrot.slane %v795, 4
  %vm797 = vcmp.lt.s32.totalorder %v795, %v796
  %v798 = vsel %vm797, %v795, %v796
  %v799 = vrot.slane %v798, 2
  %vm800 = vcmp.lt.s32.totalorder %v798, %v799
  %v801 = vsel %vm800, %v798, %v799
  %v802 = vrot.slane %v801, 1
  %vm803 = vcmp.lt.s32.totalorder %v801, %v802
  %v804 = vsel %vm803, %v801, %v802
  %v805 = vadd.f32 %v677, %v50
  %v806 = vsel %vm88, %v805, -inf
  %v807 = vrot.slane %v806, 4
  %v808 = vmax.f32 %v806, %v807
  %v809 = vrot.slane %v808, 2
  %v810 = vmax.f32 %v808, %v809
  %v811 = vrot.slane %v810, 1
  %v812 = vmax.f32 %v810, %v811
  %vm813 = vcmp.ge.f32.partialorder %v805, %v812
  %v814 = vsel %vm813, %v83, 8
  %v815 = vsel %vm88, %v814, 2147483647
  %v816 = vrot.slane %v815, 4
  %vm817 = vcmp.lt.s32.totalorder %v815, %v816
  %v818 = vsel %vm817, %v815, %v816
  %v819 = vrot.slane %v818, 2
  %vm820 = vcmp.lt.s32.totalorder %v818, %v819
  %v821 = vsel %vm820, %v818, %v819
  %v822 = vrot.slane %v821, 1
  %vm823 = vcmp.lt.s32.totalorder %v821, %v822
  %v824 = vsel %vm823, %v821, %v822
  %v825 = vshll.u32 %v824, 4
  %v826 = vor.u32 %v804, %v825
  %v827 = vadd.f32 %v677, %v55
  %v828 = vsel %vm88, %v827, -inf
  %v829 = vrot.slane %v828, 4
  %v830 = vmax.f32 %v828, %v829
  %v831 = vrot.slane %v830, 2
  %v832 = vmax.f32 %v830, %v831
  %v833 = vrot.slane %v832, 1
  %v834 = vmax.f32 %v832, %v833
  %vm835 = vcmp.ge.f32.partialorder %v827, %v834
  %v836 = vsel %vm835, %v83, 8
  %v837 = vsel %vm88, %v836, 2147483647
  %v838 = vrot.slane %v837, 4
  %vm839 = vcmp.lt.s32.totalorder %v837, %v838
  %v840 = vsel %vm839, %v837, %v838
  %v841 = vrot.slane %v840, 2
  %vm842 = vcmp.lt.s32.totalorder %v840, %v841
  %v843 = vsel %vm842, %v840, %v841
  %v844 = vrot.slane %v843, 1
  %vm845 = vcmp.lt.s32.totalorder %v843, %v844
  %v846 = vsel %vm845, %v843, %v844
  %v847 = vshll.u32 %v846, 8
  %v848 = vor.u32 %v826, %v847
  %v849 = vadd.f32 %v677, %v60
  %v850 = vsel %vm88, %v849, -inf
  %v851 = vrot.slane %v850, 4
  %v852 = vmax.f32 %v850, %v851
  %v853 = vrot.slane %v852, 2
  %v854 = vmax.f32 %v852, %v853
  %v855 = vrot.slane %v854, 1
  %v856 = vmax.f32 %v854, %v855
  %vm857 = vcmp.ge.f32.partialorder %v849, %v856
  %v858 = vsel %vm857, %v83, 8
  %v859 = vsel %vm88, %v858, 2147483647
  %v860 = vrot.slane %v859, 4
  %vm861 = vcmp.lt.s32.totalorder %v859, %v860
  %v862 = vsel %vm861, %v859, %v860
  %v863 = vrot.slane %v862, 2
  %vm864 = vcmp.lt.s32.totalorder %v862, %v863
  %v865 = vsel %vm864, %v862, %v863
  %v866 = vrot.slane %v865, 1
  %vm867 = vcmp.lt.s32.totalorder %v865, %v866
  %v868 = vsel %vm867, %v865, %v866
  %v869 = vshll.u32 %v868, 12
  %v870 = vor.u32 %v848, %v869
  %v871 = vadd.f32 %v677, %v65
  %v872 = vsel %vm88, %v871, -inf
  %v873 = vrot.slane %v872, 4
  %v874 = vmax.f32 %v872, %v873
  %v875 = vrot.slane %v874, 2
  %v876 = vmax.f32 %v874, %v875
  %v877 = vrot.slane %v876, 1
  %v878 = vmax.f32 %v876, %v877
  %vm879 = vcmp.ge.f32.partialorder %v871, %v878
  %v880 = vsel %vm879, %v83, 8
  %v881 = vsel %vm88, %v880, 2147483647
  %v882 = vrot.slane %v881, 4
  %vm883 = vcmp.lt.s32.totalorder %v881, %v882
  %v884 = vsel %vm883, %v881, %v882
  %v885 = vrot.slane %v884, 2
  %vm886 = vcmp.lt.s32.totalorder %v884, %v885
  %v887 = vsel %vm886, %v884, %v885
  %v888 = vrot.slane %v887, 1
  %vm889 = vcmp.lt.s32.totalorder %v887, %v888
  %v890 = vsel %vm889, %v887, %v888
  %v891 = vshll.u32 %v890, 16
  %v892 = vor.u32 %v870, %v891
  %v893 = vadd.f32 %v677, %v70
  %v894 = vsel %vm88, %v893, -inf
  %v895 = vrot.slane %v894, 4
  %v896 = vmax.f32 %v894, %v895
  %v897 = vrot.slane %v896, 2
  %v898 = vmax.f32 %v896, %v897
  %v899 = vrot.slane %v898, 1
  %v900 = vmax.f32 %v898, %v899
  %vm901 = vcmp.ge.f32.partialorder %v893, %v900
  %v902 = vsel %vm901, %v83, 8
  %v903 = vsel %vm88, %v902, 2147483647
  %v904 = vrot.slane %v903, 4
  %vm905 = vcmp.lt.s32.totalorder %v903, %v904
  %v906 = vsel %vm905, %v903, %v904
  %v907 = vrot.slane %v906, 2
  %vm908 = vcmp.lt.s32.totalorder %v906, %v907
  %v909 = vsel %vm908, %v906, %v907
  %v910 = vrot.slane %v909, 1
  %vm911 = vcmp.lt.s32.totalorder %v909, %v910
  %v912 = vsel %vm911, %v909, %v910
  %v913 = vshll.u32 %v912, 20
  %v914 = vor.u32 %v892, %v913
  %v915 = vadd.f32 %v677, %v75
  %v916 = vsel %vm88, %v915, -inf
  %v917 = vrot.slane %v916, 4
  %v918 = vmax.f32 %v916, %v917
  %v919 = vrot.slane %v918, 2
  %v920 = vmax.f32 %v918, %v919
  %v921 = vrot.slane %v920, 1
  %v922 = vmax.f32 %v920, %v921
  %vm923 = vcmp.ge.f32.partialorder %v915, %v922
  %v924 = vsel %vm923, %v83, 8
  %v925 = vsel %vm88, %v924, 2147483647
  %v926 = vrot.slane %v925, 4
  %vm927 = vcmp.lt.s32.totalorder %v925, %v926
  %v928 = vsel %vm927, %v925, %v926
  %v929 = vrot.slane %v928, 2
  %vm930 = vcmp.lt.s32.totalorder %v928, %v929
  %v931 = vsel %vm930, %v928, %v929
  %v932 = vrot.slane %v931, 1
  %vm933 = vcmp.lt.s32.totalorder %v931, %v932
  %v934 = vsel %vm933, %v931, %v932
  %v935 = vshll.u32 %v934, 24
  %v936 = vor.u32 %v914, %v935
  %v937 = vadd.f32 %v677, %v80
  %v938 = vsel %vm88, %v937, -inf
  %v939 = vrot.slane %v938, 4
  %v940 = vmax.f32 %v938, %v939
  %v941 = vrot.slane %v940, 2
  %v942 = vmax.f32 %v940, %v941
  %v943 = vrot.slane %v942, 1
  %v944 = vmax.f32 %v942, %v943
  %vm945 = vcmp.ge.f32.partialorder %v937, %v944
  %v946 = vsel %vm945, %v83, 8
  %v947 = vsel %vm88, %v946, 2147483647
  %v948 = vrot.slane %v947, 4
  %vm949 = vcmp.lt.s32.totalorder %v947, %v948
  %v950 = vsel %vm949, %v947, %v948
  %v951 = vrot.slane %v950, 2
  %vm952 = vcmp.lt.s32.totalorder %v950, %v951
  %v953 = vsel %vm952, %v950, %v951
  %v954 = vrot.slane %v953, 1
  %vm955 = vcmp.lt.s32.totalorder %v953, %v954
  %v956 = vsel %vm955, %v953, %v954
  %v957 = vshll.u32 %v956, 28
  %v958 = vor.u32 %v936, %v957
  %v959 = vsel %vm371, %v792, %v812
  %v960 = vsel %vm373, %v959, %v834
  %v961 = vsel %vm375, %v960, %v856
  %v962 = vsel %vm377, %v961, %v878
  %v963 = vsel %vm379, %v962, %v900
  %v964 = vsel %vm381, %v963, %v922
  %v965 = vsel %vm383, %v964, %v944
  %v966 = vadd.f32 %v965, %v707
  %v967 = vsel %vm752, %v966, %v677
  %968 = vst.msk [vmem:[%s9 + $0x2] sm:$0x1] %vm387, %v958
  %vm969 = vcmp.eq.s32.totalorder %v96, 3
  %v970 = vsel %vm969, 1, 0
  %v971 = vcvt.s32.f32 %v970
  %v972 = vmul.f32 %v715, %v971
  %v973 = vadd.f32 %v683, %v972
  %s974 = scalar_lea.vmem %s0, 6
  %v975 = vld [vmem:[%s974] sm:$0x3]
  %v977 = vsel %vm104, %v975, 0
  %979 = vmatpush.xpose.msra.mxu0 0.0
  %980 = vmatpush.xpose.msra.mxu0 0.0
  %981 = vmatpush.xpose.msra.mxu0 0.0
  %982 = vmatpush.xpose.msra.mxu0 0.0
  %983 = vmatpush.xpose.msra.mxu0 0.0
  %984 = vmatpush.xpose.msra.mxu0 0.0
  %985 = vmatpush.xpose.msra.mxu0 0.0
  %986 = vmatpush.xpose.msra.mxu0 0.0
  %987 = vmatpush.xpose.msra.mxu0 0.0
  %988 = vmatpush.xpose.msra.mxu0 0.0
  %989 = vmatpush.xpose.msra.mxu0 0.0
  %990 = vmatpush.xpose.msra.mxu0 0.0
  %991 = vmatpush.xpose.msra.mxu0 0.0
  %992 = vmatpush.xpose.msra.mxu0 0.0
  %993 = vmatpush.xpose.msra.mxu0 0.0
  %994 = vmatpush.xpose.msra.mxu0 %v977
  %995 = vmatmul.f32.gmra.mxu0 %v106
  %v996 = vpop.f32.mrf.mxu0
  %v997 = vadd.f32 %v102, %v996
  %998 = vdwg.mxu0
  %v999 = vld [vmem:[%s2 + $0x3] sm:$0x1]
  %vm1000 = vcmp.gt.f32.partialorder %v999, 0.0
  %v1001 = vld [vmem:[%s1 + $0x3] sm:$0x1]
  %v1002 = vperm.slane %v1001, 0
  %vm1003 = vcmp.eq.s32.totalorder %v83, %v1002
  %v1004 = vsel %vm1003, 1, 0
  %v1005 = vcvt.s32.f32 %v1004
  %v1006 = vsel %vm88, %v753, -inf
  %v1007 = vrot.slane %v1006, 4
  %v1008 = vmax.f32 %v1006, %v1007
  %v1009 = vrot.slane %v1008, 2
  %v1010 = vmax.f32 %v1008, %v1009
  %v1011 = vrot.slane %v1010, 1
  %v1012 = vmax.f32 %v1010, %v1011
  %v1013 = vsub.f32 %v753, %v1012
  %v1014 = vmul.f32 %v1013, 1.442695
  %v1015 = vpow.pop %v1014
  %1016 = vmatpush.msra.mxu0 0.0
  %1017 = vmatpush.msra.mxu0 0.0
  %1018 = vmatpush.msra.mxu0 0.0
  %1019 = vmatpush.msra.mxu0 0.0
  %1020 = vmatpush.msra.mxu0 0.0
  %1021 = vmatpush.msra.mxu0 0.0
  %1022 = vmatpush.msra.mxu0 0.0
  %1023 = vmatpush.msra.mxu0 0.0
  %1024 = vmatpush.msra.mxu0 0.0
  %1025 = vmatpush.msra.mxu0 0.0
  %1026 = vmatpush.msra.mxu0 0.0
  %1027 = vmatpush.msra.mxu0 0.0
  %1028 = vmatpush.msra.mxu0 0.0
  %1029 = vmatpush.msra.mxu0 0.0
  %1030 = vmatpush.msra.mxu0 0.0
  %1031 = vmatpush.msra.mxu0 %v1015
  %1032 = vmatmul.f32.gmra.mxu0 %v149
  %v1033 = vpop.f32.mrf.mxu0
  %v1034 = vadd.f32 0.0, %v1033
  %1035 = vdwg.mxu0
  %v1036 = vlog2.pop %v1034
  %v1037 = vmul.f32 %v1036, 0.6931472
  %v1038 = vadd.f32 %v1012, %v1037
  %v1039 = vadd.f32 %v1038, %v997
  %v1040 = vsel %vm1000, 1, 0
  %v1041 = vperm.slane %v1040, 0
  %vm1042 = vcmp.eq.s32.totalorder %v1041, 1
  %v1043 = vsel %vm1042, %v1039, %v753
  %1044 = vmatpush.msra.mxu0 0.0
  %1045 = vmatpush.msra.mxu0 0.0
  %1046 = vmatpush.msra.mxu0 0.0
  %1047 = vmatpush.msra.mxu0 0.0
  %1048 = vmatpush.msra.mxu0 0.0
  %1049 = vmatpush.msra.mxu0 0.0
  %1050 = vmatpush.msra.mxu0 0.0
  %1051 = vmatpush.msra.mxu0 0.0
  %1052 = vmatpush.msra.mxu0 0.0
  %1053 = vmatpush.msra.mxu0 0.0
  %1054 = vmatpush.msra.mxu0 0.0
  %1055 = vmatpush.msra.mxu0 0.0
  %1056 = vmatpush.msra.mxu0 0.0
  %1057 = vmatpush.msra.mxu0 0.0
  %1058 = vmatpush.msra.mxu0 0.0
  %1059 = vmatpush.msra.mxu0 %v715
  %1060 = vmatmul.f32.gmra.mxu0 %v180
  %v1061 = vpop.f32.mrf.mxu0
  %v1062 = vadd.f32 0.0, %v1061
  %1063 = vdwg.mxu0
  %v1064 = vadd.f32 %v997, %v1062
  %v1065 = vmul.f32 %v1005, %v1064
  %v1066 = vsel %vm88, %v1065, 0.0
  %v1067 = vrot.slane %v1066, 4
  %v1068 = vadd.f32 %v1066, %v1067
  %v1069 = vrot.slane %v1068, 2
  %v1070 = vadd.f32 %v1068, %v1069
  %v1071 = vrot.slane %v1070, 1
  %v1072 = vadd.f32 %v1070, %v1071
  %v1073 = vsel %vm1000, %v1072, 0.0
  %v1074 = vadd.f32 %v784, %v1073
  %v1075 = vadd.f32 %v967, %v45
  %v1076 = vsel %vm88, %v1075, -inf
  %v1077 = vrot.slane %v1076, 4
  %v1078 = vmax.f32 %v1076, %v1077
  %v1079 = vrot.slane %v1078, 2
  %v1080 = vmax.f32 %v1078, %v1079
  %v1081 = vrot.slane %v1080, 1
  %v1082 = vmax.f32 %v1080, %v1081
  %vm1083 = vcmp.ge.f32.partialorder %v1075, %v1082
  %v1084 = vsel %vm1083, %v83, 8
  %v1085 = vsel %vm88, %v1084, 2147483647
  %v1086 = vrot.slane %v1085, 4
  %vm1087 = vcmp.lt.s32.totalorder %v1085, %v1086
  %v1088 = vsel %vm1087, %v1085, %v1086
  %v1089 = vrot.slane %v1088, 2
  %vm1090 = vcmp.lt.s32.totalorder %v1088, %v1089
  %v1091 = vsel %vm1090, %v1088, %v1089
  %v1092 = vrot.slane %v1091, 1
  %vm1093 = vcmp.lt.s32.totalorder %v1091, %v1092
  %v1094 = vsel %vm1093, %v1091, %v1092
  %v1095 = vadd.f32 %v967, %v50
  %v1096 = vsel %vm88, %v1095, -inf
  %v1097 = vrot.slane %v1096, 4
  %v1098 = vmax.f32 %v1096, %v1097
  %v1099 = vrot.slane %v1098, 2
  %v1100 = vmax.f32 %v1098, %v1099
  %v1101 = vrot.slane %v1100, 1
  %v1102 = vmax.f32 %v1100, %v1101
  %vm1103 = vcmp.ge.f32.partialorder %v1095, %v1102
  %v1104 = vsel %vm1103, %v83, 8
  %v1105 = vsel %vm88, %v1104, 2147483647
  %v1106 = vrot.slane %v1105, 4
  %vm1107 = vcmp.lt.s32.totalorder %v1105, %v1106
  %v1108 = vsel %vm1107, %v1105, %v1106
  %v1109 = vrot.slane %v1108, 2
  %vm1110 = vcmp.lt.s32.totalorder %v1108, %v1109
  %v1111 = vsel %vm1110, %v1108, %v1109
  %v1112 = vrot.slane %v1111, 1
  %vm1113 = vcmp.lt.s32.totalorder %v1111, %v1112
  %v1114 = vsel %vm1113, %v1111, %v1112
  %v1115 = vshll.u32 %v1114, 4
  %v1116 = vor.u32 %v1094, %v1115
  %v1117 = vadd.f32 %v967, %v55
  %v1118 = vsel %vm88, %v1117, -inf
  %v1119 = vrot.slane %v1118, 4
  %v1120 = vmax.f32 %v1118, %v1119
  %v1121 = vrot.slane %v1120, 2
  %v1122 = vmax.f32 %v1120, %v1121
  %v1123 = vrot.slane %v1122, 1
  %v1124 = vmax.f32 %v1122, %v1123
  %vm1125 = vcmp.ge.f32.partialorder %v1117, %v1124
  %v1126 = vsel %vm1125, %v83, 8
  %v1127 = vsel %vm88, %v1126, 2147483647
  %v1128 = vrot.slane %v1127, 4
  %vm1129 = vcmp.lt.s32.totalorder %v1127, %v1128
  %v1130 = vsel %vm1129, %v1127, %v1128
  %v1131 = vrot.slane %v1130, 2
  %vm1132 = vcmp.lt.s32.totalorder %v1130, %v1131
  %v1133 = vsel %vm1132, %v1130, %v1131
  %v1134 = vrot.slane %v1133, 1
  %vm1135 = vcmp.lt.s32.totalorder %v1133, %v1134
  %v1136 = vsel %vm1135, %v1133, %v1134
  %v1137 = vshll.u32 %v1136, 8
  %v1138 = vor.u32 %v1116, %v1137
  %v1139 = vadd.f32 %v967, %v60
  %v1140 = vsel %vm88, %v1139, -inf
  %v1141 = vrot.slane %v1140, 4
  %v1142 = vmax.f32 %v1140, %v1141
  %v1143 = vrot.slane %v1142, 2
  %v1144 = vmax.f32 %v1142, %v1143
  %v1145 = vrot.slane %v1144, 1
  %v1146 = vmax.f32 %v1144, %v1145
  %vm1147 = vcmp.ge.f32.partialorder %v1139, %v1146
  %v1148 = vsel %vm1147, %v83, 8
  %v1149 = vsel %vm88, %v1148, 2147483647
  %v1150 = vrot.slane %v1149, 4
  %vm1151 = vcmp.lt.s32.totalorder %v1149, %v1150
  %v1152 = vsel %vm1151, %v1149, %v1150
  %v1153 = vrot.slane %v1152, 2
  %vm1154 = vcmp.lt.s32.totalorder %v1152, %v1153
  %v1155 = vsel %vm1154, %v1152, %v1153
  %v1156 = vrot.slane %v1155, 1
  %vm1157 = vcmp.lt.s32.totalorder %v1155, %v1156
  %v1158 = vsel %vm1157, %v1155, %v1156
  %v1159 = vshll.u32 %v1158, 12
  %v1160 = vor.u32 %v1138, %v1159
  %v1161 = vadd.f32 %v967, %v65
  %v1162 = vsel %vm88, %v1161, -inf
  %v1163 = vrot.slane %v1162, 4
  %v1164 = vmax.f32 %v1162, %v1163
  %v1165 = vrot.slane %v1164, 2
  %v1166 = vmax.f32 %v1164, %v1165
  %v1167 = vrot.slane %v1166, 1
  %v1168 = vmax.f32 %v1166, %v1167
  %vm1169 = vcmp.ge.f32.partialorder %v1161, %v1168
  %v1170 = vsel %vm1169, %v83, 8
  %v1171 = vsel %vm88, %v1170, 2147483647
  %v1172 = vrot.slane %v1171, 4
  %vm1173 = vcmp.lt.s32.totalorder %v1171, %v1172
  %v1174 = vsel %vm1173, %v1171, %v1172
  %v1175 = vrot.slane %v1174, 2
  %vm1176 = vcmp.lt.s32.totalorder %v1174, %v1175
  %v1177 = vsel %vm1176, %v1174, %v1175
  %v1178 = vrot.slane %v1177, 1
  %vm1179 = vcmp.lt.s32.totalorder %v1177, %v1178
  %v1180 = vsel %vm1179, %v1177, %v1178
  %v1181 = vshll.u32 %v1180, 16
  %v1182 = vor.u32 %v1160, %v1181
  %v1183 = vadd.f32 %v967, %v70
  %v1184 = vsel %vm88, %v1183, -inf
  %v1185 = vrot.slane %v1184, 4
  %v1186 = vmax.f32 %v1184, %v1185
  %v1187 = vrot.slane %v1186, 2
  %v1188 = vmax.f32 %v1186, %v1187
  %v1189 = vrot.slane %v1188, 1
  %v1190 = vmax.f32 %v1188, %v1189
  %vm1191 = vcmp.ge.f32.partialorder %v1183, %v1190
  %v1192 = vsel %vm1191, %v83, 8
  %v1193 = vsel %vm88, %v1192, 2147483647
  %v1194 = vrot.slane %v1193, 4
  %vm1195 = vcmp.lt.s32.totalorder %v1193, %v1194
  %v1196 = vsel %vm1195, %v1193, %v1194
  %v1197 = vrot.slane %v1196, 2
  %vm1198 = vcmp.lt.s32.totalorder %v1196, %v1197
  %v1199 = vsel %vm1198, %v1196, %v1197
  %v1200 = vrot.slane %v1199, 1
  %vm1201 = vcmp.lt.s32.totalorder %v1199, %v1200
  %v1202 = vsel %vm1201, %v1199, %v1200
  %v1203 = vshll.u32 %v1202, 20
  %v1204 = vor.u32 %v1182, %v1203
  %v1205 = vadd.f32 %v967, %v75
  %v1206 = vsel %vm88, %v1205, -inf
  %v1207 = vrot.slane %v1206, 4
  %v1208 = vmax.f32 %v1206, %v1207
  %v1209 = vrot.slane %v1208, 2
  %v1210 = vmax.f32 %v1208, %v1209
  %v1211 = vrot.slane %v1210, 1
  %v1212 = vmax.f32 %v1210, %v1211
  %vm1213 = vcmp.ge.f32.partialorder %v1205, %v1212
  %v1214 = vsel %vm1213, %v83, 8
  %v1215 = vsel %vm88, %v1214, 2147483647
  %v1216 = vrot.slane %v1215, 4
  %vm1217 = vcmp.lt.s32.totalorder %v1215, %v1216
  %v1218 = vsel %vm1217, %v1215, %v1216
  %v1219 = vrot.slane %v1218, 2
  %vm1220 = vcmp.lt.s32.totalorder %v1218, %v1219
  %v1221 = vsel %vm1220, %v1218, %v1219
  %v1222 = vrot.slane %v1221, 1
  %vm1223 = vcmp.lt.s32.totalorder %v1221, %v1222
  %v1224 = vsel %vm1223, %v1221, %v1222
  %v1225 = vshll.u32 %v1224, 24
  %v1226 = vor.u32 %v1204, %v1225
  %v1227 = vadd.f32 %v967, %v80
  %v1228 = vsel %vm88, %v1227, -inf
  %v1229 = vrot.slane %v1228, 4
  %v1230 = vmax.f32 %v1228, %v1229
  %v1231 = vrot.slane %v1230, 2
  %v1232 = vmax.f32 %v1230, %v1231
  %v1233 = vrot.slane %v1232, 1
  %v1234 = vmax.f32 %v1232, %v1233
  %vm1235 = vcmp.ge.f32.partialorder %v1227, %v1234
  %v1236 = vsel %vm1235, %v83, 8
  %v1237 = vsel %vm88, %v1236, 2147483647
  %v1238 = vrot.slane %v1237, 4
  %vm1239 = vcmp.lt.s32.totalorder %v1237, %v1238
  %v1240 = vsel %vm1239, %v1237, %v1238
  %v1241 = vrot.slane %v1240, 2
  %vm1242 = vcmp.lt.s32.totalorder %v1240, %v1241
  %v1243 = vsel %vm1242, %v1240, %v1241
  %v1244 = vrot.slane %v1243, 1
  %vm1245 = vcmp.lt.s32.totalorder %v1243, %v1244
  %v1246 = vsel %vm1245, %v1243, %v1244
  %v1247 = vshll.u32 %v1246, 28
  %v1248 = vor.u32 %v1226, %v1247
  %v1249 = vsel %vm371, %v1082, %v1102
  %v1250 = vsel %vm373, %v1249, %v1124
  %v1251 = vsel %vm375, %v1250, %v1146
  %v1252 = vsel %vm377, %v1251, %v1168
  %v1253 = vsel %vm379, %v1252, %v1190
  %v1254 = vsel %vm381, %v1253, %v1212
  %v1255 = vsel %vm383, %v1254, %v1234
  %v1256 = vadd.f32 %v1255, %v997
  %v1257 = vsel %vm1042, %v1256, %v967
  %1258 = vst.msk [vmem:[%s9 + $0x3] sm:$0x1] %vm387, %v1248
  %vm1259 = vcmp.eq.s32.totalorder %v96, 4
  %v1260 = vsel %vm1259, 1, 0
  %v1261 = vcvt.s32.f32 %v1260
  %v1262 = vmul.f32 %v1005, %v1261
  %v1263 = vadd.f32 %v973, %v1262
  %s1264 = scalar_lea.vmem %s0, 8
  %v1265 = vld [vmem:[%s1264] sm:$0x3]
  %v1267 = vsel %vm104, %v1265, 0
  %1269 = vmatpush.xpose.msra.mxu0 0.0
  %1270 = vmatpush.xpose.msra.mxu0 0.0
  %1271 = vmatpush.xpose.msra.mxu0 0.0
  %1272 = vmatpush.xpose.msra.mxu0 0.0
  %1273 = vmatpush.xpose.msra.mxu0 0.0
  %1274 = vmatpush.xpose.msra.mxu0 0.0
  %1275 = vmatpush.xpose.msra.mxu0 0.0
  %1276 = vmatpush.xpose.msra.mxu0 0.0
  %1277 = vmatpush.xpose.msra.mxu0 0.0
  %1278 = vmatpush.xpose.msra.mxu0 0.0
  %1279 = vmatpush.xpose.msra.mxu0 0.0
  %1280 = vmatpush.xpose.msra.mxu0 0.0
  %1281 = vmatpush.xpose.msra.mxu0 0.0
  %1282 = vmatpush.xpose.msra.mxu0 0.0
  %1283 = vmatpush.xpose.msra.mxu0 0.0
  %1284 = vmatpush.xpose.msra.mxu0 %v1267
  %1285 = vmatmul.f32.gmra.mxu0 %v106
  %v1286 = vpop.f32.mrf.mxu0
  %v1287 = vadd.f32 %v102, %v1286
  %1288 = vdwg.mxu0
  %v1289 = vld [vmem:[%s2 + $0x4] sm:$0x1]
  %vm1290 = vcmp.gt.f32.partialorder %v1289, 0.0
  %v1291 = vld [vmem:[%s1 + $0x4] sm:$0x1]
  %v1292 = vperm.slane %v1291, 0
  %vm1293 = vcmp.eq.s32.totalorder %v83, %v1292
  %v1294 = vsel %vm1293, 1, 0
  %v1295 = vcvt.s32.f32 %v1294
  %v1296 = vsel %vm88, %v1043, -inf
  %v1297 = vrot.slane %v1296, 4
  %v1298 = vmax.f32 %v1296, %v1297
  %v1299 = vrot.slane %v1298, 2
  %v1300 = vmax.f32 %v1298, %v1299
  %v1301 = vrot.slane %v1300, 1
  %v1302 = vmax.f32 %v1300, %v1301
  %v1303 = vsub.f32 %v1043, %v1302
  %v1304 = vmul.f32 %v1303, 1.442695
  %v1305 = vpow.pop %v1304
  %1306 = vmatpush.msra.mxu0 0.0
  %1307 = vmatpush.msra.mxu0 0.0
  %1308 = vmatpush.msra.mxu0 0.0
  %1309 = vmatpush.msra.mxu0 0.0
  %1310 = vmatpush.msra.mxu0 0.0
  %1311 = vmatpush.msra.mxu0 0.0
  %1312 = vmatpush.msra.mxu0 0.0
  %1313 = vmatpush.msra.mxu0 0.0
  %1314 = vmatpush.msra.mxu0 0.0
  %1315 = vmatpush.msra.mxu0 0.0
  %1316 = vmatpush.msra.mxu0 0.0
  %1317 = vmatpush.msra.mxu0 0.0
  %1318 = vmatpush.msra.mxu0 0.0
  %1319 = vmatpush.msra.mxu0 0.0
  %1320 = vmatpush.msra.mxu0 0.0
  %1321 = vmatpush.msra.mxu0 %v1305
  %1322 = vmatmul.f32.gmra.mxu0 %v149
  %v1323 = vpop.f32.mrf.mxu0
  %v1324 = vadd.f32 0.0, %v1323
  %1325 = vdwg.mxu0
  %v1326 = vlog2.pop %v1324
  %v1327 = vmul.f32 %v1326, 0.6931472
  %v1328 = vadd.f32 %v1302, %v1327
  %v1329 = vadd.f32 %v1328, %v1287
  %v1330 = vsel %vm1290, 1, 0
  %v1331 = vperm.slane %v1330, 0
  %vm1332 = vcmp.eq.s32.totalorder %v1331, 1
  %v1333 = vsel %vm1332, %v1329, %v1043
  %1334 = vmatpush.msra.mxu0 0.0
  %1335 = vmatpush.msra.mxu0 0.0
  %1336 = vmatpush.msra.mxu0 0.0
  %1337 = vmatpush.msra.mxu0 0.0
  %1338 = vmatpush.msra.mxu0 0.0
  %1339 = vmatpush.msra.mxu0 0.0
  %1340 = vmatpush.msra.mxu0 0.0
  %1341 = vmatpush.msra.mxu0 0.0
  %1342 = vmatpush.msra.mxu0 0.0
  %1343 = vmatpush.msra.mxu0 0.0
  %1344 = vmatpush.msra.mxu0 0.0
  %1345 = vmatpush.msra.mxu0 0.0
  %1346 = vmatpush.msra.mxu0 0.0
  %1347 = vmatpush.msra.mxu0 0.0
  %1348 = vmatpush.msra.mxu0 0.0
  %1349 = vmatpush.msra.mxu0 %v1005
  %1350 = vmatmul.f32.gmra.mxu0 %v180
  %v1351 = vpop.f32.mrf.mxu0
  %v1352 = vadd.f32 0.0, %v1351
  %1353 = vdwg.mxu0
  %v1354 = vadd.f32 %v1287, %v1352
  %v1355 = vmul.f32 %v1295, %v1354
  %v1356 = vsel %vm88, %v1355, 0.0
  %v1357 = vrot.slane %v1356, 4
  %v1358 = vadd.f32 %v1356, %v1357
  %v1359 = vrot.slane %v1358, 2
  %v1360 = vadd.f32 %v1358, %v1359
  %v1361 = vrot.slane %v1360, 1
  %v1362 = vadd.f32 %v1360, %v1361
  %v1363 = vsel %vm1290, %v1362, 0.0
  %v1364 = vadd.f32 %v1074, %v1363
  %v1365 = vadd.f32 %v1257, %v45
  %v1366 = vsel %vm88, %v1365, -inf
  %v1367 = vrot.slane %v1366, 4
  %v1368 = vmax.f32 %v1366, %v1367
  %v1369 = vrot.slane %v1368, 2
  %v1370 = vmax.f32 %v1368, %v1369
  %v1371 = vrot.slane %v1370, 1
  %v1372 = vmax.f32 %v1370, %v1371
  %vm1373 = vcmp.ge.f32.partialorder %v1365, %v1372
  %v1374 = vsel %vm1373, %v83, 8
  %v1375 = vsel %vm88, %v1374, 2147483647
  %v1376 = vrot.slane %v1375, 4
  %vm1377 = vcmp.lt.s32.totalorder %v1375, %v1376
  %v1378 = vsel %vm1377, %v1375, %v1376
  %v1379 = vrot.slane %v1378, 2
  %vm1380 = vcmp.lt.s32.totalorder %v1378, %v1379
  %v1381 = vsel %vm1380, %v1378, %v1379
  %v1382 = vrot.slane %v1381, 1
  %vm1383 = vcmp.lt.s32.totalorder %v1381, %v1382
  %v1384 = vsel %vm1383, %v1381, %v1382
  %v1385 = vadd.f32 %v1257, %v50
  %v1386 = vsel %vm88, %v1385, -inf
  %v1387 = vrot.slane %v1386, 4
  %v1388 = vmax.f32 %v1386, %v1387
  %v1389 = vrot.slane %v1388, 2
  %v1390 = vmax.f32 %v1388, %v1389
  %v1391 = vrot.slane %v1390, 1
  %v1392 = vmax.f32 %v1390, %v1391
  %vm1393 = vcmp.ge.f32.partialorder %v1385, %v1392
  %v1394 = vsel %vm1393, %v83, 8
  %v1395 = vsel %vm88, %v1394, 2147483647
  %v1396 = vrot.slane %v1395, 4
  %vm1397 = vcmp.lt.s32.totalorder %v1395, %v1396
  %v1398 = vsel %vm1397, %v1395, %v1396
  %v1399 = vrot.slane %v1398, 2
  %vm1400 = vcmp.lt.s32.totalorder %v1398, %v1399
  %v1401 = vsel %vm1400, %v1398, %v1399
  %v1402 = vrot.slane %v1401, 1
  %vm1403 = vcmp.lt.s32.totalorder %v1401, %v1402
  %v1404 = vsel %vm1403, %v1401, %v1402
  %v1405 = vshll.u32 %v1404, 4
  %v1406 = vor.u32 %v1384, %v1405
  %v1407 = vadd.f32 %v1257, %v55
  %v1408 = vsel %vm88, %v1407, -inf
  %v1409 = vrot.slane %v1408, 4
  %v1410 = vmax.f32 %v1408, %v1409
  %v1411 = vrot.slane %v1410, 2
  %v1412 = vmax.f32 %v1410, %v1411
  %v1413 = vrot.slane %v1412, 1
  %v1414 = vmax.f32 %v1412, %v1413
  %vm1415 = vcmp.ge.f32.partialorder %v1407, %v1414
  %v1416 = vsel %vm1415, %v83, 8
  %v1417 = vsel %vm88, %v1416, 2147483647
  %v1418 = vrot.slane %v1417, 4
  %vm1419 = vcmp.lt.s32.totalorder %v1417, %v1418
  %v1420 = vsel %vm1419, %v1417, %v1418
  %v1421 = vrot.slane %v1420, 2
  %vm1422 = vcmp.lt.s32.totalorder %v1420, %v1421
  %v1423 = vsel %vm1422, %v1420, %v1421
  %v1424 = vrot.slane %v1423, 1
  %vm1425 = vcmp.lt.s32.totalorder %v1423, %v1424
  %v1426 = vsel %vm1425, %v1423, %v1424
  %v1427 = vshll.u32 %v1426, 8
  %v1428 = vor.u32 %v1406, %v1427
  %v1429 = vadd.f32 %v1257, %v60
  %v1430 = vsel %vm88, %v1429, -inf
  %v1431 = vrot.slane %v1430, 4
  %v1432 = vmax.f32 %v1430, %v1431
  %v1433 = vrot.slane %v1432, 2
  %v1434 = vmax.f32 %v1432, %v1433
  %v1435 = vrot.slane %v1434, 1
  %v1436 = vmax.f32 %v1434, %v1435
  %vm1437 = vcmp.ge.f32.partialorder %v1429, %v1436
  %v1438 = vsel %vm1437, %v83, 8
  %v1439 = vsel %vm88, %v1438, 2147483647
  %v1440 = vrot.slane %v1439, 4
  %vm1441 = vcmp.lt.s32.totalorder %v1439, %v1440
  %v1442 = vsel %vm1441, %v1439, %v1440
  %v1443 = vrot.slane %v1442, 2
  %vm1444 = vcmp.lt.s32.totalorder %v1442, %v1443
  %v1445 = vsel %vm1444, %v1442, %v1443
  %v1446 = vrot.slane %v1445, 1
  %vm1447 = vcmp.lt.s32.totalorder %v1445, %v1446
  %v1448 = vsel %vm1447, %v1445, %v1446
  %v1449 = vshll.u32 %v1448, 12
  %v1450 = vor.u32 %v1428, %v1449
  %v1451 = vadd.f32 %v1257, %v65
  %v1452 = vsel %vm88, %v1451, -inf
  %v1453 = vrot.slane %v1452, 4
  %v1454 = vmax.f32 %v1452, %v1453
  %v1455 = vrot.slane %v1454, 2
  %v1456 = vmax.f32 %v1454, %v1455
  %v1457 = vrot.slane %v1456, 1
  %v1458 = vmax.f32 %v1456, %v1457
  %vm1459 = vcmp.ge.f32.partialorder %v1451, %v1458
  %v1460 = vsel %vm1459, %v83, 8
  %v1461 = vsel %vm88, %v1460, 2147483647
  %v1462 = vrot.slane %v1461, 4
  %vm1463 = vcmp.lt.s32.totalorder %v1461, %v1462
  %v1464 = vsel %vm1463, %v1461, %v1462
  %v1465 = vrot.slane %v1464, 2
  %vm1466 = vcmp.lt.s32.totalorder %v1464, %v1465
  %v1467 = vsel %vm1466, %v1464, %v1465
  %v1468 = vrot.slane %v1467, 1
  %vm1469 = vcmp.lt.s32.totalorder %v1467, %v1468
  %v1470 = vsel %vm1469, %v1467, %v1468
  %v1471 = vshll.u32 %v1470, 16
  %v1472 = vor.u32 %v1450, %v1471
  %v1473 = vadd.f32 %v1257, %v70
  %v1474 = vsel %vm88, %v1473, -inf
  %v1475 = vrot.slane %v1474, 4
  %v1476 = vmax.f32 %v1474, %v1475
  %v1477 = vrot.slane %v1476, 2
  %v1478 = vmax.f32 %v1476, %v1477
  %v1479 = vrot.slane %v1478, 1
  %v1480 = vmax.f32 %v1478, %v1479
  %vm1481 = vcmp.ge.f32.partialorder %v1473, %v1480
  %v1482 = vsel %vm1481, %v83, 8
  %v1483 = vsel %vm88, %v1482, 2147483647
  %v1484 = vrot.slane %v1483, 4
  %vm1485 = vcmp.lt.s32.totalorder %v1483, %v1484
  %v1486 = vsel %vm1485, %v1483, %v1484
  %v1487 = vrot.slane %v1486, 2
  %vm1488 = vcmp.lt.s32.totalorder %v1486, %v1487
  %v1489 = vsel %vm1488, %v1486, %v1487
  %v1490 = vrot.slane %v1489, 1
  %vm1491 = vcmp.lt.s32.totalorder %v1489, %v1490
  %v1492 = vsel %vm1491, %v1489, %v1490
  %v1493 = vshll.u32 %v1492, 20
  %v1494 = vor.u32 %v1472, %v1493
  %v1495 = vadd.f32 %v1257, %v75
  %v1496 = vsel %vm88, %v1495, -inf
  %v1497 = vrot.slane %v1496, 4
  %v1498 = vmax.f32 %v1496, %v1497
  %v1499 = vrot.slane %v1498, 2
  %v1500 = vmax.f32 %v1498, %v1499
  %v1501 = vrot.slane %v1500, 1
  %v1502 = vmax.f32 %v1500, %v1501
  %vm1503 = vcmp.ge.f32.partialorder %v1495, %v1502
  %v1504 = vsel %vm1503, %v83, 8
  %v1505 = vsel %vm88, %v1504, 2147483647
  %v1506 = vrot.slane %v1505, 4
  %vm1507 = vcmp.lt.s32.totalorder %v1505, %v1506
  %v1508 = vsel %vm1507, %v1505, %v1506
  %v1509 = vrot.slane %v1508, 2
  %vm1510 = vcmp.lt.s32.totalorder %v1508, %v1509
  %v1511 = vsel %vm1510, %v1508, %v1509
  %v1512 = vrot.slane %v1511, 1
  %vm1513 = vcmp.lt.s32.totalorder %v1511, %v1512
  %v1514 = vsel %vm1513, %v1511, %v1512
  %v1515 = vshll.u32 %v1514, 24
  %v1516 = vor.u32 %v1494, %v1515
  %v1517 = vadd.f32 %v1257, %v80
  %v1518 = vsel %vm88, %v1517, -inf
  %v1519 = vrot.slane %v1518, 4
  %v1520 = vmax.f32 %v1518, %v1519
  %v1521 = vrot.slane %v1520, 2
  %v1522 = vmax.f32 %v1520, %v1521
  %v1523 = vrot.slane %v1522, 1
  %v1524 = vmax.f32 %v1522, %v1523
  %vm1525 = vcmp.ge.f32.partialorder %v1517, %v1524
  %v1526 = vsel %vm1525, %v83, 8
  %v1527 = vsel %vm88, %v1526, 2147483647
  %v1528 = vrot.slane %v1527, 4
  %vm1529 = vcmp.lt.s32.totalorder %v1527, %v1528
  %v1530 = vsel %vm1529, %v1527, %v1528
  %v1531 = vrot.slane %v1530, 2
  %vm1532 = vcmp.lt.s32.totalorder %v1530, %v1531
  %v1533 = vsel %vm1532, %v1530, %v1531
  %v1534 = vrot.slane %v1533, 1
  %vm1535 = vcmp.lt.s32.totalorder %v1533, %v1534
  %v1536 = vsel %vm1535, %v1533, %v1534
  %v1537 = vshll.u32 %v1536, 28
  %v1538 = vor.u32 %v1516, %v1537
  %v1539 = vsel %vm371, %v1372, %v1392
  %v1540 = vsel %vm373, %v1539, %v1414
  %v1541 = vsel %vm375, %v1540, %v1436
  %v1542 = vsel %vm377, %v1541, %v1458
  %v1543 = vsel %vm379, %v1542, %v1480
  %v1544 = vsel %vm381, %v1543, %v1502
  %v1545 = vsel %vm383, %v1544, %v1524
  %v1546 = vadd.f32 %v1545, %v1287
  %v1547 = vsel %vm1332, %v1546, %v1257
  %1548 = vst.msk [vmem:[%s9 + $0x4] sm:$0x1] %vm387, %v1538
  %vm1549 = vcmp.eq.s32.totalorder %v96, 5
  %v1550 = vsel %vm1549, 1, 0
  %v1551 = vcvt.s32.f32 %v1550
  %v1552 = vmul.f32 %v1295, %v1551
  %v1553 = vadd.f32 %v1263, %v1552
  %s1554 = scalar_lea.vmem %s0, 10
  %v1555 = vld [vmem:[%s1554] sm:$0x3]
  %v1557 = vsel %vm104, %v1555, 0
  %1559 = vmatpush.xpose.msra.mxu0 0.0
  %1560 = vmatpush.xpose.msra.mxu0 0.0
  %1561 = vmatpush.xpose.msra.mxu0 0.0
  %1562 = vmatpush.xpose.msra.mxu0 0.0
  %1563 = vmatpush.xpose.msra.mxu0 0.0
  %1564 = vmatpush.xpose.msra.mxu0 0.0
  %1565 = vmatpush.xpose.msra.mxu0 0.0
  %1566 = vmatpush.xpose.msra.mxu0 0.0
  %1567 = vmatpush.xpose.msra.mxu0 0.0
  %1568 = vmatpush.xpose.msra.mxu0 0.0
  %1569 = vmatpush.xpose.msra.mxu0 0.0
  %1570 = vmatpush.xpose.msra.mxu0 0.0
  %1571 = vmatpush.xpose.msra.mxu0 0.0
  %1572 = vmatpush.xpose.msra.mxu0 0.0
  %1573 = vmatpush.xpose.msra.mxu0 0.0
  %1574 = vmatpush.xpose.msra.mxu0 %v1557
  %1575 = vmatmul.f32.gmra.mxu0 %v106
  %v1576 = vpop.f32.mrf.mxu0
  %v1577 = vadd.f32 %v102, %v1576
  %1578 = vdwg.mxu0
  %v1579 = vld [vmem:[%s2 + $0x5] sm:$0x1]
  %vm1580 = vcmp.gt.f32.partialorder %v1579, 0.0
  %v1581 = vld [vmem:[%s1 + $0x5] sm:$0x1]
  %v1582 = vperm.slane %v1581, 0
  %vm1583 = vcmp.eq.s32.totalorder %v83, %v1582
  %v1584 = vsel %vm1583, 1, 0
  %v1585 = vcvt.s32.f32 %v1584
  %v1586 = vsel %vm88, %v1333, -inf
  %v1587 = vrot.slane %v1586, 4
  %v1588 = vmax.f32 %v1586, %v1587
  %v1589 = vrot.slane %v1588, 2
  %v1590 = vmax.f32 %v1588, %v1589
  %v1591 = vrot.slane %v1590, 1
  %v1592 = vmax.f32 %v1590, %v1591
  %v1593 = vsub.f32 %v1333, %v1592
  %v1594 = vmul.f32 %v1593, 1.442695
  %v1595 = vpow.pop %v1594
  %1596 = vmatpush.msra.mxu0 0.0
  %1597 = vmatpush.msra.mxu0 0.0
  %1598 = vmatpush.msra.mxu0 0.0
  %1599 = vmatpush.msra.mxu0 0.0
  %1600 = vmatpush.msra.mxu0 0.0
  %1601 = vmatpush.msra.mxu0 0.0
  %1602 = vmatpush.msra.mxu0 0.0
  %1603 = vmatpush.msra.mxu0 0.0
  %1604 = vmatpush.msra.mxu0 0.0
  %1605 = vmatpush.msra.mxu0 0.0
  %1606 = vmatpush.msra.mxu0 0.0
  %1607 = vmatpush.msra.mxu0 0.0
  %1608 = vmatpush.msra.mxu0 0.0
  %1609 = vmatpush.msra.mxu0 0.0
  %1610 = vmatpush.msra.mxu0 0.0
  %1611 = vmatpush.msra.mxu0 %v1595
  %1612 = vmatmul.f32.gmra.mxu0 %v149
  %v1613 = vpop.f32.mrf.mxu0
  %v1614 = vadd.f32 0.0, %v1613
  %1615 = vdwg.mxu0
  %v1616 = vlog2.pop %v1614
  %v1617 = vmul.f32 %v1616, 0.6931472
  %v1618 = vadd.f32 %v1592, %v1617
  %v1619 = vadd.f32 %v1618, %v1577
  %v1620 = vsel %vm1580, 1, 0
  %v1621 = vperm.slane %v1620, 0
  %vm1622 = vcmp.eq.s32.totalorder %v1621, 1
  %v1623 = vsel %vm1622, %v1619, %v1333
  %1624 = vmatpush.msra.mxu0 0.0
  %1625 = vmatpush.msra.mxu0 0.0
  %1626 = vmatpush.msra.mxu0 0.0
  %1627 = vmatpush.msra.mxu0 0.0
  %1628 = vmatpush.msra.mxu0 0.0
  %1629 = vmatpush.msra.mxu0 0.0
  %1630 = vmatpush.msra.mxu0 0.0
  %1631 = vmatpush.msra.mxu0 0.0
  %1632 = vmatpush.msra.mxu0 0.0
  %1633 = vmatpush.msra.mxu0 0.0
  %1634 = vmatpush.msra.mxu0 0.0
  %1635 = vmatpush.msra.mxu0 0.0
  %1636 = vmatpush.msra.mxu0 0.0
  %1637 = vmatpush.msra.mxu0 0.0
  %1638 = vmatpush.msra.mxu0 0.0
  %1639 = vmatpush.msra.mxu0 %v1295
  %1640 = vmatmul.f32.gmra.mxu0 %v180
  %v1641 = vpop.f32.mrf.mxu0
  %v1642 = vadd.f32 0.0, %v1641
  %1643 = vdwg.mxu0
  %v1644 = vadd.f32 %v1577, %v1642
  %v1645 = vmul.f32 %v1585, %v1644
  %v1646 = vsel %vm88, %v1645, 0.0
  %v1647 = vrot.slane %v1646, 4
  %v1648 = vadd.f32 %v1646, %v1647
  %v1649 = vrot.slane %v1648, 2
  %v1650 = vadd.f32 %v1648, %v1649
  %v1651 = vrot.slane %v1650, 1
  %v1652 = vadd.f32 %v1650, %v1651
  %v1653 = vsel %vm1580, %v1652, 0.0
  %v1654 = vadd.f32 %v1364, %v1653
  %v1655 = vadd.f32 %v1547, %v45
  %v1656 = vsel %vm88, %v1655, -inf
  %v1657 = vrot.slane %v1656, 4
  %v1658 = vmax.f32 %v1656, %v1657
  %v1659 = vrot.slane %v1658, 2
  %v1660 = vmax.f32 %v1658, %v1659
  %v1661 = vrot.slane %v1660, 1
  %v1662 = vmax.f32 %v1660, %v1661
  %vm1663 = vcmp.ge.f32.partialorder %v1655, %v1662
  %v1664 = vsel %vm1663, %v83, 8
  %v1665 = vsel %vm88, %v1664, 2147483647
  %v1666 = vrot.slane %v1665, 4
  %vm1667 = vcmp.lt.s32.totalorder %v1665, %v1666
  %v1668 = vsel %vm1667, %v1665, %v1666
  %v1669 = vrot.slane %v1668, 2
  %vm1670 = vcmp.lt.s32.totalorder %v1668, %v1669
  %v1671 = vsel %vm1670, %v1668, %v1669
  %v1672 = vrot.slane %v1671, 1
  %vm1673 = vcmp.lt.s32.totalorder %v1671, %v1672
  %v1674 = vsel %vm1673, %v1671, %v1672
  %v1675 = vadd.f32 %v1547, %v50
  %v1676 = vsel %vm88, %v1675, -inf
  %v1677 = vrot.slane %v1676, 4
  %v1678 = vmax.f32 %v1676, %v1677
  %v1679 = vrot.slane %v1678, 2
  %v1680 = vmax.f32 %v1678, %v1679
  %v1681 = vrot.slane %v1680, 1
  %v1682 = vmax.f32 %v1680, %v1681
  %vm1683 = vcmp.ge.f32.partialorder %v1675, %v1682
  %v1684 = vsel %vm1683, %v83, 8
  %v1685 = vsel %vm88, %v1684, 2147483647
  %v1686 = vrot.slane %v1685, 4
  %vm1687 = vcmp.lt.s32.totalorder %v1685, %v1686
  %v1688 = vsel %vm1687, %v1685, %v1686
  %v1689 = vrot.slane %v1688, 2
  %vm1690 = vcmp.lt.s32.totalorder %v1688, %v1689
  %v1691 = vsel %vm1690, %v1688, %v1689
  %v1692 = vrot.slane %v1691, 1
  %vm1693 = vcmp.lt.s32.totalorder %v1691, %v1692
  %v1694 = vsel %vm1693, %v1691, %v1692
  %v1695 = vshll.u32 %v1694, 4
  %v1696 = vor.u32 %v1674, %v1695
  %v1697 = vadd.f32 %v1547, %v55
  %v1698 = vsel %vm88, %v1697, -inf
  %v1699 = vrot.slane %v1698, 4
  %v1700 = vmax.f32 %v1698, %v1699
  %v1701 = vrot.slane %v1700, 2
  %v1702 = vmax.f32 %v1700, %v1701
  %v1703 = vrot.slane %v1702, 1
  %v1704 = vmax.f32 %v1702, %v1703
  %vm1705 = vcmp.ge.f32.partialorder %v1697, %v1704
  %v1706 = vsel %vm1705, %v83, 8
  %v1707 = vsel %vm88, %v1706, 2147483647
  %v1708 = vrot.slane %v1707, 4
  %vm1709 = vcmp.lt.s32.totalorder %v1707, %v1708
  %v1710 = vsel %vm1709, %v1707, %v1708
  %v1711 = vrot.slane %v1710, 2
  %vm1712 = vcmp.lt.s32.totalorder %v1710, %v1711
  %v1713 = vsel %vm1712, %v1710, %v1711
  %v1714 = vrot.slane %v1713, 1
  %vm1715 = vcmp.lt.s32.totalorder %v1713, %v1714
  %v1716 = vsel %vm1715, %v1713, %v1714
  %v1717 = vshll.u32 %v1716, 8
  %v1718 = vor.u32 %v1696, %v1717
  %v1719 = vadd.f32 %v1547, %v60
  %v1720 = vsel %vm88, %v1719, -inf
  %v1721 = vrot.slane %v1720, 4
  %v1722 = vmax.f32 %v1720, %v1721
  %v1723 = vrot.slane %v1722, 2
  %v1724 = vmax.f32 %v1722, %v1723
  %v1725 = vrot.slane %v1724, 1
  %v1726 = vmax.f32 %v1724, %v1725
  %vm1727 = vcmp.ge.f32.partialorder %v1719, %v1726
  %v1728 = vsel %vm1727, %v83, 8
  %v1729 = vsel %vm88, %v1728, 2147483647
  %v1730 = vrot.slane %v1729, 4
  %vm1731 = vcmp.lt.s32.totalorder %v1729, %v1730
  %v1732 = vsel %vm1731, %v1729, %v1730
  %v1733 = vrot.slane %v1732, 2
  %vm1734 = vcmp.lt.s32.totalorder %v1732, %v1733
  %v1735 = vsel %vm1734, %v1732, %v1733
  %v1736 = vrot.slane %v1735, 1
  %vm1737 = vcmp.lt.s32.totalorder %v1735, %v1736
  %v1738 = vsel %vm1737, %v1735, %v1736
  %v1739 = vshll.u32 %v1738, 12
  %v1740 = vor.u32 %v1718, %v1739
  %v1741 = vadd.f32 %v1547, %v65
  %v1742 = vsel %vm88, %v1741, -inf
  %v1743 = vrot.slane %v1742, 4
  %v1744 = vmax.f32 %v1742, %v1743
  %v1745 = vrot.slane %v1744, 2
  %v1746 = vmax.f32 %v1744, %v1745
  %v1747 = vrot.slane %v1746, 1
  %v1748 = vmax.f32 %v1746, %v1747
  %vm1749 = vcmp.ge.f32.partialorder %v1741, %v1748
  %v1750 = vsel %vm1749, %v83, 8
  %v1751 = vsel %vm88, %v1750, 2147483647
  %v1752 = vrot.slane %v1751, 4
  %vm1753 = vcmp.lt.s32.totalorder %v1751, %v1752
  %v1754 = vsel %vm1753, %v1751, %v1752
  %v1755 = vrot.slane %v1754, 2
  %vm1756 = vcmp.lt.s32.totalorder %v1754, %v1755
  %v1757 = vsel %vm1756, %v1754, %v1755
  %v1758 = vrot.slane %v1757, 1
  %vm1759 = vcmp.lt.s32.totalorder %v1757, %v1758
  %v1760 = vsel %vm1759, %v1757, %v1758
  %v1761 = vshll.u32 %v1760, 16
  %v1762 = vor.u32 %v1740, %v1761
  %v1763 = vadd.f32 %v1547, %v70
  %v1764 = vsel %vm88, %v1763, -inf
  %v1765 = vrot.slane %v1764, 4
  %v1766 = vmax.f32 %v1764, %v1765
  %v1767 = vrot.slane %v1766, 2
  %v1768 = vmax.f32 %v1766, %v1767
  %v1769 = vrot.slane %v1768, 1
  %v1770 = vmax.f32 %v1768, %v1769
  %vm1771 = vcmp.ge.f32.partialorder %v1763, %v1770
  %v1772 = vsel %vm1771, %v83, 8
  %v1773 = vsel %vm88, %v1772, 2147483647
  %v1774 = vrot.slane %v1773, 4
  %vm1775 = vcmp.lt.s32.totalorder %v1773, %v1774
  %v1776 = vsel %vm1775, %v1773, %v1774
  %v1777 = vrot.slane %v1776, 2
  %vm1778 = vcmp.lt.s32.totalorder %v1776, %v1777
  %v1779 = vsel %vm1778, %v1776, %v1777
  %v1780 = vrot.slane %v1779, 1
  %vm1781 = vcmp.lt.s32.totalorder %v1779, %v1780
  %v1782 = vsel %vm1781, %v1779, %v1780
  %v1783 = vshll.u32 %v1782, 20
  %v1784 = vor.u32 %v1762, %v1783
  %v1785 = vadd.f32 %v1547, %v75
  %v1786 = vsel %vm88, %v1785, -inf
  %v1787 = vrot.slane %v1786, 4
  %v1788 = vmax.f32 %v1786, %v1787
  %v1789 = vrot.slane %v1788, 2
  %v1790 = vmax.f32 %v1788, %v1789
  %v1791 = vrot.slane %v1790, 1
  %v1792 = vmax.f32 %v1790, %v1791
  %vm1793 = vcmp.ge.f32.partialorder %v1785, %v1792
  %v1794 = vsel %vm1793, %v83, 8
  %v1795 = vsel %vm88, %v1794, 2147483647
  %v1796 = vrot.slane %v1795, 4
  %vm1797 = vcmp.lt.s32.totalorder %v1795, %v1796
  %v1798 = vsel %vm1797, %v1795, %v1796
  %v1799 = vrot.slane %v1798, 2
  %vm1800 = vcmp.lt.s32.totalorder %v1798, %v1799
  %v1801 = vsel %vm1800, %v1798, %v1799
  %v1802 = vrot.slane %v1801, 1
  %vm1803 = vcmp.lt.s32.totalorder %v1801, %v1802
  %v1804 = vsel %vm1803, %v1801, %v1802
  %v1805 = vshll.u32 %v1804, 24
  %v1806 = vor.u32 %v1784, %v1805
  %v1807 = vadd.f32 %v1547, %v80
  %v1808 = vsel %vm88, %v1807, -inf
  %v1809 = vrot.slane %v1808, 4
  %v1810 = vmax.f32 %v1808, %v1809
  %v1811 = vrot.slane %v1810, 2
  %v1812 = vmax.f32 %v1810, %v1811
  %v1813 = vrot.slane %v1812, 1
  %v1814 = vmax.f32 %v1812, %v1813
  %vm1815 = vcmp.ge.f32.partialorder %v1807, %v1814
  %v1816 = vsel %vm1815, %v83, 8
  %v1817 = vsel %vm88, %v1816, 2147483647
  %v1818 = vrot.slane %v1817, 4
  %vm1819 = vcmp.lt.s32.totalorder %v1817, %v1818
  %v1820 = vsel %vm1819, %v1817, %v1818
  %v1821 = vrot.slane %v1820, 2
  %vm1822 = vcmp.lt.s32.totalorder %v1820, %v1821
  %v1823 = vsel %vm1822, %v1820, %v1821
  %v1824 = vrot.slane %v1823, 1
  %vm1825 = vcmp.lt.s32.totalorder %v1823, %v1824
  %v1826 = vsel %vm1825, %v1823, %v1824
  %v1827 = vshll.u32 %v1826, 28
  %v1828 = vor.u32 %v1806, %v1827
  %v1829 = vsel %vm371, %v1662, %v1682
  %v1830 = vsel %vm373, %v1829, %v1704
  %v1831 = vsel %vm375, %v1830, %v1726
  %v1832 = vsel %vm377, %v1831, %v1748
  %v1833 = vsel %vm379, %v1832, %v1770
  %v1834 = vsel %vm381, %v1833, %v1792
  %v1835 = vsel %vm383, %v1834, %v1814
  %v1836 = vadd.f32 %v1835, %v1577
  %v1837 = vsel %vm1622, %v1836, %v1547
  %1838 = vst.msk [vmem:[%s9 + $0x5] sm:$0x1] %vm387, %v1828
  %vm1839 = vcmp.eq.s32.totalorder %v96, 6
  %v1840 = vsel %vm1839, 1, 0
  %v1841 = vcvt.s32.f32 %v1840
  %v1842 = vmul.f32 %v1585, %v1841
  %v1843 = vadd.f32 %v1553, %v1842
  %s1844 = scalar_lea.vmem %s0, 12
  %v1845 = vld [vmem:[%s1844] sm:$0x3]
  %v1847 = vsel %vm104, %v1845, 0
  %1849 = vmatpush.xpose.msra.mxu0 0.0
  %1850 = vmatpush.xpose.msra.mxu0 0.0
  %1851 = vmatpush.xpose.msra.mxu0 0.0
  %1852 = vmatpush.xpose.msra.mxu0 0.0
  %1853 = vmatpush.xpose.msra.mxu0 0.0
  %1854 = vmatpush.xpose.msra.mxu0 0.0
  %1855 = vmatpush.xpose.msra.mxu0 0.0
  %1856 = vmatpush.xpose.msra.mxu0 0.0
  %1857 = vmatpush.xpose.msra.mxu0 0.0
  %1858 = vmatpush.xpose.msra.mxu0 0.0
  %1859 = vmatpush.xpose.msra.mxu0 0.0
  %1860 = vmatpush.xpose.msra.mxu0 0.0
  %1861 = vmatpush.xpose.msra.mxu0 0.0
  %1862 = vmatpush.xpose.msra.mxu0 0.0
  %1863 = vmatpush.xpose.msra.mxu0 0.0
  %1864 = vmatpush.xpose.msra.mxu0 %v1847
  %1865 = vmatmul.f32.gmra.mxu0 %v106
  %v1866 = vpop.f32.mrf.mxu0
  %v1867 = vadd.f32 %v102, %v1866
  %1868 = vdwg.mxu0
  %v1869 = vld [vmem:[%s2 + $0x6] sm:$0x1]
  %vm1870 = vcmp.gt.f32.partialorder %v1869, 0.0
  %v1871 = vld [vmem:[%s1 + $0x6] sm:$0x1]
  %v1872 = vperm.slane %v1871, 0
  %vm1873 = vcmp.eq.s32.totalorder %v83, %v1872
  %v1874 = vsel %vm1873, 1, 0
  %v1875 = vcvt.s32.f32 %v1874
  %v1876 = vsel %vm88, %v1623, -inf
  %v1877 = vrot.slane %v1876, 4
  %v1878 = vmax.f32 %v1876, %v1877
  %v1879 = vrot.slane %v1878, 2
  %v1880 = vmax.f32 %v1878, %v1879
  %v1881 = vrot.slane %v1880, 1
  %v1882 = vmax.f32 %v1880, %v1881
  %v1883 = vsub.f32 %v1623, %v1882
  %v1884 = vmul.f32 %v1883, 1.442695
  %v1885 = vpow.pop %v1884
  %1886 = vmatpush.msra.mxu0 0.0
  %1887 = vmatpush.msra.mxu0 0.0
  %1888 = vmatpush.msra.mxu0 0.0
  %1889 = vmatpush.msra.mxu0 0.0
  %1890 = vmatpush.msra.mxu0 0.0
  %1891 = vmatpush.msra.mxu0 0.0
  %1892 = vmatpush.msra.mxu0 0.0
  %1893 = vmatpush.msra.mxu0 0.0
  %1894 = vmatpush.msra.mxu0 0.0
  %1895 = vmatpush.msra.mxu0 0.0
  %1896 = vmatpush.msra.mxu0 0.0
  %1897 = vmatpush.msra.mxu0 0.0
  %1898 = vmatpush.msra.mxu0 0.0
  %1899 = vmatpush.msra.mxu0 0.0
  %1900 = vmatpush.msra.mxu0 0.0
  %1901 = vmatpush.msra.mxu0 %v1885
  %1902 = vmatmul.f32.gmra.mxu0 %v149
  %v1903 = vpop.f32.mrf.mxu0
  %v1904 = vadd.f32 0.0, %v1903
  %1905 = vdwg.mxu0
  %v1906 = vlog2.pop %v1904
  %v1907 = vmul.f32 %v1906, 0.6931472
  %v1908 = vadd.f32 %v1882, %v1907
  %v1909 = vadd.f32 %v1908, %v1867
  %v1910 = vsel %vm1870, 1, 0
  %v1911 = vperm.slane %v1910, 0
  %vm1912 = vcmp.eq.s32.totalorder %v1911, 1
  %v1913 = vsel %vm1912, %v1909, %v1623
  %1914 = vmatpush.msra.mxu0 0.0
  %1915 = vmatpush.msra.mxu0 0.0
  %1916 = vmatpush.msra.mxu0 0.0
  %1917 = vmatpush.msra.mxu0 0.0
  %1918 = vmatpush.msra.mxu0 0.0
  %1919 = vmatpush.msra.mxu0 0.0
  %1920 = vmatpush.msra.mxu0 0.0
  %1921 = vmatpush.msra.mxu0 0.0
  %1922 = vmatpush.msra.mxu0 0.0
  %1923 = vmatpush.msra.mxu0 0.0
  %1924 = vmatpush.msra.mxu0 0.0
  %1925 = vmatpush.msra.mxu0 0.0
  %1926 = vmatpush.msra.mxu0 0.0
  %1927 = vmatpush.msra.mxu0 0.0
  %1928 = vmatpush.msra.mxu0 0.0
  %1929 = vmatpush.msra.mxu0 %v1585
  %1930 = vmatmul.f32.gmra.mxu0 %v180
  %v1931 = vpop.f32.mrf.mxu0
  %v1932 = vadd.f32 0.0, %v1931
  %1933 = vdwg.mxu0
  %v1934 = vadd.f32 %v1867, %v1932
  %v1935 = vmul.f32 %v1875, %v1934
  %v1936 = vsel %vm88, %v1935, 0.0
  %v1937 = vrot.slane %v1936, 4
  %v1938 = vadd.f32 %v1936, %v1937
  %v1939 = vrot.slane %v1938, 2
  %v1940 = vadd.f32 %v1938, %v1939
  %v1941 = vrot.slane %v1940, 1
  %v1942 = vadd.f32 %v1940, %v1941
  %v1943 = vsel %vm1870, %v1942, 0.0
  %v1944 = vadd.f32 %v1654, %v1943
  %v1945 = vadd.f32 %v1837, %v45
  %v1946 = vsel %vm88, %v1945, -inf
  %v1947 = vrot.slane %v1946, 4
  %v1948 = vmax.f32 %v1946, %v1947
  %v1949 = vrot.slane %v1948, 2
  %v1950 = vmax.f32 %v1948, %v1949
  %v1951 = vrot.slane %v1950, 1
  %v1952 = vmax.f32 %v1950, %v1951
  %vm1953 = vcmp.ge.f32.partialorder %v1945, %v1952
  %v1954 = vsel %vm1953, %v83, 8
  %v1955 = vsel %vm88, %v1954, 2147483647
  %v1956 = vrot.slane %v1955, 4
  %vm1957 = vcmp.lt.s32.totalorder %v1955, %v1956
  %v1958 = vsel %vm1957, %v1955, %v1956
  %v1959 = vrot.slane %v1958, 2
  %vm1960 = vcmp.lt.s32.totalorder %v1958, %v1959
  %v1961 = vsel %vm1960, %v1958, %v1959
  %v1962 = vrot.slane %v1961, 1
  %vm1963 = vcmp.lt.s32.totalorder %v1961, %v1962
  %v1964 = vsel %vm1963, %v1961, %v1962
  %v1965 = vadd.f32 %v1837, %v50
  %v1966 = vsel %vm88, %v1965, -inf
  %v1967 = vrot.slane %v1966, 4
  %v1968 = vmax.f32 %v1966, %v1967
  %v1969 = vrot.slane %v1968, 2
  %v1970 = vmax.f32 %v1968, %v1969
  %v1971 = vrot.slane %v1970, 1
  %v1972 = vmax.f32 %v1970, %v1971
  %vm1973 = vcmp.ge.f32.partialorder %v1965, %v1972
  %v1974 = vsel %vm1973, %v83, 8
  %v1975 = vsel %vm88, %v1974, 2147483647
  %v1976 = vrot.slane %v1975, 4
  %vm1977 = vcmp.lt.s32.totalorder %v1975, %v1976
  %v1978 = vsel %vm1977, %v1975, %v1976
  %v1979 = vrot.slane %v1978, 2
  %vm1980 = vcmp.lt.s32.totalorder %v1978, %v1979
  %v1981 = vsel %vm1980, %v1978, %v1979
  %v1982 = vrot.slane %v1981, 1
  %vm1983 = vcmp.lt.s32.totalorder %v1981, %v1982
  %v1984 = vsel %vm1983, %v1981, %v1982
  %v1985 = vshll.u32 %v1984, 4
  %v1986 = vor.u32 %v1964, %v1985
  %v1987 = vadd.f32 %v1837, %v55
  %v1988 = vsel %vm88, %v1987, -inf
  %v1989 = vrot.slane %v1988, 4
  %v1990 = vmax.f32 %v1988, %v1989
  %v1991 = vrot.slane %v1990, 2
  %v1992 = vmax.f32 %v1990, %v1991
  %v1993 = vrot.slane %v1992, 1
  %v1994 = vmax.f32 %v1992, %v1993
  %vm1995 = vcmp.ge.f32.partialorder %v1987, %v1994
  %v1996 = vsel %vm1995, %v83, 8
  %v1997 = vsel %vm88, %v1996, 2147483647
  %v1998 = vrot.slane %v1997, 4
  %vm1999 = vcmp.lt.s32.totalorder %v1997, %v1998
  %v2000 = vsel %vm1999, %v1997, %v1998
  %v2001 = vrot.slane %v2000, 2
  %vm2002 = vcmp.lt.s32.totalorder %v2000, %v2001
  %v2003 = vsel %vm2002, %v2000, %v2001
  %v2004 = vrot.slane %v2003, 1
  %vm2005 = vcmp.lt.s32.totalorder %v2003, %v2004
  %v2006 = vsel %vm2005, %v2003, %v2004
  %v2007 = vshll.u32 %v2006, 8
  %v2008 = vor.u32 %v1986, %v2007
  %v2009 = vadd.f32 %v1837, %v60
  %v2010 = vsel %vm88, %v2009, -inf
  %v2011 = vrot.slane %v2010, 4
  %v2012 = vmax.f32 %v2010, %v2011
  %v2013 = vrot.slane %v2012, 2
  %v2014 = vmax.f32 %v2012, %v2013
  %v2015 = vrot.slane %v2014, 1
  %v2016 = vmax.f32 %v2014, %v2015
  %vm2017 = vcmp.ge.f32.partialorder %v2009, %v2016
  %v2018 = vsel %vm2017, %v83, 8
  %v2019 = vsel %vm88, %v2018, 2147483647
  %v2020 = vrot.slane %v2019, 4
  %vm2021 = vcmp.lt.s32.totalorder %v2019, %v2020
  %v2022 = vsel %vm2021, %v2019, %v2020
  %v2023 = vrot.slane %v2022, 2
  %vm2024 = vcmp.lt.s32.totalorder %v2022, %v2023
  %v2025 = vsel %vm2024, %v2022, %v2023
  %v2026 = vrot.slane %v2025, 1
  %vm2027 = vcmp.lt.s32.totalorder %v2025, %v2026
  %v2028 = vsel %vm2027, %v2025, %v2026
  %v2029 = vshll.u32 %v2028, 12
  %v2030 = vor.u32 %v2008, %v2029
  %v2031 = vadd.f32 %v1837, %v65
  %v2032 = vsel %vm88, %v2031, -inf
  %v2033 = vrot.slane %v2032, 4
  %v2034 = vmax.f32 %v2032, %v2033
  %v2035 = vrot.slane %v2034, 2
  %v2036 = vmax.f32 %v2034, %v2035
  %v2037 = vrot.slane %v2036, 1
  %v2038 = vmax.f32 %v2036, %v2037
  %vm2039 = vcmp.ge.f32.partialorder %v2031, %v2038
  %v2040 = vsel %vm2039, %v83, 8
  %v2041 = vsel %vm88, %v2040, 2147483647
  %v2042 = vrot.slane %v2041, 4
  %vm2043 = vcmp.lt.s32.totalorder %v2041, %v2042
  %v2044 = vsel %vm2043, %v2041, %v2042
  %v2045 = vrot.slane %v2044, 2
  %vm2046 = vcmp.lt.s32.totalorder %v2044, %v2045
  %v2047 = vsel %vm2046, %v2044, %v2045
  %v2048 = vrot.slane %v2047, 1
  %vm2049 = vcmp.lt.s32.totalorder %v2047, %v2048
  %v2050 = vsel %vm2049, %v2047, %v2048
  %v2051 = vshll.u32 %v2050, 16
  %v2052 = vor.u32 %v2030, %v2051
  %v2053 = vadd.f32 %v1837, %v70
  %v2054 = vsel %vm88, %v2053, -inf
  %v2055 = vrot.slane %v2054, 4
  %v2056 = vmax.f32 %v2054, %v2055
  %v2057 = vrot.slane %v2056, 2
  %v2058 = vmax.f32 %v2056, %v2057
  %v2059 = vrot.slane %v2058, 1
  %v2060 = vmax.f32 %v2058, %v2059
  %vm2061 = vcmp.ge.f32.partialorder %v2053, %v2060
  %v2062 = vsel %vm2061, %v83, 8
  %v2063 = vsel %vm88, %v2062, 2147483647
  %v2064 = vrot.slane %v2063, 4
  %vm2065 = vcmp.lt.s32.totalorder %v2063, %v2064
  %v2066 = vsel %vm2065, %v2063, %v2064
  %v2067 = vrot.slane %v2066, 2
  %vm2068 = vcmp.lt.s32.totalorder %v2066, %v2067
  %v2069 = vsel %vm2068, %v2066, %v2067
  %v2070 = vrot.slane %v2069, 1
  %vm2071 = vcmp.lt.s32.totalorder %v2069, %v2070
  %v2072 = vsel %vm2071, %v2069, %v2070
  %v2073 = vshll.u32 %v2072, 20
  %v2074 = vor.u32 %v2052, %v2073
  %v2075 = vadd.f32 %v1837, %v75
  %v2076 = vsel %vm88, %v2075, -inf
  %v2077 = vrot.slane %v2076, 4
  %v2078 = vmax.f32 %v2076, %v2077
  %v2079 = vrot.slane %v2078, 2
  %v2080 = vmax.f32 %v2078, %v2079
  %v2081 = vrot.slane %v2080, 1
  %v2082 = vmax.f32 %v2080, %v2081
  %vm2083 = vcmp.ge.f32.partialorder %v2075, %v2082
  %v2084 = vsel %vm2083, %v83, 8
  %v2085 = vsel %vm88, %v2084, 2147483647
  %v2086 = vrot.slane %v2085, 4
  %vm2087 = vcmp.lt.s32.totalorder %v2085, %v2086
  %v2088 = vsel %vm2087, %v2085, %v2086
  %v2089 = vrot.slane %v2088, 2
  %vm2090 = vcmp.lt.s32.totalorder %v2088, %v2089
  %v2091 = vsel %vm2090, %v2088, %v2089
  %v2092 = vrot.slane %v2091, 1
  %vm2093 = vcmp.lt.s32.totalorder %v2091, %v2092
  %v2094 = vsel %vm2093, %v2091, %v2092
  %v2095 = vshll.u32 %v2094, 24
  %v2096 = vor.u32 %v2074, %v2095
  %v2097 = vadd.f32 %v1837, %v80
  %v2098 = vsel %vm88, %v2097, -inf
  %v2099 = vrot.slane %v2098, 4
  %v2100 = vmax.f32 %v2098, %v2099
  %v2101 = vrot.slane %v2100, 2
  %v2102 = vmax.f32 %v2100, %v2101
  %v2103 = vrot.slane %v2102, 1
  %v2104 = vmax.f32 %v2102, %v2103
  %vm2105 = vcmp.ge.f32.partialorder %v2097, %v2104
  %v2106 = vsel %vm2105, %v83, 8
  %v2107 = vsel %vm88, %v2106, 2147483647
  %v2108 = vrot.slane %v2107, 4
  %vm2109 = vcmp.lt.s32.totalorder %v2107, %v2108
  %v2110 = vsel %vm2109, %v2107, %v2108
  %v2111 = vrot.slane %v2110, 2
  %vm2112 = vcmp.lt.s32.totalorder %v2110, %v2111
  %v2113 = vsel %vm2112, %v2110, %v2111
  %v2114 = vrot.slane %v2113, 1
  %vm2115 = vcmp.lt.s32.totalorder %v2113, %v2114
  %v2116 = vsel %vm2115, %v2113, %v2114
  %v2117 = vshll.u32 %v2116, 28
  %v2118 = vor.u32 %v2096, %v2117
  %v2119 = vsel %vm371, %v1952, %v1972
  %v2120 = vsel %vm373, %v2119, %v1994
  %v2121 = vsel %vm375, %v2120, %v2016
  %v2122 = vsel %vm377, %v2121, %v2038
  %v2123 = vsel %vm379, %v2122, %v2060
  %v2124 = vsel %vm381, %v2123, %v2082
  %v2125 = vsel %vm383, %v2124, %v2104
  %v2126 = vadd.f32 %v2125, %v1867
  %v2127 = vsel %vm1912, %v2126, %v1837
  %2128 = vst.msk [vmem:[%s9 + $0x6] sm:$0x1] %vm387, %v2118
  %vm2129 = vcmp.eq.s32.totalorder %v96, 7
  %v2130 = vsel %vm2129, 1, 0
  %v2131 = vcvt.s32.f32 %v2130
  %v2132 = vmul.f32 %v1875, %v2131
  %v2133 = vadd.f32 %v1843, %v2132
  %s2134 = scalar_lea.vmem %s0, 14
  %v2135 = vld [vmem:[%s2134] sm:$0x3]
  %v2137 = vsel %vm104, %v2135, 0
  %2139 = vmatpush.xpose.msra.mxu0 0.0
  %2140 = vmatpush.xpose.msra.mxu0 0.0
  %2141 = vmatpush.xpose.msra.mxu0 0.0
  %2142 = vmatpush.xpose.msra.mxu0 0.0
  %2143 = vmatpush.xpose.msra.mxu0 0.0
  %2144 = vmatpush.xpose.msra.mxu0 0.0
  %2145 = vmatpush.xpose.msra.mxu0 0.0
  %2146 = vmatpush.xpose.msra.mxu0 0.0
  %2147 = vmatpush.xpose.msra.mxu0 0.0
  %2148 = vmatpush.xpose.msra.mxu0 0.0
  %2149 = vmatpush.xpose.msra.mxu0 0.0
  %2150 = vmatpush.xpose.msra.mxu0 0.0
  %2151 = vmatpush.xpose.msra.mxu0 0.0
  %2152 = vmatpush.xpose.msra.mxu0 0.0
  %2153 = vmatpush.xpose.msra.mxu0 0.0
  %2154 = vmatpush.xpose.msra.mxu0 %v2137
  %2155 = vmatmul.f32.gmra.mxu0 %v106
  %v2156 = vpop.f32.mrf.mxu0
  %v2157 = vadd.f32 %v102, %v2156
  %2158 = vdwg.mxu0
  %v2159 = vld [vmem:[%s2 + $0x7] sm:$0x1]
  %vm2160 = vcmp.gt.f32.partialorder %v2159, 0.0
  %v2161 = vld [vmem:[%s1 + $0x7] sm:$0x1]
  %v2162 = vperm.slane %v2161, 0
  %vm2163 = vcmp.eq.s32.totalorder %v83, %v2162
  %v2164 = vsel %vm2163, 1, 0
  %v2165 = vcvt.s32.f32 %v2164
  %v2166 = vsel %vm88, %v1913, -inf
  %v2167 = vrot.slane %v2166, 4
  %v2168 = vmax.f32 %v2166, %v2167
  %v2169 = vrot.slane %v2168, 2
  %v2170 = vmax.f32 %v2168, %v2169
  %v2171 = vrot.slane %v2170, 1
  %v2172 = vmax.f32 %v2170, %v2171
  %v2173 = vsub.f32 %v1913, %v2172
  %v2174 = vmul.f32 %v2173, 1.442695
  %v2175 = vpow.pop %v2174
  %2176 = vmatpush.msra.mxu0 0.0
  %2177 = vmatpush.msra.mxu0 0.0
  %2178 = vmatpush.msra.mxu0 0.0
  %2179 = vmatpush.msra.mxu0 0.0
  %2180 = vmatpush.msra.mxu0 0.0
  %2181 = vmatpush.msra.mxu0 0.0
  %2182 = vmatpush.msra.mxu0 0.0
  %2183 = vmatpush.msra.mxu0 0.0
  %2184 = vmatpush.msra.mxu0 0.0
  %2185 = vmatpush.msra.mxu0 0.0
  %2186 = vmatpush.msra.mxu0 0.0
  %2187 = vmatpush.msra.mxu0 0.0
  %2188 = vmatpush.msra.mxu0 0.0
  %2189 = vmatpush.msra.mxu0 0.0
  %2190 = vmatpush.msra.mxu0 0.0
  %2191 = vmatpush.msra.mxu0 %v2175
  %2192 = vmatmul.f32.gmra.mxu0 %v149
  %v2193 = vpop.f32.mrf.mxu0
  %v2194 = vadd.f32 0.0, %v2193
  %2195 = vdwg.mxu0
  %v2196 = vlog2.pop %v2194
  %v2197 = vmul.f32 %v2196, 0.6931472
  %v2198 = vadd.f32 %v2172, %v2197
  %v2199 = vadd.f32 %v2198, %v2157
  %v2200 = vsel %vm2160, 1, 0
  %v2201 = vperm.slane %v2200, 0
  %vm2202 = vcmp.eq.s32.totalorder %v2201, 1
  %v2203 = vsel %vm2202, %v2199, %v1913
  %2204 = vmatpush.msra.mxu0 0.0
  %2205 = vmatpush.msra.mxu0 0.0
  %2206 = vmatpush.msra.mxu0 0.0
  %2207 = vmatpush.msra.mxu0 0.0
  %2208 = vmatpush.msra.mxu0 0.0
  %2209 = vmatpush.msra.mxu0 0.0
  %2210 = vmatpush.msra.mxu0 0.0
  %2211 = vmatpush.msra.mxu0 0.0
  %2212 = vmatpush.msra.mxu0 0.0
  %2213 = vmatpush.msra.mxu0 0.0
  %2214 = vmatpush.msra.mxu0 0.0
  %2215 = vmatpush.msra.mxu0 0.0
  %2216 = vmatpush.msra.mxu0 0.0
  %2217 = vmatpush.msra.mxu0 0.0
  %2218 = vmatpush.msra.mxu0 0.0
  %2219 = vmatpush.msra.mxu0 %v1875
  %2220 = vmatmul.f32.gmra.mxu0 %v180
  %v2221 = vpop.f32.mrf.mxu0
  %v2222 = vadd.f32 0.0, %v2221
  %2223 = vdwg.mxu0
  %v2224 = vadd.f32 %v2157, %v2222
  %v2225 = vmul.f32 %v2165, %v2224
  %v2226 = vsel %vm88, %v2225, 0.0
  %v2227 = vrot.slane %v2226, 4
  %v2228 = vadd.f32 %v2226, %v2227
  %v2229 = vrot.slane %v2228, 2
  %v2230 = vadd.f32 %v2228, %v2229
  %v2231 = vrot.slane %v2230, 1
  %v2232 = vadd.f32 %v2230, %v2231
  %v2233 = vsel %vm2160, %v2232, 0.0
  %v2234 = vadd.f32 %v1944, %v2233
  %v2235 = vadd.f32 %v2127, %v45
  %v2236 = vsel %vm88, %v2235, -inf
  %v2237 = vrot.slane %v2236, 4
  %v2238 = vmax.f32 %v2236, %v2237
  %v2239 = vrot.slane %v2238, 2
  %v2240 = vmax.f32 %v2238, %v2239
  %v2241 = vrot.slane %v2240, 1
  %v2242 = vmax.f32 %v2240, %v2241
  %vm2243 = vcmp.ge.f32.partialorder %v2235, %v2242
  %v2244 = vsel %vm2243, %v83, 8
  %v2245 = vsel %vm88, %v2244, 2147483647
  %v2246 = vrot.slane %v2245, 4
  %vm2247 = vcmp.lt.s32.totalorder %v2245, %v2246
  %v2248 = vsel %vm2247, %v2245, %v2246
  %v2249 = vrot.slane %v2248, 2
  %vm2250 = vcmp.lt.s32.totalorder %v2248, %v2249
  %v2251 = vsel %vm2250, %v2248, %v2249
  %v2252 = vrot.slane %v2251, 1
  %vm2253 = vcmp.lt.s32.totalorder %v2251, %v2252
  %v2254 = vsel %vm2253, %v2251, %v2252
  %v2255 = vadd.f32 %v2127, %v50
  %v2256 = vsel %vm88, %v2255, -inf
  %v2257 = vrot.slane %v2256, 4
  %v2258 = vmax.f32 %v2256, %v2257
  %v2259 = vrot.slane %v2258, 2
  %v2260 = vmax.f32 %v2258, %v2259
  %v2261 = vrot.slane %v2260, 1
  %v2262 = vmax.f32 %v2260, %v2261
  %vm2263 = vcmp.ge.f32.partialorder %v2255, %v2262
  %v2264 = vsel %vm2263, %v83, 8
  %v2265 = vsel %vm88, %v2264, 2147483647
  %v2266 = vrot.slane %v2265, 4
  %vm2267 = vcmp.lt.s32.totalorder %v2265, %v2266
  %v2268 = vsel %vm2267, %v2265, %v2266
  %v2269 = vrot.slane %v2268, 2
  %vm2270 = vcmp.lt.s32.totalorder %v2268, %v2269
  %v2271 = vsel %vm2270, %v2268, %v2269
  %v2272 = vrot.slane %v2271, 1
  %vm2273 = vcmp.lt.s32.totalorder %v2271, %v2272
  %v2274 = vsel %vm2273, %v2271, %v2272
  %v2275 = vshll.u32 %v2274, 4
  %v2276 = vor.u32 %v2254, %v2275
  %v2277 = vadd.f32 %v2127, %v55
  %v2278 = vsel %vm88, %v2277, -inf
  %v2279 = vrot.slane %v2278, 4
  %v2280 = vmax.f32 %v2278, %v2279
  %v2281 = vrot.slane %v2280, 2
  %v2282 = vmax.f32 %v2280, %v2281
  %v2283 = vrot.slane %v2282, 1
  %v2284 = vmax.f32 %v2282, %v2283
  %vm2285 = vcmp.ge.f32.partialorder %v2277, %v2284
  %v2286 = vsel %vm2285, %v83, 8
  %v2287 = vsel %vm88, %v2286, 2147483647
  %v2288 = vrot.slane %v2287, 4
  %vm2289 = vcmp.lt.s32.totalorder %v2287, %v2288
  %v2290 = vsel %vm2289, %v2287, %v2288
  %v2291 = vrot.slane %v2290, 2
  %vm2292 = vcmp.lt.s32.totalorder %v2290, %v2291
  %v2293 = vsel %vm2292, %v2290, %v2291
  %v2294 = vrot.slane %v2293, 1
  %vm2295 = vcmp.lt.s32.totalorder %v2293, %v2294
  %v2296 = vsel %vm2295, %v2293, %v2294
  %v2297 = vshll.u32 %v2296, 8
  %v2298 = vor.u32 %v2276, %v2297
  %v2299 = vadd.f32 %v2127, %v60
  %v2300 = vsel %vm88, %v2299, -inf
  %v2301 = vrot.slane %v2300, 4
  %v2302 = vmax.f32 %v2300, %v2301
  %v2303 = vrot.slane %v2302, 2
  %v2304 = vmax.f32 %v2302, %v2303
  %v2305 = vrot.slane %v2304, 1
  %v2306 = vmax.f32 %v2304, %v2305
  %vm2307 = vcmp.ge.f32.partialorder %v2299, %v2306
  %v2308 = vsel %vm2307, %v83, 8
  %v2309 = vsel %vm88, %v2308, 2147483647
  %v2310 = vrot.slane %v2309, 4
  %vm2311 = vcmp.lt.s32.totalorder %v2309, %v2310
  %v2312 = vsel %vm2311, %v2309, %v2310
  %v2313 = vrot.slane %v2312, 2
  %vm2314 = vcmp.lt.s32.totalorder %v2312, %v2313
  %v2315 = vsel %vm2314, %v2312, %v2313
  %v2316 = vrot.slane %v2315, 1
  %vm2317 = vcmp.lt.s32.totalorder %v2315, %v2316
  %v2318 = vsel %vm2317, %v2315, %v2316
  %v2319 = vshll.u32 %v2318, 12
  %v2320 = vor.u32 %v2298, %v2319
  %v2321 = vadd.f32 %v2127, %v65
  %v2322 = vsel %vm88, %v2321, -inf
  %v2323 = vrot.slane %v2322, 4
  %v2324 = vmax.f32 %v2322, %v2323
  %v2325 = vrot.slane %v2324, 2
  %v2326 = vmax.f32 %v2324, %v2325
  %v2327 = vrot.slane %v2326, 1
  %v2328 = vmax.f32 %v2326, %v2327
  %vm2329 = vcmp.ge.f32.partialorder %v2321, %v2328
  %v2330 = vsel %vm2329, %v83, 8
  %v2331 = vsel %vm88, %v2330, 2147483647
  %v2332 = vrot.slane %v2331, 4
  %vm2333 = vcmp.lt.s32.totalorder %v2331, %v2332
  %v2334 = vsel %vm2333, %v2331, %v2332
  %v2335 = vrot.slane %v2334, 2
  %vm2336 = vcmp.lt.s32.totalorder %v2334, %v2335
  %v2337 = vsel %vm2336, %v2334, %v2335
  %v2338 = vrot.slane %v2337, 1
  %vm2339 = vcmp.lt.s32.totalorder %v2337, %v2338
  %v2340 = vsel %vm2339, %v2337, %v2338
  %v2341 = vshll.u32 %v2340, 16
  %v2342 = vor.u32 %v2320, %v2341
  %v2343 = vadd.f32 %v2127, %v70
  %v2344 = vsel %vm88, %v2343, -inf
  %v2345 = vrot.slane %v2344, 4
  %v2346 = vmax.f32 %v2344, %v2345
  %v2347 = vrot.slane %v2346, 2
  %v2348 = vmax.f32 %v2346, %v2347
  %v2349 = vrot.slane %v2348, 1
  %v2350 = vmax.f32 %v2348, %v2349
  %vm2351 = vcmp.ge.f32.partialorder %v2343, %v2350
  %v2352 = vsel %vm2351, %v83, 8
  %v2353 = vsel %vm88, %v2352, 2147483647
  %v2354 = vrot.slane %v2353, 4
  %vm2355 = vcmp.lt.s32.totalorder %v2353, %v2354
  %v2356 = vsel %vm2355, %v2353, %v2354
  %v2357 = vrot.slane %v2356, 2
  %vm2358 = vcmp.lt.s32.totalorder %v2356, %v2357
  %v2359 = vsel %vm2358, %v2356, %v2357
  %v2360 = vrot.slane %v2359, 1
  %vm2361 = vcmp.lt.s32.totalorder %v2359, %v2360
  %v2362 = vsel %vm2361, %v2359, %v2360
  %v2363 = vshll.u32 %v2362, 20
  %v2364 = vor.u32 %v2342, %v2363
  %v2365 = vadd.f32 %v2127, %v75
  %v2366 = vsel %vm88, %v2365, -inf
  %v2367 = vrot.slane %v2366, 4
  %v2368 = vmax.f32 %v2366, %v2367
  %v2369 = vrot.slane %v2368, 2
  %v2370 = vmax.f32 %v2368, %v2369
  %v2371 = vrot.slane %v2370, 1
  %v2372 = vmax.f32 %v2370, %v2371
  %vm2373 = vcmp.ge.f32.partialorder %v2365, %v2372
  %v2374 = vsel %vm2373, %v83, 8
  %v2375 = vsel %vm88, %v2374, 2147483647
  %v2376 = vrot.slane %v2375, 4
  %vm2377 = vcmp.lt.s32.totalorder %v2375, %v2376
  %v2378 = vsel %vm2377, %v2375, %v2376
  %v2379 = vrot.slane %v2378, 2
  %vm2380 = vcmp.lt.s32.totalorder %v2378, %v2379
  %v2381 = vsel %vm2380, %v2378, %v2379
  %v2382 = vrot.slane %v2381, 1
  %vm2383 = vcmp.lt.s32.totalorder %v2381, %v2382
  %v2384 = vsel %vm2383, %v2381, %v2382
  %v2385 = vshll.u32 %v2384, 24
  %v2386 = vor.u32 %v2364, %v2385
  %v2387 = vadd.f32 %v2127, %v80
  %v2388 = vsel %vm88, %v2387, -inf
  %v2389 = vrot.slane %v2388, 4
  %v2390 = vmax.f32 %v2388, %v2389
  %v2391 = vrot.slane %v2390, 2
  %v2392 = vmax.f32 %v2390, %v2391
  %v2393 = vrot.slane %v2392, 1
  %v2394 = vmax.f32 %v2392, %v2393
  %vm2395 = vcmp.ge.f32.partialorder %v2387, %v2394
  %v2396 = vsel %vm2395, %v83, 8
  %v2397 = vsel %vm88, %v2396, 2147483647
  %v2398 = vrot.slane %v2397, 4
  %vm2399 = vcmp.lt.s32.totalorder %v2397, %v2398
  %v2400 = vsel %vm2399, %v2397, %v2398
  %v2401 = vrot.slane %v2400, 2
  %vm2402 = vcmp.lt.s32.totalorder %v2400, %v2401
  %v2403 = vsel %vm2402, %v2400, %v2401
  %v2404 = vrot.slane %v2403, 1
  %vm2405 = vcmp.lt.s32.totalorder %v2403, %v2404
  %v2406 = vsel %vm2405, %v2403, %v2404
  %v2407 = vshll.u32 %v2406, 28
  %v2408 = vor.u32 %v2386, %v2407
  %v2409 = vsel %vm371, %v2242, %v2262
  %v2410 = vsel %vm373, %v2409, %v2284
  %v2411 = vsel %vm375, %v2410, %v2306
  %v2412 = vsel %vm377, %v2411, %v2328
  %v2413 = vsel %vm379, %v2412, %v2350
  %v2414 = vsel %vm381, %v2413, %v2372
  %v2415 = vsel %vm383, %v2414, %v2394
  %v2416 = vadd.f32 %v2415, %v2157
  %v2417 = vsel %vm2202, %v2416, %v2127
  %2418 = vst.msk [vmem:[%s9 + $0x7] sm:$0x1] %vm387, %v2408
  %vm2419 = vcmp.eq.s32.totalorder %v96, 8
  %v2420 = vsel %vm2419, 1, 0
  %v2421 = vcvt.s32.f32 %v2420
  %v2422 = vmul.f32 %v2165, %v2421
  %v2423 = vadd.f32 %v2133, %v2422
  %vm2424 = vcmp.eq.s32.totalorder %v96, 0
  %v2425 = vsel %vm2424, 1, 0
  %vm2426 = vcmp.eq.s32.totalorder %v2425, 1
  %v2427 = vsel %vm2426, %v86, %v2423
  %v2428 = vmul.f32 %v80, %v2427
  %v2429 = vsel %vm88, %v2428, 0.0
  %v2430 = vrot.slane %v2429, 4
  %v2431 = vadd.f32 %v2429, %v2430
  %v2432 = vrot.slane %v2431, 2
  %v2433 = vadd.f32 %v2431, %v2432
  %v2434 = vrot.slane %v2433, 1
  %v2435 = vadd.f32 %v2433, %v2434
  %v2436 = vadd.f32 %v2234, %v2435
  %v2437 = vadd.f32 %v2203, %v80
  %v2438 = vsel %vm88, %v2437, -inf
  %v2439 = vrot.slane %v2438, 4
  %v2440 = vmax.f32 %v2438, %v2439
  %v2441 = vrot.slane %v2440, 2
  %v2442 = vmax.f32 %v2440, %v2441
  %v2443 = vrot.slane %v2442, 1
  %v2444 = vmax.f32 %v2442, %v2443
  %v2445 = vsub.f32 %v2437, %v2444
  %v2446 = vmul.f32 %v2445, 1.442695
  %v2447 = vpow.pop %v2446
  %v2448 = vsel %vm88, %v2447, 0.0
  %v2449 = vrot.slane %v2448, 4
  %v2450 = vadd.f32 %v2448, %v2449
  %v2451 = vrot.slane %v2450, 2
  %v2452 = vadd.f32 %v2450, %v2451
  %v2453 = vrot.slane %v2452, 1
  %v2454 = vadd.f32 %v2452, %v2453
  %v2455 = vlog2.pop %v2454
  %v2456 = vmul.f32 %v2455, 0.6931472
  %v2457 = vadd.f32 %v2444, %v2456
  %v2459 = vrot.slane %v2436, 7
  %v2461 = vsel %vm371, %v2457, %v2459
  %vm2462 = vcmask 9216
  %2463 = vst.msk [vmem:[%s7] sm:$0x3] %vm2462, %v2461
  %v2464 = vadd.f32 %v2417, %v80
  %2465 = vst.msk [vmem:[%s8] sm:$0xff] %vm88, %v2464
  // Predicated region
  $region30: #{bert_crf_forward.1} parent=0 // pred_check
    _
  $region31: #{bert_crf_forward.1} parent=0 // pred_check_branch
    %2467 = sbr.rel (0) target = $region33
  $region32: #{bert_crf_forward.1} parent=0 // pred_region
    _
  $region33: #{bert_crf_forward.1} parent=0 // pred_fallthru
    _
  // Predicated region
  $region34: #{bert_crf_forward.1} parent=0 // pred_check
    _
  $region35: #{bert_crf_forward.1} parent=0 // pred_check_branch
    %2469 = sbr.rel (0) target = $region37
  $region36: #{bert_crf_forward.1} parent=0 // pred_region
    _
  $region37: #{bert_crf_forward.1} parent=0 // pred_fallthru
    _
  // Predicated region
  $region38: #{bert_crf_forward.1} parent=0 // pred_check
    _
  $region39: #{bert_crf_forward.1} parent=0 // pred_check_branch
    %2471 = sbr.rel (0) target = $region41
  $region40: #{bert_crf_forward.1} parent=0 // pred_region
    _
  $region41: #{bert_crf_forward.1} parent=0 // pred_fallthru
    _
  // Predicated region
  $region42: #{bert_crf_forward.1} parent=0 // pred_check
    _
  $region43: #{bert_crf_forward.1} parent=0 // pred_check_branch
    %2473 = sbr.rel (0) target = $region45
  $region44: #{bert_crf_forward.1} parent=0 // pred_region
    _
  $region45: #{bert_crf_forward.1} parent=0 // pred_fallthru
    _
  // Predicated region
  $region46: #{bert_crf_forward.1} parent=0 // pred_check
    _
  $region47: #{bert_crf_forward.1} parent=0 // pred_check_branch
    %2475 = sbr.rel (0) target = $region49
  $region48: #{bert_crf_forward.1} parent=0 // pred_region
    _
  $region49: #{bert_crf_forward.1} parent=0 // pred_fallthru
    _
  // Predicated region
  $region50: #{bert_crf_forward.1} parent=0 // pred_check
    _
  $region51: #{bert_crf_forward.1} parent=0 // pred_check_branch
    %2477 = sbr.rel (0) target = $region53
  $region52: #{bert_crf_forward.1} parent=0 // pred_region
    _
  $region53: #{bert_crf_forward.1} parent=0 // pred_fallthru
    _

</llo_original>
